<compile_context>
chip_gen: v6e
topology: v6e:2x2x1
jax: 0.10.0
libtpu: 0.0.40
codegen_flags: <defaults>
</compile_context>

<pallas_src>
import functools

import jax
import jax.numpy as jnp
from jax import lax
from jax.experimental import pallas as pl
from jax.experimental.pallas import tpu as pltpu

NEG_SLOPE = 0.01  # PyTorch nn.LeakyReLU default negative_slope


def _leaky_relu(x):
    # max(x, 0.01*x) == LeakyReLU(x) for slope < 1 (2 VALU ops, no select).
    return jnp.maximum(x, NEG_SLOPE * x)


def attacker_mlp_kernel(x_ref,
                        w1_ref, b1_ref,
                        w2_ref, b2_ref,
                        w3_ref, b3_ref,
                        w4_ref, b4_ref,
                        o_ref):
    """Fused 4-layer MLP forward for one batch tile (transposed orientation).

    x_ref : (tile, D)   bf16  input tile (batch-major as stored in HBM)
    w1-w3 : (out, in)   bf16  PyTorch-native weight layout
    b1-b3 : (out, 1)    f32   bias columns
    w4    : (128, 1)    f32   final-layer weight as a column
    b4    : (1, 1)      f32
    o_ref : (1, tile)   f32   lane-dense sigmoid output
    """
    # Layer 1: contract the trailing D axis of both operands -> (512, tile).
    # (Equivalent to w1 @ x_tile.T; the tiny tile reorientation is in-kernel.)
    h = lax.dot_general(w1_ref[...], x_ref[...], (((1,), (1,)), ((), ())),
                        preferred_element_type=jnp.float32)
    h = _leaky_relu(h + b1_ref[...])
    # TODO(synk): nn.Dropout(0.4) — identity in eval mode; training-mode RNG mask not implemented.

    # Layer 2: (256, 512) @ (512, tile) -> (256, tile), bf16 in / f32 accumulate.
    h = jnp.dot(w2_ref[...], h.astype(jnp.bfloat16),
                preferred_element_type=jnp.float32)
    h = _leaky_relu(h + b2_ref[...])
    # TODO(synk): nn.Dropout(0.3) — identity in eval mode.

    # Layer 3: (128, 256) @ (256, tile) -> (128, tile).
    h = jnp.dot(w3_ref[...], h.astype(jnp.bfloat16),
                preferred_element_type=jnp.float32)
    h = _leaky_relu(h + b3_ref[...])

    # Layer 4 (128 -> 1): VPU broadcast-multiply with the (128, 1) weight column +
    # sublane reduction; result is directly lane-dense (1, tile).
    logit = jnp.sum(h * w4_ref[...], axis=0, keepdims=True) + b4_ref[...]

    # Sigmoid epilogue on a tiny (1, tile) slab — exact reciprocal is free here.
    o_ref[...] = (1.0 / (1.0 + jnp.exp(-logit))).astype(o_ref.dtype)


@functools.partial(jax.jit, static_argnames=("batch_tile",))
def attacker_model_forward(x, params, *, batch_tile=1024):
    """Runs the fused AttackerModel forward pass via a single pallas_call.

    x:      (B, input_dim) float32
    params: dict with wN in PyTorch (out, in) layout and bN as (out, 1)
    returns (B, 1) float32 sigmoid probabilities.
    """
    B, D = x.shape
    assert batch_tile % 256 == 0, "batch_tile must be a multiple of 256"

    # Effective tile: as large as requested, but keep >= 2 grid steps when the batch
    # is big enough (so the "parallel" axis can shard across v7x's 2 TensorCores),
    # and never below 256 lanes.
    half = -(-B // 2)                 # ceil(B / 2)
    half = -(-half // 256) * 256      # round up to a multiple of 256
    eff_tile = max(256, min(batch_tile, half))

    n_tiles = pl.cdiv(B, eff_tile)
    b_pad = n_tiles * eff_tile

    # bf16 matmul inputs (halves x DMA bytes); padding instead of divisibility assert.
    x_p = jnp.pad(x.astype(jnp.bfloat16), ((0, b_pad - B), (0, 0)))

    w1 = params["w1"].astype(jnp.bfloat16)
    w2 = params["w2"].astype(jnp.bfloat16)
    w3 = params["w3"].astype(jnp.bfloat16)
    w4 = params["w4"].T.astype(jnp.float32)          # (1,128) -> (128,1) column
    b1 = params["b1"].astype(jnp.float32)
    b2 = params["b2"].astype(jnp.float32)
    b3 = params["b3"].astype(jnp.float32)
    b4 = params["b4"].reshape(1, 1).astype(jnp.float32)

    def const2d(arr):  # weight/bias resident across the whole grid
        return pl.BlockSpec(arr.shape, lambda i: (0, 0))

    out = pl.pallas_call(
        attacker_mlp_kernel,
        out_shape=jax.ShapeDtypeStruct((1, b_pad), jnp.float32),
        grid_spec=pltpu.PrefetchScalarGridSpec(
            num_scalar_prefetch=0,
            grid=(n_tiles,),
            in_specs=[
                pl.BlockSpec((eff_tile, D), lambda i: (i, 0)),  # x tile (no wrapper transpose)
                const2d(w1), const2d(b1),
                const2d(w2), const2d(b2),
                const2d(w3), const2d(b3),
                const2d(w4), const2d(b4),
            ],
            out_specs=pl.BlockSpec((1, eff_tile), lambda i: (0, i)),  # lane-dense output
        ),
        compiler_params=pltpu.CompilerParams(
            dimension_semantics=("parallel",)),
    )(x_p, w1, b1, w2, b2, w3, b3, w4, b4)

    # (1, B_pad) -> (B, 1): pure layout plumbing in the wrapper.
    return out.reshape(b_pad, 1)[:B]


def init_params(key, input_dim):
    """Deterministic synthetic parameters in PyTorch-native Linear layout."""
    dims = [(input_dim, 512), (512, 256), (256, 128), (128, 1)]
    params = {}
    for idx, (din, dout) in enumerate(dims, start=1):
        key, kw, kb = jax.random.split(key, 3)
        bound = 1.0 / jnp.sqrt(din)  # mimic PyTorch default U(-1/sqrt(in), 1/sqrt(in))
        params[f"w{idx}"] = jax.random.uniform(
            kw, (dout, din), jnp.float32, minval=-bound, maxval=bound)   # (out, in)
        params[f"b{idx}"] = jax.random.uniform(
            kb, (dout, 1), jnp.float32, minval=-bound, maxval=bound)     # (out, 1)
    return params


def reference_forward(x, params):
    """Plain-JAX f32 reference (natural x @ W.T + b orientation)."""
    h = x @ params["w1"].T + params["b1"].T
    h = jnp.where(h > 0, h, NEG_SLOPE * h)
    h = h @ params["w2"].T + params["b2"].T
    h = jnp.where(h > 0, h, NEG_SLOPE * h)
    h = h @ params["w3"].T + params["b3"].T
    h = jnp.where(h > 0, h, NEG_SLOPE * h)
    logit = h @ params["w4"].T + params["b4"].T
    return jax.nn.sigmoid(logit)


if __name__ == "__main__":
    key = jax.random.PRNGKey(0)
    k_param, k_x = jax.random.split(key)

    # For the CIFAR-10 attack data, input_dim = X_train.shape[1]
    # (shadow-model posterior vector, 10 classes).
    input_dim = 10
    batch = 300  # deliberately NOT a multiple of the tile -> exercises the padding path

    params = init_params(k_param, input_dim)
    x = jax.random.uniform(k_x, (batch, input_dim), jnp.float32)

    out = attacker_model_forward(x, params)
    out = jax.block_until_ready(out)

    ref = reference_forward(x, params)
    assert out.shape == (batch, 1)
    # Tolerance accounts for bf16 matmul inputs (f32 accumulation) in the kernel
    # vs the all-f32 reference; errors on the sigmoid outputs are a few 1e-3.
    assert jnp.allclose(out, ref, atol=1e-2, rtol=1e-2), "mismatch vs reference"

    print("KERNEL_OK")
</pallas_src>

<mosaic_0001>
module attributes {stable_mosaic.version = 11 : i64} {
  func.func @attacker_mlp_kernel(%arg0: i32, %arg1: memref<256x10xbf16, #tpu.memory_space<vmem>>, %arg2: memref<512x10xbf16, #tpu.memory_space<vmem>>, %arg3: memref<512x1xf32, #tpu.memory_space<vmem>>, %arg4: memref<256x512xbf16, #tpu.memory_space<vmem>>, %arg5: memref<256x1xf32, #tpu.memory_space<vmem>>, %arg6: memref<128x256xbf16, #tpu.memory_space<vmem>>, %arg7: memref<128x1xf32, #tpu.memory_space<vmem>>, %arg8: memref<128x1xf32, #tpu.memory_space<vmem>>, %arg9: memref<1x1xf32, #tpu.memory_space<vmem>>, %arg10: memref<1x256xf32, #tpu.memory_space<vmem>>) attributes {dimension_semantics = [#tpu.dimension_semantics<parallel>], iteration_bounds = array<i64: 2>, scalar_prefetch = 0 : i64, scratch_operands = 0 : i64, tpu.core_type = #tpu.core_type<tc>, window_params = [{transform_indices = @transform_0, window_bounds = array<i64: 256, 10>}, {pipeline_mode = #tpu.pipeline_mode<synchronous>, transform_indices = @transform_1, window_bounds = array<i64: 512, 10>}, {pipeline_mode = #tpu.pipeline_mode<synchronous>, transform_indices = @transform_2, window_bounds = array<i64: 512, 1>}, {pipeline_mode = #tpu.pipeline_mode<synchronous>, transform_indices = @transform_3, window_bounds = array<i64: 256, 512>}, {pipeline_mode = #tpu.pipeline_mode<synchronous>, transform_indices = @transform_4, window_bounds = array<i64: 256, 1>}, {pipeline_mode = #tpu.pipeline_mode<synchronous>, transform_indices = @transform_5, window_bounds = array<i64: 128, 256>}, {pipeline_mode = #tpu.pipeline_mode<synchronous>, transform_indices = @transform_6, window_bounds = array<i64: 128, 1>}, {pipeline_mode = #tpu.pipeline_mode<synchronous>, transform_indices = @transform_7, window_bounds = array<i64: 128, 1>}, {pipeline_mode = #tpu.pipeline_mode<synchronous>, transform_indices = @transform_8, window_bounds = array<i64: 1, 1>}, {transform_indices = @transform_9, window_bounds = array<i64: 1, 256>}]} {
    %c0 = arith.constant 0 : index
    %c0_0 = arith.constant 0 : index
    %0 = vector.load %arg2[%c0, %c0_0] : memref<512x10xbf16, #tpu.memory_space<vmem>>, vector<512x10xbf16>
    %c0_1 = arith.constant 0 : index
    %c0_2 = arith.constant 0 : index
    %1 = vector.load %arg1[%c0_1, %c0_2] : memref<256x10xbf16, #tpu.memory_space<vmem>>, vector<256x10xbf16>
    %cst = arith.constant dense<0.000000e+00> : vector<512x256xf32>
    %2 = tpu.matmul %0, %1, %cst {dimension_numbers = #tpu.dot_dimension_numbers<[1], [1], [0], [0], [0, 0, 1, 0], [], []>} : vector<512x10xbf16>, vector<256x10xbf16>, vector<512x256xf32> -> vector<512x256xf32>
    %c0_3 = arith.constant 0 : index
    %c0_4 = arith.constant 0 : index
    %3 = vector.load %arg3[%c0_3, %c0_4] : memref<512x1xf32, #tpu.memory_space<vmem>>, vector<512x1xf32>
    %4 = vector.broadcast %3 : vector<512x1xf32> to vector<512x256xf32>
    %5 = arith.addf %2, %4 : vector<512x256xf32>
    %cst_5 = arith.constant 0.00999999977 : f32
    %6 = vector.broadcast %cst_5 : f32 to vector<512x256xf32>
    %7 = arith.mulf %6, %5 : vector<512x256xf32>
    %8 = arith.maximumf %5, %7 : vector<512x256xf32>
    %c0_6 = arith.constant 0 : index
    %c0_7 = arith.constant 0 : index
    %9 = vector.load %arg4[%c0_6, %c0_7] : memref<256x512xbf16, #tpu.memory_space<vmem>>, vector<256x512xbf16>
    %10 = arith.truncf %8 : vector<512x256xf32> to vector<512x256xbf16>
    %cst_8 = arith.constant dense<0.000000e+00> : vector<256x256xf32>
    %11 = tpu.matmul %9, %10, %cst_8 {dimension_numbers = #tpu.dot_dimension_numbers<[1], [0], [0], [1], [0, 0, 1, 1], [], []>} : vector<256x512xbf16>, vector<512x256xbf16>, vector<256x256xf32> -> vector<256x256xf32>
    %c0_9 = arith.constant 0 : index
    %c0_10 = arith.constant 0 : index
    %12 = vector.load %arg5[%c0_9, %c0_10] : memref<256x1xf32, #tpu.memory_space<vmem>>, vector<256x1xf32>
    %13 = vector.broadcast %12 : vector<256x1xf32> to vector<256x256xf32>
    %14 = arith.addf %11, %13 : vector<256x256xf32>
    %cst_11 = arith.constant 0.00999999977 : f32
    %15 = vector.broadcast %cst_11 : f32 to vector<256x256xf32>
    %16 = arith.mulf %15, %14 : vector<256x256xf32>
    %17 = arith.maximumf %14, %16 : vector<256x256xf32>
    %c0_12 = arith.constant 0 : index
    %c0_13 = arith.constant 0 : index
    %18 = vector.load %arg6[%c0_12, %c0_13] : memref<128x256xbf16, #tpu.memory_space<vmem>>, vector<128x256xbf16>
    %19 = arith.truncf %17 : vector<256x256xf32> to vector<256x256xbf16>
    %cst_14 = arith.constant dense<0.000000e+00> : vector<128x256xf32>
    %20 = tpu.matmul %18, %19, %cst_14 {dimension_numbers = #tpu.dot_dimension_numbers<[1], [0], [0], [1], [0, 0, 1, 1], [], []>} : vector<128x256xbf16>, vector<256x256xbf16>, vector<128x256xf32> -> vector<128x256xf32>
    %c0_15 = arith.constant 0 : index
    %c0_16 = arith.constant 0 : index
    %21 = vector.load %arg7[%c0_15, %c0_16] : memref<128x1xf32, #tpu.memory_space<vmem>>, vector<128x1xf32>
    %22 = vector.broadcast %21 : vector<128x1xf32> to vector<128x256xf32>
    %23 = arith.addf %20, %22 : vector<128x256xf32>
    %cst_17 = arith.constant 0.00999999977 : f32
    %24 = vector.broadcast %cst_17 : f32 to vector<128x256xf32>
    %25 = arith.mulf %24, %23 : vector<128x256xf32>
    %26 = arith.maximumf %23, %25 : vector<128x256xf32>
    %c0_18 = arith.constant 0 : index
    %c0_19 = arith.constant 0 : index
    %27 = vector.load %arg8[%c0_18, %c0_19] : memref<128x1xf32, #tpu.memory_space<vmem>>, vector<128x1xf32>
    %28 = vector.broadcast %27 : vector<128x1xf32> to vector<128x256xf32>
    %29 = arith.mulf %26, %28 : vector<128x256xf32>
    %cst_20 = arith.constant dense<0.000000e+00> : vector<256xf32>
    %30 = vector.multi_reduction <add>, %29, %cst_20 [0] : vector<128x256xf32> to vector<256xf32>
    %31 = vector.shape_cast %30 : vector<256xf32> to vector<1x256xf32>
    %c0_21 = arith.constant 0 : index
    %c0_22 = arith.constant 0 : index
    %32 = vector.load %arg9[%c0_21, %c0_22] : memref<1x1xf32, #tpu.memory_space<vmem>>, vector<1x1xf32>
    %33 = vector.broadcast %32 : vector<1x1xf32> to vector<1x256xf32>
    %34 = arith.addf %31, %33 : vector<1x256xf32>
    %cst_23 = arith.constant 0.000000e+00 : f32
    %35 = vector.broadcast %cst_23 : f32 to vector<1x256xf32>
    %36 = arith.subf %35, %34 : vector<1x256xf32>
    %37 = math.exp %36 : vector<1x256xf32>
    %cst_24 = arith.constant 1.000000e+00 : f32
    %38 = vector.broadcast %cst_24 : f32 to vector<1x256xf32>
    %39 = arith.addf %38, %37 : vector<1x256xf32>
    %cst_25 = arith.constant 1.000000e+00 : f32
    %40 = vector.broadcast %cst_25 : f32 to vector<1x256xf32>
    %41 = arith.divf %40, %39 : vector<1x256xf32>
    %c0_26 = arith.constant 0 : index
    %c0_27 = arith.constant 0 : index
    %42 = vector.load %arg10[%c0_26, %c0_27] : memref<1x256xf32, #tpu.memory_space<vmem>>, vector<1x256xf32>
    tpu.vector_store %arg10[%c0_26, %c0_27], %41 {strides = array<i32>} : memref<1x256xf32, #tpu.memory_space<vmem>>, vector<1x256xf32>,
    return
  }
  func.func @transform_0(%arg0: i32) -> (i32, i32) {
    %c0_i32 = arith.constant 0 : i32
    %c0_i32_0 = arith.constant 0 : i32
    return %arg0, %c0_i32 : i32, i32
  }
  func.func @transform_1(%arg0: i32) -> (i32, i32) {
    %c0_i32 = arith.constant 0 : i32
    %c0_i32_0 = arith.constant 0 : i32
    %c0_i32_1 = arith.constant 0 : i32
    return %c0_i32, %c0_i32_0 : i32, i32
  }
  func.func @transform_2(%arg0: i32) -> (i32, i32) {
    %c0_i32 = arith.constant 0 : i32
    %c0_i32_0 = arith.constant 0 : i32
    %c0_i32_1 = arith.constant 0 : i32
    return %c0_i32, %c0_i32_0 : i32, i32
  }
  func.func @transform_3(%arg0: i32) -> (i32, i32) {
    %c0_i32 = arith.constant 0 : i32
    %c0_i32_0 = arith.constant 0 : i32
    %c0_i32_1 = arith.constant 0 : i32
    return %c0_i32, %c0_i32_0 : i32, i32
  }
  func.func @transform_4(%arg0: i32) -> (i32, i32) {
    %c0_i32 = arith.constant 0 : i32
    %c0_i32_0 = arith.constant 0 : i32
    %c0_i32_1 = arith.constant 0 : i32
    return %c0_i32, %c0_i32_0 : i32, i32
  }
  func.func @transform_5(%arg0: i32) -> (i32, i32) {
    %c0_i32 = arith.constant 0 : i32
    %c0_i32_0 = arith.constant 0 : i32
    %c0_i32_1 = arith.constant 0 : i32
    return %c0_i32, %c0_i32_0 : i32, i32
  }
  func.func @transform_6(%arg0: i32) -> (i32, i32) {
    %c0_i32 = arith.constant 0 : i32
    %c0_i32_0 = arith.constant 0 : i32
    %c0_i32_1 = arith.constant 0 : i32
    return %c0_i32, %c0_i32_0 : i32, i32
  }
  func.func @transform_7(%arg0: i32) -> (i32, i32) {
    %c0_i32 = arith.constant 0 : i32
    %c0_i32_0 = arith.constant 0 : i32
    %c0_i32_1 = arith.constant 0 : i32
    return %c0_i32, %c0_i32_0 : i32, i32
  }
  func.func @transform_8(%arg0: i32) -> (i32, i32) {
    %c0_i32 = arith.constant 0 : i32
    %c0_i32_0 = arith.constant 0 : i32
    %c0_i32_1 = arith.constant 0 : i32
    return %c0_i32, %c0_i32_0 : i32, i32
  }
  func.func @transform_9(%arg0: i32) -> (i32, i32) {
    %c0_i32 = arith.constant 0 : i32
    %c0_i32_0 = arith.constant 0 : i32
    return %c0_i32, %arg0 : i32, i32
  }
}

</mosaic_0001>

<llo_original>
// kernel: attacker_model_forward.1
$region0: #{attacker_model_forward.1}
  #allocation0 [shape = 'u32[]', space=smem, size = 0x4, offset = 0x4, fixed_abs, tag = 'smem constant byte address 0x4 - core index']
  #allocation1 [shape = 'u32[144,128]{1,0:T(1,128)}', space=vmem, size = 0x12000, scoped, tag = 'internal scratch']
  #allocation2 [shape = 'f32[1,1]{1,0:T(1,128)S(1)}', space=vmem, size = 0x200, scoped, tag = 'scoped memory for attacker_model_forward.1']
  %s0 = inlined_call_operand.vmem [shape: bf16[512,10], index: 0, kind: input, shape index: {}]
  %s1 = inlined_call_operand.vmem [shape: bf16[512,10], index: 1, kind: input, shape index: {}]
  %s2 = inlined_call_operand.vmem [shape: f32[512,1], index: 2, kind: input, shape index: {}]
  %s3 = inlined_call_operand.vmem [shape: bf16[256,512], index: 3, kind: input, shape index: {}]
  %s4 = inlined_call_operand.vmem [shape: f32[256,1], index: 4, kind: input, shape index: {}]
  %s5 = inlined_call_operand.vmem [shape: bf16[128,256], index: 5, kind: input, shape index: {}]
  %s6 = inlined_call_operand.vmem [shape: f32[128,1], index: 6, kind: input, shape index: {}]
  %s7 = inlined_call_operand.vmem [shape: f32[128,1], index: 7, kind: input, shape index: {}]
  %s8 = inlined_call_operand.<no memory space> [shape: f32[1,1], index: 8, kind: input, shape index: {}]
  %s9 = inlined_call_operand.vmem [shape: f32[1,512], index: 9, kind: output, shape index: {}]
  %s10 = sld [smem:[#allocation0]]
  $region69: #{attacker_model_forward.1} parent=0
    _
  %s12 = ssub.s32 1, %s10
  %s13 = scalar_select 0, %s12, %s10
  %v14 = vstv %s8
  %15 = vst [vmem:[#allocation2] sm:$0x1] %v14
  loop: start=0, step=1, limit=4
  $region2: #{attacker_model_forward.1} parent=0 // loop_pre_header
    _
  $region3: #{attacker_model_forward.1} parent=0 // loop_header
    %s17 = sphi 0, %s21
    %p18 = scmp.ge.s32.totalorder %s17, 4
    %s27 = sphi 0, %s29
    %s30 = sphi 0, %s27
    %s31 = sphi 0, %s30
    %s47 = sphi 0, %s31
    %s51 = sphi 0, %s51
    %s53 = sphi 0, %s51
    %s54 = sphi 0, %s53
    %s68 = sphi 0, %s54
    %s72 = sphi 0, %s72
    %s74 = sphi 0, %s72
    %s75 = sphi 0, %s74
    %s89 = sphi 0, %s75
    %s93 = sphi 0, %s93
    %s95 = sphi 0, %s93
    %s96 = sphi 0, %s95
    %s110 = sphi 0, %s96
    %s114 = sphi 0, %s114
    %s116 = sphi 0, %s114
    %s117 = sphi 0, %s116
    %s131 = sphi 0, %s117
    %s135 = sphi 0, %s135
    %s137 = sphi 0, %s135
    %s138 = sphi 0, %s137
    %s152 = sphi 0, %s138
    %s156 = sphi 0, %s156
    %s158 = sphi 0, %s156
    %s159 = sphi 0, %s158
    %s173 = sphi 0, %s159
    %s177 = sphi 0, %s177
    %s179 = sphi 0, %s177
    %s180 = sphi 0, %s179
    %s194 = sphi 0, %s180
    %s198 = sphi 0, %s198
    %s200 = sphi 0, %s198
    %s201 = sphi 0, %s200
    %s215 = sphi 0, %s201
    %s221 = sphi 0, %s223
    %s224 = sphi 0, %s221
    %s225 = sphi 0, %s224
    %s241 = sphi 0, %s225
  $region4: #{attacker_model_forward.1} parent=0 // loop_header_branch
    %20 = sbr.rel (%p18) target = $region8
  $region5: #{attacker_model_forward.1} parent=0 // loop_body
    %s22 = ssub.s32 %s17, 1
    %s23 = ssub.s32 %s17, 2
    %s24 = sadd.s32 %s17, 1
    %s25 = ssub.s32 %s17, %s24
    %p26 = scmp.eq.s32.totalorder %s25, 0
    %s28 = sadd.s32 %s27, 1
    %s29 = scalar_select %p26, %s27, %s28
    %p32 = pneg %p26
    %p33 = scmp.eq.s32.totalorder %s17, 1
    %p34 = por %p32, %p33
    %p35 = scmp.ne.s32.totalorder %s27, %s30
    %p36 = scmp.eq.s32.totalorder %s17, 0
    %p37 = por %p35, %p36
    %p38 = scmp.ne.s32.totalorder %s27, %s30
    %p39 = scmp.eq.s32.totalorder %s22, 1
    %p40 = por %p38, %p39
    %p41 = scmp.ne.s32.totalorder %s30, %s31
    %p42 = scmp.eq.s32.totalorder %s22, 0
    %p43 = por %p41, %p42
    %p44 = scmp.ne.s32.totalorder %s30, %s31
    %p45 = scmp.eq.s32.totalorder %s23, 1
    %p46 = por %p44, %p45
    %p48 = scmp.ne.s32.totalorder %s31, %s47
    %p49 = scmp.eq.s32.totalorder %s23, 0
    %p50 = por %p48, %p49
    %s52 = sadd.s32 %s51, 1
    %p55 = scmp.eq.s32.totalorder %s17, 1
    %p56 = scmp.ne.s32.totalorder %s51, %s53
    %p57 = scmp.eq.s32.totalorder %s17, 0
    %p58 = por %p56, %p57
    %p59 = scmp.ne.s32.totalorder %s51, %s53
    %p60 = scmp.eq.s32.totalorder %s22, 1
    %p61 = por %p59, %p60
    %p62 = scmp.ne.s32.totalorder %s53, %s54
    %p63 = scmp.eq.s32.totalorder %s22, 0
    %p64 = por %p62, %p63
    %p65 = scmp.ne.s32.totalorder %s53, %s54
    %p66 = scmp.eq.s32.totalorder %s23, 1
    %p67 = por %p65, %p66
    %p69 = scmp.ne.s32.totalorder %s54, %s68
    %p70 = scmp.eq.s32.totalorder %s23, 0
    %p71 = por %p69, %p70
    %s73 = sadd.s32 %s72, 1
    %p76 = scmp.eq.s32.totalorder %s17, 1
    %p77 = scmp.ne.s32.totalorder %s72, %s74
    %p78 = scmp.eq.s32.totalorder %s17, 0
    %p79 = por %p77, %p78
    %p80 = scmp.ne.s32.totalorder %s72, %s74
    %p81 = scmp.eq.s32.totalorder %s22, 1
    %p82 = por %p80, %p81
    %p83 = scmp.ne.s32.totalorder %s74, %s75
    %p84 = scmp.eq.s32.totalorder %s22, 0
    %p85 = por %p83, %p84
    %p86 = scmp.ne.s32.totalorder %s74, %s75
    %p87 = scmp.eq.s32.totalorder %s23, 1
    %p88 = por %p86, %p87
    %p90 = scmp.ne.s32.totalorder %s75, %s89
    %p91 = scmp.eq.s32.totalorder %s23, 0
    %p92 = por %p90, %p91
    %s94 = sadd.s32 %s93, 1
    %p97 = scmp.eq.s32.totalorder %s17, 1
    %p98 = scmp.ne.s32.totalorder %s93, %s95
    %p99 = scmp.eq.s32.totalorder %s17, 0
    %p100 = por %p98, %p99
    %p101 = scmp.ne.s32.totalorder %s93, %s95
    %p102 = scmp.eq.s32.totalorder %s22, 1
    %p103 = por %p101, %p102
    %p104 = scmp.ne.s32.totalorder %s95, %s96
    %p105 = scmp.eq.s32.totalorder %s22, 0
    %p106 = por %p104, %p105
    %p107 = scmp.ne.s32.totalorder %s95, %s96
    %p108 = scmp.eq.s32.totalorder %s23, 1
    %p109 = por %p107, %p108
    %p111 = scmp.ne.s32.totalorder %s96, %s110
    %p112 = scmp.eq.s32.totalorder %s23, 0
    %p113 = por %p111, %p112
    %s115 = sadd.s32 %s114, 1
    %p118 = scmp.eq.s32.totalorder %s17, 1
    %p119 = scmp.ne.s32.totalorder %s114, %s116
    %p120 = scmp.eq.s32.totalorder %s17, 0
    %p121 = por %p119, %p120
    %p122 = scmp.ne.s32.totalorder %s114, %s116
    %p123 = scmp.eq.s32.totalorder %s22, 1
    %p124 = por %p122, %p123
    %p125 = scmp.ne.s32.totalorder %s116, %s117
    %p126 = scmp.eq.s32.totalorder %s22, 0
    %p127 = por %p125, %p126
    %p128 = scmp.ne.s32.totalorder %s116, %s117
    %p129 = scmp.eq.s32.totalorder %s23, 1
    %p130 = por %p128, %p129
    %p132 = scmp.ne.s32.totalorder %s117, %s131
    %p133 = scmp.eq.s32.totalorder %s23, 0
    %p134 = por %p132, %p133
    %s136 = sadd.s32 %s135, 1
    %p139 = scmp.eq.s32.totalorder %s17, 1
    %p140 = scmp.ne.s32.totalorder %s135, %s137
    %p141 = scmp.eq.s32.totalorder %s17, 0
    %p142 = por %p140, %p141
    %p143 = scmp.ne.s32.totalorder %s135, %s137
    %p144 = scmp.eq.s32.totalorder %s22, 1
    %p145 = por %p143, %p144
    %p146 = scmp.ne.s32.totalorder %s137, %s138
    %p147 = scmp.eq.s32.totalorder %s22, 0
    %p148 = por %p146, %p147
    %p149 = scmp.ne.s32.totalorder %s137, %s138
    %p150 = scmp.eq.s32.totalorder %s23, 1
    %p151 = por %p149, %p150
    %p153 = scmp.ne.s32.totalorder %s138, %s152
    %p154 = scmp.eq.s32.totalorder %s23, 0
    %p155 = por %p153, %p154
    %s157 = sadd.s32 %s156, 1
    %p160 = scmp.eq.s32.totalorder %s17, 1
    %p161 = scmp.ne.s32.totalorder %s156, %s158
    %p162 = scmp.eq.s32.totalorder %s17, 0
    %p163 = por %p161, %p162
    %p164 = scmp.ne.s32.totalorder %s156, %s158
    %p165 = scmp.eq.s32.totalorder %s22, 1
    %p166 = por %p164, %p165
    %p167 = scmp.ne.s32.totalorder %s158, %s159
    %p168 = scmp.eq.s32.totalorder %s22, 0
    %p169 = por %p167, %p168
    %p170 = scmp.ne.s32.totalorder %s158, %s159
    %p171 = scmp.eq.s32.totalorder %s23, 1
    %p172 = por %p170, %p171
    %p174 = scmp.ne.s32.totalorder %s159, %s173
    %p175 = scmp.eq.s32.totalorder %s23, 0
    %p176 = por %p174, %p175
    %s178 = sadd.s32 %s177, 1
    %p181 = scmp.eq.s32.totalorder %s17, 1
    %p182 = scmp.ne.s32.totalorder %s177, %s179
    %p183 = scmp.eq.s32.totalorder %s17, 0
    %p184 = por %p182, %p183
    %p185 = scmp.ne.s32.totalorder %s177, %s179
    %p186 = scmp.eq.s32.totalorder %s22, 1
    %p187 = por %p185, %p186
    %p188 = scmp.ne.s32.totalorder %s179, %s180
    %p189 = scmp.eq.s32.totalorder %s22, 0
    %p190 = por %p188, %p189
    %p191 = scmp.ne.s32.totalorder %s179, %s180
    %p192 = scmp.eq.s32.totalorder %s23, 1
    %p193 = por %p191, %p192
    %p195 = scmp.ne.s32.totalorder %s180, %s194
    %p196 = scmp.eq.s32.totalorder %s23, 0
    %p197 = por %p195, %p196
    %s199 = sadd.s32 %s198, 1
    %p202 = scmp.eq.s32.totalorder %s17, 1
    %p203 = scmp.ne.s32.totalorder %s198, %s200
    %p204 = scmp.eq.s32.totalorder %s17, 0
    %p205 = por %p203, %p204
    %p206 = scmp.ne.s32.totalorder %s198, %s200
    %p207 = scmp.eq.s32.totalorder %s22, 1
    %p208 = por %p206, %p207
    %p209 = scmp.ne.s32.totalorder %s200, %s201
    %p210 = scmp.eq.s32.totalorder %s22, 0
    %p211 = por %p209, %p210
    %p212 = scmp.ne.s32.totalorder %s200, %s201
    %p213 = scmp.eq.s32.totalorder %s23, 1
    %p214 = por %p212, %p213
    %p216 = scmp.ne.s32.totalorder %s201, %s215
    %p217 = scmp.eq.s32.totalorder %s23, 0
    %p218 = por %p216, %p217
    %s219 = ssub.s32 %s17, %s24
    %p220 = scmp.eq.s32.totalorder %s219, 0
    %s222 = sadd.s32 %s221, 1
    %s223 = scalar_select %p220, %s221, %s222
    %p226 = pneg %p220
    %p227 = scmp.eq.s32.totalorder %s17, 1
    %p228 = por %p226, %p227
    %p229 = scmp.ne.s32.totalorder %s221, %s224
    %p230 = scmp.eq.s32.totalorder %s17, 0
    %p231 = por %p229, %p230
    %p232 = scmp.ne.s32.totalorder %s221, %s224
    %p233 = scmp.eq.s32.totalorder %s22, 1
    %p234 = por %p232, %p233
    %p235 = scmp.ne.s32.totalorder %s224, %s225
    %p236 = scmp.eq.s32.totalorder %s22, 0
    %p237 = por %p235, %p236
    %p238 = scmp.ne.s32.totalorder %s224, %s225
    %p239 = scmp.eq.s32.totalorder %s23, 1
    %p240 = por %p238, %p239
    %p242 = scmp.ne.s32.totalorder %s225, %s241
    %p243 = scmp.eq.s32.totalorder %s23, 0
    %p244 = por %p242, %p243
    %p245 = scmp.le.s32.totalorder 1, %s17
    %p246 = scmp.lt.s32.totalorder %s17, 3
    %p247 = pnand %p245, %p246
    %p248 = pneg %p247
    // Predicated region
    $region9: #{attacker_model_forward.1} parent=5 // pred_check
      _
    $region10: #{attacker_model_forward.1} parent=5 // pred_check_branch
      %250 = sbr.rel (%p247) target = $region12
    $region11: #{attacker_model_forward.1} parent=5 // pred_region
      %s251 = ssub.s32 %s17, 1
      // Predicated region
      $region13: #{attacker_model_forward.1} parent=11 // pred_check
        %p252 = pneg %p64
      $region14: #{attacker_model_forward.1} parent=11 // pred_check_branch
        %254 = sbr.rel (%p252) target = $region16
      $region15: #{attacker_model_forward.1} parent=11 // pred_region
        _
      $region16: #{attacker_model_forward.1} parent=11 // pred_fallthru
        _
      // Predicated region
      $region17: #{attacker_model_forward.1} parent=11 // pred_check
        %p255 = pneg %p85
      $region18: #{attacker_model_forward.1} parent=11 // pred_check_branch
        %257 = sbr.rel (%p255) target = $region20
      $region19: #{attacker_model_forward.1} parent=11 // pred_region
        _
      $region20: #{attacker_model_forward.1} parent=11 // pred_fallthru
        _
      // Predicated region
      $region21: #{attacker_model_forward.1} parent=11 // pred_check
        %p258 = pneg %p106
      $region22: #{attacker_model_forward.1} parent=11 // pred_check_branch
        %260 = sbr.rel (%p258) target = $region24
      $region23: #{attacker_model_forward.1} parent=11 // pred_region
        _
      $region24: #{attacker_model_forward.1} parent=11 // pred_fallthru
        _
      // Predicated region
      $region25: #{attacker_model_forward.1} parent=11 // pred_check
        %p261 = pneg %p127
      $region26: #{attacker_model_forward.1} parent=11 // pred_check_branch
        %263 = sbr.rel (%p261) target = $region28
      $region27: #{attacker_model_forward.1} parent=11 // pred_region
        _
      $region28: #{attacker_model_forward.1} parent=11 // pred_fallthru
        _
      // Predicated region
      $region29: #{attacker_model_forward.1} parent=11 // pred_check
        %p264 = pneg %p148
      $region30: #{attacker_model_forward.1} parent=11 // pred_check_branch
        %266 = sbr.rel (%p264) target = $region32
      $region31: #{attacker_model_forward.1} parent=11 // pred_region
        _
      $region32: #{attacker_model_forward.1} parent=11 // pred_fallthru
        _
      // Predicated region
      $region33: #{attacker_model_forward.1} parent=11 // pred_check
        %p267 = pneg %p169
      $region34: #{attacker_model_forward.1} parent=11 // pred_check_branch
        %269 = sbr.rel (%p267) target = $region36
      $region35: #{attacker_model_forward.1} parent=11 // pred_region
        _
      $region36: #{attacker_model_forward.1} parent=11 // pred_fallthru
        _
      // Predicated region
      $region37: #{attacker_model_forward.1} parent=11 // pred_check
        %p270 = pneg %p190
      $region38: #{attacker_model_forward.1} parent=11 // pred_check_branch
        %272 = sbr.rel (%p270) target = $region40
      $region39: #{attacker_model_forward.1} parent=11 // pred_region
        _
      $region40: #{attacker_model_forward.1} parent=11 // pred_fallthru
        _
      // Predicated region
      $region41: #{attacker_model_forward.1} parent=11 // pred_check
        %p273 = pneg %p211
      $region42: #{attacker_model_forward.1} parent=11 // pred_check_branch
        %275 = sbr.rel (%p273) target = $region44
      $region43: #{attacker_model_forward.1} parent=11 // pred_region
        _
      $region44: #{attacker_model_forward.1} parent=11 // pred_fallthru
        _
    $region12: #{attacker_model_forward.1} parent=5 // pred_fallthru
      _
    %p276 = scmp.lt.s32.totalorder %s17, 2
    // Predicated region
    $region45: #{attacker_model_forward.1} parent=5 // pred_check
      %p277 = pneg %p276
    $region46: #{attacker_model_forward.1} parent=5 // pred_check_branch
      %279 = sbr.rel (%p277) target = $region48
    $region47: #{attacker_model_forward.1} parent=5 // pred_region
      // Predicated region
      $region49: #{attacker_model_forward.1} parent=47 // pred_check
        %p280 = pneg %p37
      $region50: #{attacker_model_forward.1} parent=47 // pred_check_branch
        %282 = sbr.rel (%p280) target = $region52
      $region51: #{attacker_model_forward.1} parent=47 // pred_region
        %s283 = smul.u32 32, %s17
        %p284 = scmp.lt.s32.totalorder %s283, 63
        %s285 = scalar_select %p284, %s283, 63
        %s286 = smul.addr %s285, 4
        %s287 = scalar_lea.vmem %s0, %s286
        %s288 = smul.u32 32, %s17
      $region52: #{attacker_model_forward.1} parent=47 // pred_fallthru
        _
    $region48: #{attacker_model_forward.1} parent=5 // pred_fallthru
      _
    %p289 = scmp.le.s32.totalorder 1, %s17
    %p290 = scmp.lt.s32.totalorder %s17, 3
    %p291 = pnand %p289, %p290
    %p292 = pneg %p291
    // Predicated region
    $region53: #{attacker_model_forward.1} parent=5 // pred_check
      _
    $region54: #{attacker_model_forward.1} parent=5 // pred_check_branch
      %294 = sbr.rel (%p291) target = $region56
    $region55: #{attacker_model_forward.1} parent=5 // pred_region
      %s295 = ssub.s32 %s17, 1
      %s296 = smul.u32 32, %s22
      %p297 = scmp.lt.s32.totalorder %s296, 63
      %s298 = scalar_select %p297, %s296, 63
      %s299 = smul.addr %s298, 4
      %s300 = scalar_lea.vmem %s0, %s299
      %p301 = pneg %p43
      %p302 = pneg %p40
      %p303 = pneg %p64
      %p304 = pneg %p61
      %p305 = pneg %p85
      %p306 = pneg %p82
      %p307 = pneg %p106
      %p308 = pneg %p103
      %p309 = pneg %p127
      %p310 = pneg %p124
      %p311 = pneg %p148
      %p312 = pneg %p145
      %p313 = pneg %p169
      %p314 = pneg %p166
      %p315 = pneg %p190
      %p316 = pneg %p187
      %p317 = pneg %p211
      %p318 = pneg %p208
      %p319 = pneg %p237
      %p320 = pneg %p234
      %s321 = smul.u32 2, %s22
      %p322 = scmp.lt.s32.totalorder %s321, 3
      %s323 = scalar_select %p322, %s321, 3
      %s324 = scalar_lea.vmem %s9, %s323
      %s325 = smul.u32 32, %s22
      %p326 = scmp.lt.s32.totalorder %s325, 63
      %s327 = scalar_select %p326, %s325, 63
      %s328 = smul.addr %s327, 4
      %s329 = scalar_lea.vmem %s0, %s328
      %s330 = smul.u32 32, %s22
      %s331 = smul.u32 2, %s22
      %p332 = scmp.lt.s32.totalorder %s331, 3
      %s333 = scalar_select %p332, %s331, 3
      %s334 = scalar_lea.vmem %s9, %s333
      %s335 = smul.u32 2, %s22
      %v337 = vld [vmem:[%s1] sm:$0xf]
      %v338 = vld [vmem:[%s1 + $0x4] sm:$0xf]
      %v339 = vld [vmem:[%s1 + $0x8] sm:$0xf]
      %v340 = vld [vmem:[%s1 + $0xc] sm:$0xf]
      %v341 = vld [vmem:[%s1 + $0x10] sm:$0xf]
      %v342 = vld [vmem:[%s1 + $0x14] sm:$0xf]
      %v343 = vld [vmem:[%s1 + $0x18] sm:$0xf]
      %v344 = vld [vmem:[%s1 + $0x1c] sm:$0xf]
      %v345 = vld [vmem:[%s1 + $0x20] sm:$0xf]
      %v346 = vld [vmem:[%s1 + $0x24] sm:$0xf]
      %v347 = vld [vmem:[%s1 + $0x28] sm:$0xf]
      %v348 = vld [vmem:[%s1 + $0x2c] sm:$0xf]
      %v349 = vld [vmem:[%s1 + $0x30] sm:$0xf]
      %v350 = vld [vmem:[%s1 + $0x34] sm:$0xf]
      %v351 = vld [vmem:[%s1 + $0x38] sm:$0xf]
      %v352 = vld [vmem:[%s1 + $0x3c] sm:$0xf]
      %v353 = vld [vmem:[%s1 + $0x40] sm:$0xf]
      %v354 = vld [vmem:[%s1 + $0x44] sm:$0xf]
      %v355 = vld [vmem:[%s1 + $0x48] sm:$0xf]
      %v356 = vld [vmem:[%s1 + $0x4c] sm:$0xf]
      %v357 = vld [vmem:[%s1 + $0x50] sm:$0xf]
      %v358 = vld [vmem:[%s1 + $0x54] sm:$0xf]
      %v359 = vld [vmem:[%s1 + $0x58] sm:$0xf]
      %v360 = vld [vmem:[%s1 + $0x5c] sm:$0xf]
      %v361 = vld [vmem:[%s1 + $0x60] sm:$0xf]
      %v362 = vld [vmem:[%s1 + $0x64] sm:$0xf]
      %v363 = vld [vmem:[%s1 + $0x68] sm:$0xf]
      %v364 = vld [vmem:[%s1 + $0x6c] sm:$0xf]
      %v365 = vld [vmem:[%s1 + $0x70] sm:$0xf]
      %v366 = vld [vmem:[%s1 + $0x74] sm:$0xf]
      %v367 = vld [vmem:[%s1 + $0x78] sm:$0xf]
      %v368 = vld [vmem:[%s1 + $0x7c] sm:$0xf]
      %v369 = vld [vmem:[%s1 + $0x80] sm:$0xf]
      %v370 = vld [vmem:[%s1 + $0x84] sm:$0xf]
      %v371 = vld [vmem:[%s1 + $0x88] sm:$0xf]
      %v372 = vld [vmem:[%s1 + $0x8c] sm:$0xf]
      %v373 = vld [vmem:[%s1 + $0x90] sm:$0xf]
      %v374 = vld [vmem:[%s1 + $0x94] sm:$0xf]
      %v375 = vld [vmem:[%s1 + $0x98] sm:$0xf]
      %v376 = vld [vmem:[%s1 + $0x9c] sm:$0xf]
      %v377 = vld [vmem:[%s1 + $0xa0] sm:$0xf]
      %v378 = vld [vmem:[%s1 + $0xa4] sm:$0xf]
      %v379 = vld [vmem:[%s1 + $0xa8] sm:$0xf]
      %v380 = vld [vmem:[%s1 + $0xac] sm:$0xf]
      %v381 = vld [vmem:[%s1 + $0xb0] sm:$0xf]
      %v382 = vld [vmem:[%s1 + $0xb4] sm:$0xf]
      %v383 = vld [vmem:[%s1 + $0xb8] sm:$0xf]
      %v384 = vld [vmem:[%s1 + $0xbc] sm:$0xf]
      %v385 = vld [vmem:[%s1 + $0xc0] sm:$0xf]
      %v386 = vld [vmem:[%s1 + $0xc4] sm:$0xf]
      %v387 = vld [vmem:[%s1 + $0xc8] sm:$0xf]
      %v388 = vld [vmem:[%s1 + $0xcc] sm:$0xf]
      %v389 = vld [vmem:[%s1 + $0xd0] sm:$0xf]
      %v390 = vld [vmem:[%s1 + $0xd4] sm:$0xf]
      %v391 = vld [vmem:[%s1 + $0xd8] sm:$0xf]
      %v392 = vld [vmem:[%s1 + $0xdc] sm:$0xf]
      %v393 = vld [vmem:[%s1 + $0xe0] sm:$0xf]
      %v394 = vld [vmem:[%s1 + $0xe4] sm:$0xf]
      %v395 = vld [vmem:[%s1 + $0xe8] sm:$0xf]
      %v396 = vld [vmem:[%s1 + $0xec] sm:$0xf]
      %v397 = vld [vmem:[%s1 + $0xf0] sm:$0xf]
      %v398 = vld [vmem:[%s1 + $0xf4] sm:$0xf]
      %v399 = vld [vmem:[%s1 + $0xf8] sm:$0xf]
      %v400 = vld [vmem:[%s1 + $0xfc] sm:$0xf]
      %v401 = vld [vmem:[%s329] sm:$0xf]
      %v402 = vld [vmem:[%s329 + $0x4] sm:$0xf]
      %v403 = vld [vmem:[%s329 + $0x8] sm:$0xf]
      %v404 = vld [vmem:[%s329 + $0xc] sm:$0xf]
      %v405 = vld [vmem:[%s329 + $0x10] sm:$0xf]
      %v406 = vld [vmem:[%s329 + $0x14] sm:$0xf]
      %v407 = vld [vmem:[%s329 + $0x18] sm:$0xf]
      %v408 = vld [vmem:[%s329 + $0x1c] sm:$0xf]
      %v409 = vld [vmem:[%s329 + $0x20] sm:$0xf]
      %v410 = vld [vmem:[%s329 + $0x24] sm:$0xf]
      %v411 = vld [vmem:[%s329 + $0x28] sm:$0xf]
      %v412 = vld [vmem:[%s329 + $0x2c] sm:$0xf]
      %v413 = vld [vmem:[%s329 + $0x30] sm:$0xf]
      %v414 = vld [vmem:[%s329 + $0x34] sm:$0xf]
      %v415 = vld [vmem:[%s329 + $0x38] sm:$0xf]
      %v416 = vld [vmem:[%s329 + $0x3c] sm:$0xf]
      %v417 = vld [vmem:[%s329 + $0x40] sm:$0xf]
      %v418 = vld [vmem:[%s329 + $0x44] sm:$0xf]
      %v419 = vld [vmem:[%s329 + $0x48] sm:$0xf]
      %v420 = vld [vmem:[%s329 + $0x4c] sm:$0xf]
      %v421 = vld [vmem:[%s329 + $0x50] sm:$0xf]
      %v422 = vld [vmem:[%s329 + $0x54] sm:$0xf]
      %v423 = vld [vmem:[%s329 + $0x58] sm:$0xf]
      %v424 = vld [vmem:[%s329 + $0x5c] sm:$0xf]
      %v425 = vld [vmem:[%s329 + $0x60] sm:$0xf]
      %v426 = vld [vmem:[%s329 + $0x64] sm:$0xf]
      %v427 = vld [vmem:[%s329 + $0x68] sm:$0xf]
      %v428 = vld [vmem:[%s329 + $0x6c] sm:$0xf]
      %v429 = vld [vmem:[%s329 + $0x70] sm:$0xf]
      %v430 = vld [vmem:[%s329 + $0x74] sm:$0xf]
      %v431 = vld [vmem:[%s329 + $0x78] sm:$0xf]
      %v432 = vld [vmem:[%s329 + $0x7c] sm:$0xf]
      %v433 = vld [vmem:[%s2] sm:$0xff]
      %v434 = vld [vmem:[%s2 + $0x8] sm:$0xff]
      %v435 = vld [vmem:[%s2 + $0x10] sm:$0xff]
      %v436 = vld [vmem:[%s2 + $0x18] sm:$0xff]
      %v437 = vld [vmem:[%s2 + $0x20] sm:$0xff]
      %v438 = vld [vmem:[%s2 + $0x28] sm:$0xff]
      %v439 = vld [vmem:[%s2 + $0x30] sm:$0xff]
      %v440 = vld [vmem:[%s2 + $0x38] sm:$0xff]
      %v441 = vld [vmem:[%s2 + $0x40] sm:$0xff]
      %v442 = vld [vmem:[%s2 + $0x48] sm:$0xff]
      %v443 = vld [vmem:[%s2 + $0x50] sm:$0xff]
      %v444 = vld [vmem:[%s2 + $0x58] sm:$0xff]
      %v445 = vld [vmem:[%s2 + $0x60] sm:$0xff]
      %v446 = vld [vmem:[%s2 + $0x68] sm:$0xff]
      %v447 = vld [vmem:[%s2 + $0x70] sm:$0xff]
      %v448 = vld [vmem:[%s2 + $0x78] sm:$0xff]
      %v449 = vld [vmem:[%s2 + $0x80] sm:$0xff]
      %v450 = vld [vmem:[%s2 + $0x88] sm:$0xff]
      %v451 = vld [vmem:[%s2 + $0x90] sm:$0xff]
      %v452 = vld [vmem:[%s2 + $0x98] sm:$0xff]
      %v453 = vld [vmem:[%s2 + $0xa0] sm:$0xff]
      %v454 = vld [vmem:[%s2 + $0xa8] sm:$0xff]
      %v455 = vld [vmem:[%s2 + $0xb0] sm:$0xff]
      %v456 = vld [vmem:[%s2 + $0xb8] sm:$0xff]
      %v457 = vld [vmem:[%s2 + $0xc0] sm:$0xff]
      %v458 = vld [vmem:[%s2 + $0xc8] sm:$0xff]
      %v459 = vld [vmem:[%s2 + $0xd0] sm:$0xff]
      %v460 = vld [vmem:[%s2 + $0xd8] sm:$0xff]
      %v461 = vld [vmem:[%s2 + $0xe0] sm:$0xff]
      %v462 = vld [vmem:[%s2 + $0xe8] sm:$0xff]
      %v463 = vld [vmem:[%s2 + $0xf0] sm:$0xff]
      %v464 = vld [vmem:[%s2 + $0xf8] sm:$0xff]
      %v465 = vld [vmem:[%s2 + $0x100] sm:$0xff]
      %v466 = vld [vmem:[%s2 + $0x108] sm:$0xff]
      %v467 = vld [vmem:[%s2 + $0x110] sm:$0xff]
      %v468 = vld [vmem:[%s2 + $0x118] sm:$0xff]
      %v469 = vld [vmem:[%s2 + $0x120] sm:$0xff]
      %v470 = vld [vmem:[%s2 + $0x128] sm:$0xff]
      %v471 = vld [vmem:[%s2 + $0x130] sm:$0xff]
      %v472 = vld [vmem:[%s2 + $0x138] sm:$0xff]
      %v473 = vld [vmem:[%s2 + $0x140] sm:$0xff]
      %v474 = vld [vmem:[%s2 + $0x148] sm:$0xff]
      %v475 = vld [vmem:[%s2 + $0x150] sm:$0xff]
      %v476 = vld [vmem:[%s2 + $0x158] sm:$0xff]
      %v477 = vld [vmem:[%s2 + $0x160] sm:$0xff]
      %v478 = vld [vmem:[%s2 + $0x168] sm:$0xff]
      %v479 = vld [vmem:[%s2 + $0x170] sm:$0xff]
      %v480 = vld [vmem:[%s2 + $0x178] sm:$0xff]
      %v481 = vld [vmem:[%s2 + $0x180] sm:$0xff]
      %v482 = vld [vmem:[%s2 + $0x188] sm:$0xff]
      %v483 = vld [vmem:[%s2 + $0x190] sm:$0xff]
      %v484 = vld [vmem:[%s2 + $0x198] sm:$0xff]
      %v485 = vld [vmem:[%s2 + $0x1a0] sm:$0xff]
      %v486 = vld [vmem:[%s2 + $0x1a8] sm:$0xff]
      %v487 = vld [vmem:[%s2 + $0x1b0] sm:$0xff]
      %v488 = vld [vmem:[%s2 + $0x1b8] sm:$0xff]
      %v489 = vld [vmem:[%s2 + $0x1c0] sm:$0xff]
      %v490 = vld [vmem:[%s2 + $0x1c8] sm:$0xff]
      %v491 = vld [vmem:[%s2 + $0x1d0] sm:$0xff]
      %v492 = vld [vmem:[%s2 + $0x1d8] sm:$0xff]
      %v493 = vld [vmem:[%s2 + $0x1e0] sm:$0xff]
      %v494 = vld [vmem:[%s2 + $0x1e8] sm:$0xff]
      %v495 = vld [vmem:[%s2 + $0x1f0] sm:$0xff]
      %v496 = vld [vmem:[%s2 + $0x1f8] sm:$0xff]
      %498 = vset.pattern.permute.xlu0 0
      %499 = vperm.xlu0 %498, %v433
      %v500 = vpop.permute.xlu0 %499
      %503 = vset.pattern.permute.xlu0 0
      %504 = vperm.xlu0 %503, %v434
      %v505 = vpop.permute.xlu0 %504
      %508 = vset.pattern.permute.xlu0 0
      %509 = vperm.xlu0 %508, %v435
      %v510 = vpop.permute.xlu0 %509
      %513 = vset.pattern.permute.xlu0 0
      %514 = vperm.xlu0 %513, %v436
      %v515 = vpop.permute.xlu0 %514
      %518 = vset.pattern.permute.xlu0 0
      %519 = vperm.xlu0 %518, %v437
      %v520 = vpop.permute.xlu0 %519
      %523 = vset.pattern.permute.xlu0 0
      %524 = vperm.xlu0 %523, %v438
      %v525 = vpop.permute.xlu0 %524
      %528 = vset.pattern.permute.xlu0 0
      %529 = vperm.xlu0 %528, %v439
      %v530 = vpop.permute.xlu0 %529
      %533 = vset.pattern.permute.xlu0 0
      %534 = vperm.xlu0 %533, %v440
      %v535 = vpop.permute.xlu0 %534
      %538 = vset.pattern.permute.xlu0 0
      %539 = vperm.xlu0 %538, %v441
      %v540 = vpop.permute.xlu0 %539
      %543 = vset.pattern.permute.xlu0 0
      %544 = vperm.xlu0 %543, %v442
      %v545 = vpop.permute.xlu0 %544
      %548 = vset.pattern.permute.xlu0 0
      %549 = vperm.xlu0 %548, %v443
      %v550 = vpop.permute.xlu0 %549
      %553 = vset.pattern.permute.xlu0 0
      %554 = vperm.xlu0 %553, %v444
      %v555 = vpop.permute.xlu0 %554
      %558 = vset.pattern.permute.xlu0 0
      %559 = vperm.xlu0 %558, %v445
      %v560 = vpop.permute.xlu0 %559
      %563 = vset.pattern.permute.xlu0 0
      %564 = vperm.xlu0 %563, %v446
      %v565 = vpop.permute.xlu0 %564
      %568 = vset.pattern.permute.xlu0 0
      %569 = vperm.xlu0 %568, %v447
      %v570 = vpop.permute.xlu0 %569
      %573 = vset.pattern.permute.xlu0 0
      %574 = vperm.xlu0 %573, %v448
      %v575 = vpop.permute.xlu0 %574
      %578 = vset.pattern.permute.xlu0 0
      %579 = vperm.xlu0 %578, %v449
      %v580 = vpop.permute.xlu0 %579
      %583 = vset.pattern.permute.xlu0 0
      %584 = vperm.xlu0 %583, %v450
      %v585 = vpop.permute.xlu0 %584
      %588 = vset.pattern.permute.xlu0 0
      %589 = vperm.xlu0 %588, %v451
      %v590 = vpop.permute.xlu0 %589
      %593 = vset.pattern.permute.xlu0 0
      %594 = vperm.xlu0 %593, %v452
      %v595 = vpop.permute.xlu0 %594
      %598 = vset.pattern.permute.xlu0 0
      %599 = vperm.xlu0 %598, %v453
      %v600 = vpop.permute.xlu0 %599
      %603 = vset.pattern.permute.xlu0 0
      %604 = vperm.xlu0 %603, %v454
      %v605 = vpop.permute.xlu0 %604
      %608 = vset.pattern.permute.xlu0 0
      %609 = vperm.xlu0 %608, %v455
      %v610 = vpop.permute.xlu0 %609
      %613 = vset.pattern.permute.xlu0 0
      %614 = vperm.xlu0 %613, %v456
      %v615 = vpop.permute.xlu0 %614
      %618 = vset.pattern.permute.xlu0 0
      %619 = vperm.xlu0 %618, %v457
      %v620 = vpop.permute.xlu0 %619
      %623 = vset.pattern.permute.xlu0 0
      %624 = vperm.xlu0 %623, %v458
      %v625 = vpop.permute.xlu0 %624
      %628 = vset.pattern.permute.xlu0 0
      %629 = vperm.xlu0 %628, %v459
      %v630 = vpop.permute.xlu0 %629
      %633 = vset.pattern.permute.xlu0 0
      %634 = vperm.xlu0 %633, %v460
      %v635 = vpop.permute.xlu0 %634
      %638 = vset.pattern.permute.xlu0 0
      %639 = vperm.xlu0 %638, %v461
      %v640 = vpop.permute.xlu0 %639
      %643 = vset.pattern.permute.xlu0 0
      %644 = vperm.xlu0 %643, %v462
      %v645 = vpop.permute.xlu0 %644
      %648 = vset.pattern.permute.xlu0 0
      %649 = vperm.xlu0 %648, %v463
      %v650 = vpop.permute.xlu0 %649
      %653 = vset.pattern.permute.xlu0 0
      %654 = vperm.xlu0 %653, %v464
      %v655 = vpop.permute.xlu0 %654
      %658 = vset.pattern.permute.xlu0 0
      %659 = vperm.xlu0 %658, %v465
      %v660 = vpop.permute.xlu0 %659
      %663 = vset.pattern.permute.xlu0 0
      %664 = vperm.xlu0 %663, %v466
      %v665 = vpop.permute.xlu0 %664
      %668 = vset.pattern.permute.xlu0 0
      %669 = vperm.xlu0 %668, %v467
      %v670 = vpop.permute.xlu0 %669
      %673 = vset.pattern.permute.xlu0 0
      %674 = vperm.xlu0 %673, %v468
      %v675 = vpop.permute.xlu0 %674
      %678 = vset.pattern.permute.xlu0 0
      %679 = vperm.xlu0 %678, %v469
      %v680 = vpop.permute.xlu0 %679
      %683 = vset.pattern.permute.xlu0 0
      %684 = vperm.xlu0 %683, %v470
      %v685 = vpop.permute.xlu0 %684
      %688 = vset.pattern.permute.xlu0 0
      %689 = vperm.xlu0 %688, %v471
      %v690 = vpop.permute.xlu0 %689
      %693 = vset.pattern.permute.xlu0 0
      %694 = vperm.xlu0 %693, %v472
      %v695 = vpop.permute.xlu0 %694
      %698 = vset.pattern.permute.xlu0 0
      %699 = vperm.xlu0 %698, %v473
      %v700 = vpop.permute.xlu0 %699
      %703 = vset.pattern.permute.xlu0 0
      %704 = vperm.xlu0 %703, %v474
      %v705 = vpop.permute.xlu0 %704
      %708 = vset.pattern.permute.xlu0 0
      %709 = vperm.xlu0 %708, %v475
      %v710 = vpop.permute.xlu0 %709
      %713 = vset.pattern.permute.xlu0 0
      %714 = vperm.xlu0 %713, %v476
      %v715 = vpop.permute.xlu0 %714
      %718 = vset.pattern.permute.xlu0 0
      %719 = vperm.xlu0 %718, %v477
      %v720 = vpop.permute.xlu0 %719
      %723 = vset.pattern.permute.xlu0 0
      %724 = vperm.xlu0 %723, %v478
      %v725 = vpop.permute.xlu0 %724
      %728 = vset.pattern.permute.xlu0 0
      %729 = vperm.xlu0 %728, %v479
      %v730 = vpop.permute.xlu0 %729
      %733 = vset.pattern.permute.xlu0 0
      %734 = vperm.xlu0 %733, %v480
      %v735 = vpop.permute.xlu0 %734
      %738 = vset.pattern.permute.xlu0 0
      %739 = vperm.xlu0 %738, %v481
      %v740 = vpop.permute.xlu0 %739
      %743 = vset.pattern.permute.xlu0 0
      %744 = vperm.xlu0 %743, %v482
      %v745 = vpop.permute.xlu0 %744
      %748 = vset.pattern.permute.xlu0 0
      %749 = vperm.xlu0 %748, %v483
      %v750 = vpop.permute.xlu0 %749
      %753 = vset.pattern.permute.xlu0 0
      %754 = vperm.xlu0 %753, %v484
      %v755 = vpop.permute.xlu0 %754
      %758 = vset.pattern.permute.xlu0 0
      %759 = vperm.xlu0 %758, %v485
      %v760 = vpop.permute.xlu0 %759
      %763 = vset.pattern.permute.xlu0 0
      %764 = vperm.xlu0 %763, %v486
      %v765 = vpop.permute.xlu0 %764
      %768 = vset.pattern.permute.xlu0 0
      %769 = vperm.xlu0 %768, %v487
      %v770 = vpop.permute.xlu0 %769
      %773 = vset.pattern.permute.xlu0 0
      %774 = vperm.xlu0 %773, %v488
      %v775 = vpop.permute.xlu0 %774
      %778 = vset.pattern.permute.xlu0 0
      %779 = vperm.xlu0 %778, %v489
      %v780 = vpop.permute.xlu0 %779
      %783 = vset.pattern.permute.xlu0 0
      %784 = vperm.xlu0 %783, %v490
      %v785 = vpop.permute.xlu0 %784
      %788 = vset.pattern.permute.xlu0 0
      %789 = vperm.xlu0 %788, %v491
      %v790 = vpop.permute.xlu0 %789
      %793 = vset.pattern.permute.xlu0 0
      %794 = vperm.xlu0 %793, %v492
      %v795 = vpop.permute.xlu0 %794
      %798 = vset.pattern.permute.xlu0 0
      %799 = vperm.xlu0 %798, %v493
      %v800 = vpop.permute.xlu0 %799
      %803 = vset.pattern.permute.xlu0 0
      %804 = vperm.xlu0 %803, %v494
      %v805 = vpop.permute.xlu0 %804
      %808 = vset.pattern.permute.xlu0 0
      %809 = vperm.xlu0 %808, %v495
      %v810 = vpop.permute.xlu0 %809
      %813 = vset.pattern.permute.xlu0 0
      %814 = vperm.xlu0 %813, %v496
      %v815 = vpop.permute.xlu0 %814
      %v881 = vunpack.c.l.b16 %v337
      %v882 = vunpack.c.l.b16 %v338
      %v883 = vunpack.c.l.b16 %v339
      %v884 = vunpack.c.l.b16 %v340
      %v885 = vunpack.c.l.b16 %v341
      %v886 = vunpack.c.l.b16 %v342
      %v887 = vunpack.c.l.b16 %v343
      %v888 = vunpack.c.l.b16 %v344
      %v889 = vunpack.c.l.b16 %v345
      %v890 = vunpack.c.l.b16 %v346
      %v891 = vunpack.c.l.b16 %v347
      %v892 = vunpack.c.l.b16 %v348
      %v893 = vunpack.c.l.b16 %v349
      %v894 = vunpack.c.l.b16 %v350
      %v895 = vunpack.c.l.b16 %v351
      %v896 = vunpack.c.l.b16 %v352
      %v897 = vunpack.c.l.b16 %v353
      %v898 = vunpack.c.l.b16 %v354
      %v899 = vunpack.c.l.b16 %v355
      %v900 = vunpack.c.l.b16 %v356
      %v901 = vunpack.c.l.b16 %v357
      %v902 = vunpack.c.l.b16 %v358
      %v903 = vunpack.c.l.b16 %v359
      %v904 = vunpack.c.l.b16 %v360
      %v905 = vunpack.c.l.b16 %v361
      %v906 = vunpack.c.l.b16 %v362
      %v907 = vunpack.c.l.b16 %v363
      %v908 = vunpack.c.l.b16 %v364
      %v909 = vunpack.c.l.b16 %v365
      %v910 = vunpack.c.l.b16 %v366
      %v911 = vunpack.c.l.b16 %v367
      %v912 = vunpack.c.l.b16 %v368
      %v913 = vunpack.c.l.b16 %v369
      %v914 = vunpack.c.l.b16 %v370
      %v915 = vunpack.c.l.b16 %v371
      %v916 = vunpack.c.l.b16 %v372
      %v917 = vunpack.c.l.b16 %v373
      %v918 = vunpack.c.l.b16 %v374
      %v919 = vunpack.c.l.b16 %v375
      %v920 = vunpack.c.l.b16 %v376
      %v921 = vunpack.c.l.b16 %v377
      %v922 = vunpack.c.l.b16 %v378
      %v923 = vunpack.c.l.b16 %v379
      %v924 = vunpack.c.l.b16 %v380
      %v925 = vunpack.c.l.b16 %v381
      %v926 = vunpack.c.l.b16 %v382
      %v927 = vunpack.c.l.b16 %v383
      %v928 = vunpack.c.l.b16 %v384
      %v929 = vunpack.c.l.b16 %v385
      %v930 = vunpack.c.l.b16 %v386
      %v931 = vunpack.c.l.b16 %v387
      %v932 = vunpack.c.l.b16 %v388
      %v933 = vunpack.c.l.b16 %v389
      %v934 = vunpack.c.l.b16 %v390
      %v935 = vunpack.c.l.b16 %v391
      %v936 = vunpack.c.l.b16 %v392
      %v937 = vunpack.c.l.b16 %v393
      %v938 = vunpack.c.l.b16 %v394
      %v939 = vunpack.c.l.b16 %v395
      %v940 = vunpack.c.l.b16 %v396
      %v941 = vunpack.c.l.b16 %v397
      %v942 = vunpack.c.l.b16 %v398
      %v943 = vunpack.c.l.b16 %v399
      %v944 = vunpack.c.l.b16 %v400
      %v945 = vpack.c.b16 %v882, %v881
      %v946 = vpack.c.b16 %v884, %v883
      %v947 = vpack.c.b16 %v886, %v885
      %v948 = vpack.c.b16 %v888, %v887
      %v949 = vpack.c.b16 %v890, %v889
      %v950 = vpack.c.b16 %v892, %v891
      %v951 = vpack.c.b16 %v894, %v893
      %v952 = vpack.c.b16 %v896, %v895
      %v953 = vpack.c.b16 %v898, %v897
      %v954 = vpack.c.b16 %v900, %v899
      %v955 = vpack.c.b16 %v902, %v901
      %v956 = vpack.c.b16 %v904, %v903
      %v957 = vpack.c.b16 %v906, %v905
      %v958 = vpack.c.b16 %v908, %v907
      %v959 = vpack.c.b16 %v910, %v909
      %v960 = vpack.c.b16 %v912, %v911
      %v961 = vpack.c.b16 %v914, %v913
      %v962 = vpack.c.b16 %v916, %v915
      %v963 = vpack.c.b16 %v918, %v917
      %v964 = vpack.c.b16 %v920, %v919
      %v965 = vpack.c.b16 %v922, %v921
      %v966 = vpack.c.b16 %v924, %v923
      %v967 = vpack.c.b16 %v926, %v925
      %v968 = vpack.c.b16 %v928, %v927
      %v969 = vpack.c.b16 %v930, %v929
      %v970 = vpack.c.b16 %v932, %v931
      %v971 = vpack.c.b16 %v934, %v933
      %v972 = vpack.c.b16 %v936, %v935
      %v973 = vpack.c.b16 %v938, %v937
      %v974 = vpack.c.b16 %v940, %v939
      %v975 = vpack.c.b16 %v942, %v941
      %v976 = vpack.c.b16 %v944, %v943
      %v1009 = vunpack.c.l.b16 %v401
      %v1010 = vunpack.c.l.b16 %v402
      %v1011 = vunpack.c.l.b16 %v403
      %v1012 = vunpack.c.l.b16 %v404
      %v1013 = vunpack.c.l.b16 %v405
      %v1014 = vunpack.c.l.b16 %v406
      %v1015 = vunpack.c.l.b16 %v407
      %v1016 = vunpack.c.l.b16 %v408
      %v1017 = vunpack.c.l.b16 %v409
      %v1018 = vunpack.c.l.b16 %v410
      %v1019 = vunpack.c.l.b16 %v411
      %v1020 = vunpack.c.l.b16 %v412
      %v1021 = vunpack.c.l.b16 %v413
      %v1022 = vunpack.c.l.b16 %v414
      %v1023 = vunpack.c.l.b16 %v415
      %v1024 = vunpack.c.l.b16 %v416
      %v1025 = vunpack.c.l.b16 %v417
      %v1026 = vunpack.c.l.b16 %v418
      %v1027 = vunpack.c.l.b16 %v419
      %v1028 = vunpack.c.l.b16 %v420
      %v1029 = vunpack.c.l.b16 %v421
      %v1030 = vunpack.c.l.b16 %v422
      %v1031 = vunpack.c.l.b16 %v423
      %v1032 = vunpack.c.l.b16 %v424
      %v1033 = vunpack.c.l.b16 %v425
      %v1034 = vunpack.c.l.b16 %v426
      %v1035 = vunpack.c.l.b16 %v427
      %v1036 = vunpack.c.l.b16 %v428
      %v1037 = vunpack.c.l.b16 %v429
      %v1038 = vunpack.c.l.b16 %v430
      %v1039 = vunpack.c.l.b16 %v431
      %v1040 = vunpack.c.l.b16 %v432
      %v1041 = vpack.c.b16 %v1010, %v1009
      %v1042 = vpack.c.b16 %v1012, %v1011
      %v1043 = vpack.c.b16 %v1014, %v1013
      %v1044 = vpack.c.b16 %v1016, %v1015
      %v1045 = vpack.c.b16 %v1018, %v1017
      %v1046 = vpack.c.b16 %v1020, %v1019
      %v1047 = vpack.c.b16 %v1022, %v1021
      %v1048 = vpack.c.b16 %v1024, %v1023
      %v1049 = vpack.c.b16 %v1026, %v1025
      %v1050 = vpack.c.b16 %v1028, %v1027
      %v1051 = vpack.c.b16 %v1030, %v1029
      %v1052 = vpack.c.b16 %v1032, %v1031
      %v1053 = vpack.c.b16 %v1034, %v1033
      %v1054 = vpack.c.b16 %v1036, %v1035
      %v1055 = vpack.c.b16 %v1038, %v1037
      %v1056 = vpack.c.b16 %v1040, %v1039
      %vm1057 = vcmask 80896
      %v1059 = vsel %vm1057, %v945, 0
      %v1062 = vsel %vm1057, %v946, 0
      %v1065 = vsel %vm1057, %v947, 0
      %v1068 = vsel %vm1057, %v948, 0
      %v1071 = vsel %vm1057, %v949, 0
      %v1074 = vsel %vm1057, %v950, 0
      %v1077 = vsel %vm1057, %v951, 0
      %v1080 = vsel %vm1057, %v952, 0
      %v1083 = vsel %vm1057, %v953, 0
      %v1086 = vsel %vm1057, %v954, 0
      %v1089 = vsel %vm1057, %v955, 0
      %v1092 = vsel %vm1057, %v956, 0
      %v1095 = vsel %vm1057, %v957, 0
      %v1098 = vsel %vm1057, %v958, 0
      %v1101 = vsel %vm1057, %v959, 0
      %v1104 = vsel %vm1057, %v960, 0
      %v1107 = vsel %vm1057, %v961, 0
      %v1110 = vsel %vm1057, %v962, 0
      %v1113 = vsel %vm1057, %v963, 0
      %v1116 = vsel %vm1057, %v964, 0
      %v1119 = vsel %vm1057, %v965, 0
      %v1122 = vsel %vm1057, %v966, 0
      %v1125 = vsel %vm1057, %v967, 0
      %v1128 = vsel %vm1057, %v968, 0
      %v1131 = vsel %vm1057, %v969, 0
      %v1134 = vsel %vm1057, %v970, 0
      %v1137 = vsel %vm1057, %v971, 0
      %v1140 = vsel %vm1057, %v972, 0
      %v1143 = vsel %vm1057, %v973, 0
      %v1146 = vsel %vm1057, %v974, 0
      %v1149 = vsel %vm1057, %v975, 0
      %v1152 = vsel %vm1057, %v976, 0
      %v1155 = vsel %vm1057, %v1041, 0
      %v1158 = vsel %vm1057, %v1042, 0
      %v1161 = vsel %vm1057, %v1043, 0
      %v1164 = vsel %vm1057, %v1044, 0
      %v1167 = vsel %vm1057, %v1045, 0
      %v1170 = vsel %vm1057, %v1046, 0
      %v1173 = vsel %vm1057, %v1047, 0
      %v1176 = vsel %vm1057, %v1048, 0
      %v1179 = vsel %vm1057, %v1049, 0
      %v1182 = vsel %vm1057, %v1050, 0
      %v1185 = vsel %vm1057, %v1051, 0
      %v1188 = vsel %vm1057, %v1052, 0
      %v1191 = vsel %vm1057, %v1053, 0
      %v1194 = vsel %vm1057, %v1054, 0
      %v1197 = vsel %vm1057, %v1055, 0
      %v1200 = vsel %vm1057, %v1056, 0
      %1202 = vmatprep.subr.bf16.mxu0 0
      %1203 = vmatpush1.bf16.xpose.msra.mxu0 %v1176
      %1204 = vmatprep.subr.bf16.mxu0 0
      %1205 = vmatpush1.bf16.xpose.msra.mxu0 %v1173
      %1206 = vmatprep.subr.bf16.mxu0 0
      %1207 = vmatpush1.bf16.xpose.msra.mxu0 %v1170
      %1208 = vmatprep.subr.bf16.mxu0 0
      %1209 = vmatpush1.bf16.xpose.msra.mxu0 %v1167
      %1210 = vmatprep.subr.bf16.mxu0 0
      %1211 = vmatpush1.bf16.xpose.msra.mxu0 %v1164
      %1212 = vmatprep.subr.bf16.mxu0 0
      %1213 = vmatpush1.bf16.xpose.msra.mxu0 %v1161
      %1214 = vmatprep.subr.bf16.mxu0 0
      %1215 = vmatpush1.bf16.xpose.msra.mxu0 %v1158
      %1216 = vmatprep.subr.bf16.mxu0 0
      %1217 = vmatpush1.bf16.xpose.msra.mxu0 %v1155
      %1218 = vmatprep.subr.bf16.mxu0 0
      %1219 = vmatpush2.bf16.xpose.msra.mxu0 %v1200
      %1220 = vmatprep.subr.bf16.mxu0 0
      %1221 = vmatpush2.bf16.xpose.msra.mxu0 %v1197
      %1222 = vmatprep.subr.bf16.mxu0 0
      %1223 = vmatpush2.bf16.xpose.msra.mxu0 %v1194
      %1224 = vmatprep.subr.bf16.mxu0 0
      %1225 = vmatpush2.bf16.xpose.msra.mxu0 %v1191
      %1226 = vmatprep.subr.bf16.mxu0 0
      %1227 = vmatpush2.bf16.xpose.msra.mxu0 %v1188
      %1228 = vmatprep.subr.bf16.mxu0 0
      %1229 = vmatpush2.bf16.xpose.msra.mxu0 %v1185
      %1230 = vmatprep.subr.bf16.mxu0 0
      %1231 = vmatpush2.bf16.xpose.msra.mxu0 %v1182
      %1232 = vmatprep.subr.bf16.mxu0 0
      %1233 = vmatpush2.bf16.xpose.msra.mxu0 %v1179
      %1234 = vmatprep.mubr.bf16.mxu0 0
      %1235 = vmatmul.mubr.bf16.gmra.mxu0 %v1059
      %v1236 = vpop.f32.mrf.mxu0
      %v1237 = vadd.f32 %v500, %v1236
      %v1238 = vpop.f32.mrf.mxu0
      %v1239 = vadd.f32 %v500, %v1238
      %v1240 = vpop.f32.mrf.mxu0
      %v1241 = vadd.f32 %v505, %v1240
      %v1242 = vpop.f32.mrf.mxu0
      %v1243 = vadd.f32 %v505, %v1242
      %1244 = vmatprep.mubr.bf16.mxu0 0
      %1245 = vmatmul.mubr.bf16.gmra.mxu0 %v1062
      %v1246 = vpop.f32.mrf.mxu0
      %v1247 = vadd.f32 %v510, %v1246
      %v1248 = vpop.f32.mrf.mxu0
      %v1249 = vadd.f32 %v510, %v1248
      %v1250 = vpop.f32.mrf.mxu0
      %v1251 = vadd.f32 %v515, %v1250
      %v1252 = vpop.f32.mrf.mxu0
      %v1253 = vadd.f32 %v515, %v1252
      %1254 = vmatprep.mubr.bf16.mxu0 0
      %1255 = vmatmul.mubr.bf16.gmra.mxu0 %v1065
      %v1256 = vpop.f32.mrf.mxu0
      %v1257 = vadd.f32 %v520, %v1256
      %v1258 = vpop.f32.mrf.mxu0
      %v1259 = vadd.f32 %v520, %v1258
      %v1260 = vpop.f32.mrf.mxu0
      %v1261 = vadd.f32 %v525, %v1260
      %v1262 = vpop.f32.mrf.mxu0
      %v1263 = vadd.f32 %v525, %v1262
      %1264 = vmatprep.mubr.bf16.mxu0 0
      %1265 = vmatmul.mubr.bf16.gmra.mxu0 %v1068
      %v1266 = vpop.f32.mrf.mxu0
      %v1267 = vadd.f32 %v530, %v1266
      %v1268 = vpop.f32.mrf.mxu0
      %v1269 = vadd.f32 %v530, %v1268
      %v1270 = vpop.f32.mrf.mxu0
      %v1271 = vadd.f32 %v535, %v1270
      %v1272 = vpop.f32.mrf.mxu0
      %v1273 = vadd.f32 %v535, %v1272
      %1274 = vmatprep.mubr.bf16.mxu0 0
      %1275 = vmatmul.mubr.bf16.gmra.mxu0 %v1071
      %v1276 = vpop.f32.mrf.mxu0
      %v1277 = vadd.f32 %v540, %v1276
      %v1278 = vpop.f32.mrf.mxu0
      %v1279 = vadd.f32 %v540, %v1278
      %v1280 = vpop.f32.mrf.mxu0
      %v1281 = vadd.f32 %v545, %v1280
      %v1282 = vpop.f32.mrf.mxu0
      %v1283 = vadd.f32 %v545, %v1282
      %1284 = vmatprep.mubr.bf16.mxu0 0
      %1285 = vmatmul.mubr.bf16.gmra.mxu0 %v1074
      %v1286 = vpop.f32.mrf.mxu0
      %v1287 = vadd.f32 %v550, %v1286
      %v1288 = vpop.f32.mrf.mxu0
      %v1289 = vadd.f32 %v550, %v1288
      %v1290 = vpop.f32.mrf.mxu0
      %v1291 = vadd.f32 %v555, %v1290
      %v1292 = vpop.f32.mrf.mxu0
      %v1293 = vadd.f32 %v555, %v1292
      %1294 = vmatprep.mubr.bf16.mxu0 0
      %1295 = vmatmul.mubr.bf16.gmra.mxu0 %v1077
      %v1296 = vpop.f32.mrf.mxu0
      %v1297 = vadd.f32 %v560, %v1296
      %v1298 = vpop.f32.mrf.mxu0
      %v1299 = vadd.f32 %v560, %v1298
      %v1300 = vpop.f32.mrf.mxu0
      %v1301 = vadd.f32 %v565, %v1300
      %v1302 = vpop.f32.mrf.mxu0
      %v1303 = vadd.f32 %v565, %v1302
      %1304 = vmatprep.mubr.bf16.mxu0 0
      %1305 = vmatmul.mubr.bf16.gmra.mxu0 %v1080
      %v1306 = vpop.f32.mrf.mxu0
      %v1307 = vadd.f32 %v570, %v1306
      %v1308 = vpop.f32.mrf.mxu0
      %v1309 = vadd.f32 %v570, %v1308
      %v1310 = vpop.f32.mrf.mxu0
      %v1311 = vadd.f32 %v575, %v1310
      %v1312 = vpop.f32.mrf.mxu0
      %v1313 = vadd.f32 %v575, %v1312
      %1314 = vmatprep.mubr.bf16.mxu0 0
      %1315 = vmatmul.mubr.bf16.gmra.mxu0 %v1083
      %v1316 = vpop.f32.mrf.mxu0
      %v1317 = vadd.f32 %v580, %v1316
      %v1318 = vpop.f32.mrf.mxu0
      %v1319 = vadd.f32 %v580, %v1318
      %v1320 = vpop.f32.mrf.mxu0
      %v1321 = vadd.f32 %v585, %v1320
      %v1322 = vpop.f32.mrf.mxu0
      %v1323 = vadd.f32 %v585, %v1322
      %1324 = vmatprep.mubr.bf16.mxu0 0
      %1325 = vmatmul.mubr.bf16.gmra.mxu0 %v1086
      %v1326 = vpop.f32.mrf.mxu0
      %v1327 = vadd.f32 %v590, %v1326
      %v1328 = vpop.f32.mrf.mxu0
      %v1329 = vadd.f32 %v590, %v1328
      %v1330 = vpop.f32.mrf.mxu0
      %v1331 = vadd.f32 %v595, %v1330
      %v1332 = vpop.f32.mrf.mxu0
      %v1333 = vadd.f32 %v595, %v1332
      %1334 = vmatprep.mubr.bf16.mxu0 0
      %1335 = vmatmul.mubr.bf16.gmra.mxu0 %v1089
      %v1336 = vpop.f32.mrf.mxu0
      %v1337 = vadd.f32 %v600, %v1336
      %v1338 = vpop.f32.mrf.mxu0
      %v1339 = vadd.f32 %v600, %v1338
      %v1340 = vpop.f32.mrf.mxu0
      %v1341 = vadd.f32 %v605, %v1340
      %v1342 = vpop.f32.mrf.mxu0
      %v1343 = vadd.f32 %v605, %v1342
      %1344 = vmatprep.mubr.bf16.mxu0 0
      %1345 = vmatmul.mubr.bf16.gmra.mxu0 %v1092
      %v1346 = vpop.f32.mrf.mxu0
      %v1347 = vadd.f32 %v610, %v1346
      %v1348 = vpop.f32.mrf.mxu0
      %v1349 = vadd.f32 %v610, %v1348
      %v1350 = vpop.f32.mrf.mxu0
      %v1351 = vadd.f32 %v615, %v1350
      %v1352 = vpop.f32.mrf.mxu0
      %v1353 = vadd.f32 %v615, %v1352
      %1354 = vmatprep.mubr.bf16.mxu0 0
      %1355 = vmatmul.mubr.bf16.gmra.mxu0 %v1095
      %v1356 = vpop.f32.mrf.mxu0
      %v1357 = vadd.f32 %v620, %v1356
      %v1358 = vpop.f32.mrf.mxu0
      %v1359 = vadd.f32 %v620, %v1358
      %v1360 = vpop.f32.mrf.mxu0
      %v1361 = vadd.f32 %v625, %v1360
      %v1362 = vpop.f32.mrf.mxu0
      %v1363 = vadd.f32 %v625, %v1362
      %1364 = vmatprep.mubr.bf16.mxu0 0
      %1365 = vmatmul.mubr.bf16.gmra.mxu0 %v1098
      %v1366 = vpop.f32.mrf.mxu0
      %v1367 = vadd.f32 %v630, %v1366
      %v1368 = vpop.f32.mrf.mxu0
      %v1369 = vadd.f32 %v630, %v1368
      %v1370 = vpop.f32.mrf.mxu0
      %v1371 = vadd.f32 %v635, %v1370
      %v1372 = vpop.f32.mrf.mxu0
      %v1373 = vadd.f32 %v635, %v1372
      %1374 = vmatprep.mubr.bf16.mxu0 0
      %1375 = vmatmul.mubr.bf16.gmra.mxu0 %v1101
      %v1376 = vpop.f32.mrf.mxu0
      %v1377 = vadd.f32 %v640, %v1376
      %v1378 = vpop.f32.mrf.mxu0
      %v1379 = vadd.f32 %v640, %v1378
      %v1380 = vpop.f32.mrf.mxu0
      %v1381 = vadd.f32 %v645, %v1380
      %v1382 = vpop.f32.mrf.mxu0
      %v1383 = vadd.f32 %v645, %v1382
      %1384 = vmatprep.mubr.bf16.mxu0 0
      %1385 = vmatmul.mubr.bf16.gmra.mxu0 %v1104
      %v1386 = vpop.f32.mrf.mxu0
      %v1387 = vadd.f32 %v650, %v1386
      %v1388 = vpop.f32.mrf.mxu0
      %v1389 = vadd.f32 %v650, %v1388
      %v1390 = vpop.f32.mrf.mxu0
      %v1391 = vadd.f32 %v655, %v1390
      %v1392 = vpop.f32.mrf.mxu0
      %v1393 = vadd.f32 %v655, %v1392
      %1394 = vmatprep.mubr.bf16.mxu0 0
      %1395 = vmatmul.mubr.bf16.gmra.mxu0 %v1107
      %v1396 = vpop.f32.mrf.mxu0
      %v1397 = vadd.f32 %v660, %v1396
      %v1398 = vpop.f32.mrf.mxu0
      %v1399 = vadd.f32 %v660, %v1398
      %v1400 = vpop.f32.mrf.mxu0
      %v1401 = vadd.f32 %v665, %v1400
      %v1402 = vpop.f32.mrf.mxu0
      %v1403 = vadd.f32 %v665, %v1402
      %1404 = vmatprep.mubr.bf16.mxu0 0
      %1405 = vmatmul.mubr.bf16.gmra.mxu0 %v1110
      %v1406 = vpop.f32.mrf.mxu0
      %v1407 = vadd.f32 %v670, %v1406
      %v1408 = vpop.f32.mrf.mxu0
      %v1409 = vadd.f32 %v670, %v1408
      %v1410 = vpop.f32.mrf.mxu0
      %v1411 = vadd.f32 %v675, %v1410
      %v1412 = vpop.f32.mrf.mxu0
      %v1413 = vadd.f32 %v675, %v1412
      %1414 = vmatprep.mubr.bf16.mxu0 0
      %1415 = vmatmul.mubr.bf16.gmra.mxu0 %v1113
      %v1416 = vpop.f32.mrf.mxu0
      %v1417 = vadd.f32 %v680, %v1416
      %v1418 = vpop.f32.mrf.mxu0
      %v1419 = vadd.f32 %v680, %v1418
      %v1420 = vpop.f32.mrf.mxu0
      %v1421 = vadd.f32 %v685, %v1420
      %v1422 = vpop.f32.mrf.mxu0
      %v1423 = vadd.f32 %v685, %v1422
      %1424 = vmatprep.mubr.bf16.mxu0 0
      %1425 = vmatmul.mubr.bf16.gmra.mxu0 %v1116
      %v1426 = vpop.f32.mrf.mxu0
      %v1427 = vadd.f32 %v690, %v1426
      %v1428 = vpop.f32.mrf.mxu0
      %v1429 = vadd.f32 %v690, %v1428
      %v1430 = vpop.f32.mrf.mxu0
      %v1431 = vadd.f32 %v695, %v1430
      %v1432 = vpop.f32.mrf.mxu0
      %v1433 = vadd.f32 %v695, %v1432
      %1434 = vmatprep.mubr.bf16.mxu0 0
      %1435 = vmatmul.mubr.bf16.gmra.mxu0 %v1119
      %v1436 = vpop.f32.mrf.mxu0
      %v1437 = vadd.f32 %v700, %v1436
      %v1438 = vpop.f32.mrf.mxu0
      %v1439 = vadd.f32 %v700, %v1438
      %v1440 = vpop.f32.mrf.mxu0
      %v1441 = vadd.f32 %v705, %v1440
      %v1442 = vpop.f32.mrf.mxu0
      %v1443 = vadd.f32 %v705, %v1442
      %1444 = vmatprep.mubr.bf16.mxu0 0
      %1445 = vmatmul.mubr.bf16.gmra.mxu0 %v1122
      %v1446 = vpop.f32.mrf.mxu0
      %v1447 = vadd.f32 %v710, %v1446
      %v1448 = vpop.f32.mrf.mxu0
      %v1449 = vadd.f32 %v710, %v1448
      %v1450 = vpop.f32.mrf.mxu0
      %v1451 = vadd.f32 %v715, %v1450
      %v1452 = vpop.f32.mrf.mxu0
      %v1453 = vadd.f32 %v715, %v1452
      %1454 = vmatprep.mubr.bf16.mxu0 0
      %1455 = vmatmul.mubr.bf16.gmra.mxu0 %v1125
      %v1456 = vpop.f32.mrf.mxu0
      %v1457 = vadd.f32 %v720, %v1456
      %v1458 = vpop.f32.mrf.mxu0
      %v1459 = vadd.f32 %v720, %v1458
      %v1460 = vpop.f32.mrf.mxu0
      %v1461 = vadd.f32 %v725, %v1460
      %v1462 = vpop.f32.mrf.mxu0
      %v1463 = vadd.f32 %v725, %v1462
      %1464 = vmatprep.mubr.bf16.mxu0 0
      %1465 = vmatmul.mubr.bf16.gmra.mxu0 %v1128
      %v1466 = vpop.f32.mrf.mxu0
      %v1467 = vadd.f32 %v730, %v1466
      %v1468 = vpop.f32.mrf.mxu0
      %v1469 = vadd.f32 %v730, %v1468
      %v1470 = vpop.f32.mrf.mxu0
      %v1471 = vadd.f32 %v735, %v1470
      %v1472 = vpop.f32.mrf.mxu0
      %v1473 = vadd.f32 %v735, %v1472
      %1474 = vmatprep.mubr.bf16.mxu0 0
      %1475 = vmatmul.mubr.bf16.gmra.mxu0 %v1131
      %v1476 = vpop.f32.mrf.mxu0
      %v1477 = vadd.f32 %v740, %v1476
      %v1478 = vpop.f32.mrf.mxu0
      %v1479 = vadd.f32 %v740, %v1478
      %v1480 = vpop.f32.mrf.mxu0
      %v1481 = vadd.f32 %v745, %v1480
      %v1482 = vpop.f32.mrf.mxu0
      %v1483 = vadd.f32 %v745, %v1482
      %1484 = vmatprep.mubr.bf16.mxu0 0
      %1485 = vmatmul.mubr.bf16.gmra.mxu0 %v1134
      %v1486 = vpop.f32.mrf.mxu0
      %v1487 = vadd.f32 %v750, %v1486
      %v1488 = vpop.f32.mrf.mxu0
      %v1489 = vadd.f32 %v750, %v1488
      %v1490 = vpop.f32.mrf.mxu0
      %v1491 = vadd.f32 %v755, %v1490
      %v1492 = vpop.f32.mrf.mxu0
      %v1493 = vadd.f32 %v755, %v1492
      %1494 = vmatprep.mubr.bf16.mxu0 0
      %1495 = vmatmul.mubr.bf16.gmra.mxu0 %v1137
      %v1496 = vpop.f32.mrf.mxu0
      %v1497 = vadd.f32 %v760, %v1496
      %v1498 = vpop.f32.mrf.mxu0
      %v1499 = vadd.f32 %v760, %v1498
      %v1500 = vpop.f32.mrf.mxu0
      %v1501 = vadd.f32 %v765, %v1500
      %v1502 = vpop.f32.mrf.mxu0
      %v1503 = vadd.f32 %v765, %v1502
      %1504 = vmatprep.mubr.bf16.mxu0 0
      %1505 = vmatmul.mubr.bf16.gmra.mxu0 %v1140
      %v1506 = vpop.f32.mrf.mxu0
      %v1507 = vadd.f32 %v770, %v1506
      %v1508 = vpop.f32.mrf.mxu0
      %v1509 = vadd.f32 %v770, %v1508
      %v1510 = vpop.f32.mrf.mxu0
      %v1511 = vadd.f32 %v775, %v1510
      %v1512 = vpop.f32.mrf.mxu0
      %v1513 = vadd.f32 %v775, %v1512
      %1514 = vmatprep.mubr.bf16.mxu0 0
      %1515 = vmatmul.mubr.bf16.gmra.mxu0 %v1143
      %v1516 = vpop.f32.mrf.mxu0
      %v1517 = vadd.f32 %v780, %v1516
      %v1518 = vpop.f32.mrf.mxu0
      %v1519 = vadd.f32 %v780, %v1518
      %v1520 = vpop.f32.mrf.mxu0
      %v1521 = vadd.f32 %v785, %v1520
      %v1522 = vpop.f32.mrf.mxu0
      %v1523 = vadd.f32 %v785, %v1522
      %1524 = vmatprep.mubr.bf16.mxu0 0
      %1525 = vmatmul.mubr.bf16.gmra.mxu0 %v1146
      %v1526 = vpop.f32.mrf.mxu0
      %v1527 = vadd.f32 %v790, %v1526
      %v1528 = vpop.f32.mrf.mxu0
      %v1529 = vadd.f32 %v790, %v1528
      %v1530 = vpop.f32.mrf.mxu0
      %v1531 = vadd.f32 %v795, %v1530
      %v1532 = vpop.f32.mrf.mxu0
      %v1533 = vadd.f32 %v795, %v1532
      %1534 = vmatprep.mubr.bf16.mxu0 0
      %1535 = vmatmul.mubr.bf16.gmra.mxu0 %v1149
      %v1536 = vpop.f32.mrf.mxu0
      %v1537 = vadd.f32 %v800, %v1536
      %v1538 = vpop.f32.mrf.mxu0
      %v1539 = vadd.f32 %v800, %v1538
      %v1540 = vpop.f32.mrf.mxu0
      %v1541 = vadd.f32 %v805, %v1540
      %v1542 = vpop.f32.mrf.mxu0
      %v1543 = vadd.f32 %v805, %v1542
      %1544 = vmatprep.mubr.bf16.mxu0 0
      %1545 = vmatmul.mubr.bf16.gmra.mxu0 %v1152
      %v1546 = vpop.f32.mrf.mxu0
      %v1547 = vadd.f32 %v810, %v1546
      %v1548 = vpop.f32.mrf.mxu0
      %v1549 = vadd.f32 %v810, %v1548
      %v1550 = vpop.f32.mrf.mxu0
      %v1551 = vadd.f32 %v815, %v1550
      %v1552 = vpop.f32.mrf.mxu0
      %v1553 = vadd.f32 %v815, %v1552
      %1554 = vdwg.mxu0
      %v1555 = vmul.f32 %v1237, 0.01
      %v1556 = vmul.f32 %v1239, 0.01
      %v1557 = vmul.f32 %v1241, 0.01
      %v1558 = vmul.f32 %v1243, 0.01
      %v1559 = vmul.f32 %v1247, 0.01
      %v1560 = vmul.f32 %v1249, 0.01
      %v1561 = vmul.f32 %v1251, 0.01
      %v1562 = vmul.f32 %v1253, 0.01
      %v1563 = vmul.f32 %v1257, 0.01
      %v1564 = vmul.f32 %v1259, 0.01
      %v1565 = vmul.f32 %v1261, 0.01
      %v1566 = vmul.f32 %v1263, 0.01
      %v1567 = vmul.f32 %v1267, 0.01
      %v1568 = vmul.f32 %v1269, 0.01
      %v1569 = vmul.f32 %v1271, 0.01
      %v1570 = vmul.f32 %v1273, 0.01
      %v1571 = vmul.f32 %v1277, 0.01
      %v1572 = vmul.f32 %v1279, 0.01
      %v1573 = vmul.f32 %v1281, 0.01
      %v1574 = vmul.f32 %v1283, 0.01
      %v1575 = vmul.f32 %v1287, 0.01
      %v1576 = vmul.f32 %v1289, 0.01
      %v1577 = vmul.f32 %v1291, 0.01
      %v1578 = vmul.f32 %v1293, 0.01
      %v1579 = vmul.f32 %v1297, 0.01
      %v1580 = vmul.f32 %v1299, 0.01
      %v1581 = vmul.f32 %v1301, 0.01
      %v1582 = vmul.f32 %v1303, 0.01
      %v1583 = vmul.f32 %v1307, 0.01
      %v1584 = vmul.f32 %v1309, 0.01
      %v1585 = vmul.f32 %v1311, 0.01
      %v1586 = vmul.f32 %v1313, 0.01
      %v1587 = vmul.f32 %v1317, 0.01
      %v1588 = vmul.f32 %v1319, 0.01
      %v1589 = vmul.f32 %v1321, 0.01
      %v1590 = vmul.f32 %v1323, 0.01
      %v1591 = vmul.f32 %v1327, 0.01
      %v1592 = vmul.f32 %v1329, 0.01
      %v1593 = vmul.f32 %v1331, 0.01
      %v1594 = vmul.f32 %v1333, 0.01
      %v1595 = vmul.f32 %v1337, 0.01
      %v1596 = vmul.f32 %v1339, 0.01
      %v1597 = vmul.f32 %v1341, 0.01
      %v1598 = vmul.f32 %v1343, 0.01
      %v1599 = vmul.f32 %v1347, 0.01
      %v1600 = vmul.f32 %v1349, 0.01
      %v1601 = vmul.f32 %v1351, 0.01
      %v1602 = vmul.f32 %v1353, 0.01
      %v1603 = vmul.f32 %v1357, 0.01
      %v1604 = vmul.f32 %v1359, 0.01
      %v1605 = vmul.f32 %v1361, 0.01
      %v1606 = vmul.f32 %v1363, 0.01
      %v1607 = vmul.f32 %v1367, 0.01
      %v1608 = vmul.f32 %v1369, 0.01
      %v1609 = vmul.f32 %v1371, 0.01
      %v1610 = vmul.f32 %v1373, 0.01
      %v1611 = vmul.f32 %v1377, 0.01
      %v1612 = vmul.f32 %v1379, 0.01
      %v1613 = vmul.f32 %v1381, 0.01
      %v1614 = vmul.f32 %v1383, 0.01
      %v1615 = vmul.f32 %v1387, 0.01
      %v1616 = vmul.f32 %v1389, 0.01
      %v1617 = vmul.f32 %v1391, 0.01
      %v1618 = vmul.f32 %v1393, 0.01
      %v1619 = vmul.f32 %v1397, 0.01
      %v1620 = vmul.f32 %v1399, 0.01
      %v1621 = vmul.f32 %v1401, 0.01
      %v1622 = vmul.f32 %v1403, 0.01
      %v1623 = vmul.f32 %v1407, 0.01
      %v1624 = vmul.f32 %v1409, 0.01
      %v1625 = vmul.f32 %v1411, 0.01
      %v1626 = vmul.f32 %v1413, 0.01
      %v1627 = vmul.f32 %v1417, 0.01
      %v1628 = vmul.f32 %v1419, 0.01
      %v1629 = vmul.f32 %v1421, 0.01
      %v1630 = vmul.f32 %v1423, 0.01
      %v1631 = vmul.f32 %v1427, 0.01
      %v1632 = vmul.f32 %v1429, 0.01
      %v1633 = vmul.f32 %v1431, 0.01
      %v1634 = vmul.f32 %v1433, 0.01
      %v1635 = vmul.f32 %v1437, 0.01
      %v1636 = vmul.f32 %v1439, 0.01
      %v1637 = vmul.f32 %v1441, 0.01
      %v1638 = vmul.f32 %v1443, 0.01
      %v1639 = vmul.f32 %v1447, 0.01
      %v1640 = vmul.f32 %v1449, 0.01
      %v1641 = vmul.f32 %v1451, 0.01
      %v1642 = vmul.f32 %v1453, 0.01
      %v1643 = vmul.f32 %v1457, 0.01
      %v1644 = vmul.f32 %v1459, 0.01
      %v1645 = vmul.f32 %v1461, 0.01
      %v1646 = vmul.f32 %v1463, 0.01
      %v1647 = vmul.f32 %v1467, 0.01
      %v1648 = vmul.f32 %v1469, 0.01
      %v1649 = vmul.f32 %v1471, 0.01
      %v1650 = vmul.f32 %v1473, 0.01
      %v1651 = vmul.f32 %v1477, 0.01
      %v1652 = vmul.f32 %v1479, 0.01
      %v1653 = vmul.f32 %v1481, 0.01
      %v1654 = vmul.f32 %v1483, 0.01
      %v1655 = vmul.f32 %v1487, 0.01
      %v1656 = vmul.f32 %v1489, 0.01
      %v1657 = vmul.f32 %v1491, 0.01
      %v1658 = vmul.f32 %v1493, 0.01
      %v1659 = vmul.f32 %v1497, 0.01
      %v1660 = vmul.f32 %v1499, 0.01
      %v1661 = vmul.f32 %v1501, 0.01
      %v1662 = vmul.f32 %v1503, 0.01
      %v1663 = vmul.f32 %v1507, 0.01
      %v1664 = vmul.f32 %v1509, 0.01
      %v1665 = vmul.f32 %v1511, 0.01
      %v1666 = vmul.f32 %v1513, 0.01
      %v1667 = vmul.f32 %v1517, 0.01
      %v1668 = vmul.f32 %v1519, 0.01
      %v1669 = vmul.f32 %v1521, 0.01
      %v1670 = vmul.f32 %v1523, 0.01
      %v1671 = vmul.f32 %v1527, 0.01
      %v1672 = vmul.f32 %v1529, 0.01
      %v1673 = vmul.f32 %v1531, 0.01
      %v1674 = vmul.f32 %v1533, 0.01
      %v1675 = vmul.f32 %v1537, 0.01
      %v1676 = vmul.f32 %v1539, 0.01
      %v1677 = vmul.f32 %v1541, 0.01
      %v1678 = vmul.f32 %v1543, 0.01
      %v1679 = vmul.f32 %v1547, 0.01
      %v1680 = vmul.f32 %v1549, 0.01
      %v1681 = vmul.f32 %v1551, 0.01
      %v1682 = vmul.f32 %v1553, 0.01
      %v1683 = vmax.f32 %v1237, %v1555
      %v1684 = vmax.f32 %v1239, %v1556
      %v1685 = vmax.f32 %v1241, %v1557
      %v1686 = vmax.f32 %v1243, %v1558
      %v1687 = vmax.f32 %v1247, %v1559
      %v1688 = vmax.f32 %v1249, %v1560
      %v1689 = vmax.f32 %v1251, %v1561
      %v1690 = vmax.f32 %v1253, %v1562
      %v1691 = vmax.f32 %v1257, %v1563
      %v1692 = vmax.f32 %v1259, %v1564
      %v1693 = vmax.f32 %v1261, %v1565
      %v1694 = vmax.f32 %v1263, %v1566
      %v1695 = vmax.f32 %v1267, %v1567
      %v1696 = vmax.f32 %v1269, %v1568
      %v1697 = vmax.f32 %v1271, %v1569
      %v1698 = vmax.f32 %v1273, %v1570
      %v1699 = vmax.f32 %v1277, %v1571
      %v1700 = vmax.f32 %v1279, %v1572
      %v1701 = vmax.f32 %v1281, %v1573
      %v1702 = vmax.f32 %v1283, %v1574
      %v1703 = vmax.f32 %v1287, %v1575
      %v1704 = vmax.f32 %v1289, %v1576
      %v1705 = vmax.f32 %v1291, %v1577
      %v1706 = vmax.f32 %v1293, %v1578
      %v1707 = vmax.f32 %v1297, %v1579
      %v1708 = vmax.f32 %v1299, %v1580
      %v1709 = vmax.f32 %v1301, %v1581
      %v1710 = vmax.f32 %v1303, %v1582
      %v1711 = vmax.f32 %v1307, %v1583
      %v1712 = vmax.f32 %v1309, %v1584
      %v1713 = vmax.f32 %v1311, %v1585
      %v1714 = vmax.f32 %v1313, %v1586
      %v1715 = vmax.f32 %v1317, %v1587
      %v1716 = vmax.f32 %v1319, %v1588
      %v1717 = vmax.f32 %v1321, %v1589
      %v1718 = vmax.f32 %v1323, %v1590
      %v1719 = vmax.f32 %v1327, %v1591
      %v1720 = vmax.f32 %v1329, %v1592
      %v1721 = vmax.f32 %v1331, %v1593
      %v1722 = vmax.f32 %v1333, %v1594
      %v1723 = vmax.f32 %v1337, %v1595
      %v1724 = vmax.f32 %v1339, %v1596
      %v1725 = vmax.f32 %v1341, %v1597
      %v1726 = vmax.f32 %v1343, %v1598
      %v1727 = vmax.f32 %v1347, %v1599
      %v1728 = vmax.f32 %v1349, %v1600
      %v1729 = vmax.f32 %v1351, %v1601
      %v1730 = vmax.f32 %v1353, %v1602
      %v1731 = vmax.f32 %v1357, %v1603
      %v1732 = vmax.f32 %v1359, %v1604
      %v1733 = vmax.f32 %v1361, %v1605
      %v1734 = vmax.f32 %v1363, %v1606
      %v1735 = vmax.f32 %v1367, %v1607
      %v1736 = vmax.f32 %v1369, %v1608
      %v1737 = vmax.f32 %v1371, %v1609
      %v1738 = vmax.f32 %v1373, %v1610
      %v1739 = vmax.f32 %v1377, %v1611
      %v1740 = vmax.f32 %v1379, %v1612
      %v1741 = vmax.f32 %v1381, %v1613
      %v1742 = vmax.f32 %v1383, %v1614
      %v1743 = vmax.f32 %v1387, %v1615
      %v1744 = vmax.f32 %v1389, %v1616
      %v1745 = vmax.f32 %v1391, %v1617
      %v1746 = vmax.f32 %v1393, %v1618
      %v1747 = vmax.f32 %v1397, %v1619
      %v1748 = vmax.f32 %v1399, %v1620
      %v1749 = vmax.f32 %v1401, %v1621
      %v1750 = vmax.f32 %v1403, %v1622
      %v1751 = vmax.f32 %v1407, %v1623
      %v1752 = vmax.f32 %v1409, %v1624
      %v1753 = vmax.f32 %v1411, %v1625
      %v1754 = vmax.f32 %v1413, %v1626
      %v1755 = vmax.f32 %v1417, %v1627
      %v1756 = vmax.f32 %v1419, %v1628
      %v1757 = vmax.f32 %v1421, %v1629
      %v1758 = vmax.f32 %v1423, %v1630
      %v1759 = vmax.f32 %v1427, %v1631
      %v1760 = vmax.f32 %v1429, %v1632
      %v1761 = vmax.f32 %v1431, %v1633
      %v1762 = vmax.f32 %v1433, %v1634
      %v1763 = vmax.f32 %v1437, %v1635
      %v1764 = vmax.f32 %v1439, %v1636
      %v1765 = vmax.f32 %v1441, %v1637
      %v1766 = vmax.f32 %v1443, %v1638
      %v1767 = vmax.f32 %v1447, %v1639
      %v1768 = vmax.f32 %v1449, %v1640
      %v1769 = vmax.f32 %v1451, %v1641
      %v1770 = vmax.f32 %v1453, %v1642
      %v1771 = vmax.f32 %v1457, %v1643
      %v1772 = vmax.f32 %v1459, %v1644
      %v1773 = vmax.f32 %v1461, %v1645
      %v1774 = vmax.f32 %v1463, %v1646
      %v1775 = vmax.f32 %v1467, %v1647
      %v1776 = vmax.f32 %v1469, %v1648
      %v1777 = vmax.f32 %v1471, %v1649
      %v1778 = vmax.f32 %v1473, %v1650
      %v1779 = vmax.f32 %v1477, %v1651
      %v1780 = vmax.f32 %v1479, %v1652
      %v1781 = vmax.f32 %v1481, %v1653
      %v1782 = vmax.f32 %v1483, %v1654
      %v1783 = vmax.f32 %v1487, %v1655
      %v1784 = vmax.f32 %v1489, %v1656
      %v1785 = vmax.f32 %v1491, %v1657
      %v1786 = vmax.f32 %v1493, %v1658
      %v1787 = vmax.f32 %v1497, %v1659
      %v1788 = vmax.f32 %v1499, %v1660
      %v1789 = vmax.f32 %v1501, %v1661
      %v1790 = vmax.f32 %v1503, %v1662
      %v1791 = vmax.f32 %v1507, %v1663
      %v1792 = vmax.f32 %v1509, %v1664
      %v1793 = vmax.f32 %v1511, %v1665
      %v1794 = vmax.f32 %v1513, %v1666
      %v1795 = vmax.f32 %v1517, %v1667
      %v1796 = vmax.f32 %v1519, %v1668
      %v1797 = vmax.f32 %v1521, %v1669
      %v1798 = vmax.f32 %v1523, %v1670
      %v1799 = vmax.f32 %v1527, %v1671
      %v1800 = vmax.f32 %v1529, %v1672
      %v1801 = vmax.f32 %v1531, %v1673
      %v1802 = vmax.f32 %v1533, %v1674
      %v1803 = vmax.f32 %v1537, %v1675
      %v1804 = vmax.f32 %v1539, %v1676
      %v1805 = vmax.f32 %v1541, %v1677
      %v1806 = vmax.f32 %v1543, %v1678
      %v1807 = vmax.f32 %v1547, %v1679
      %v1808 = vmax.f32 %v1549, %v1680
      %v1809 = vmax.f32 %v1551, %v1681
      %v1810 = vmax.f32 %v1553, %v1682
      %v1811 = vld [vmem:[%s3] sm:$0xff]
      %v1812 = vld [vmem:[%s3 + $0x8] sm:$0xff]
      %v1813 = vld [vmem:[%s3 + $0x10] sm:$0xff]
      %v1814 = vld [vmem:[%s3 + $0x18] sm:$0xff]
      %v1815 = vld [vmem:[%s3 + $0x20] sm:$0xff]
      %v1816 = vld [vmem:[%s3 + $0x28] sm:$0xff]
      %v1817 = vld [vmem:[%s3 + $0x30] sm:$0xff]
      %v1818 = vld [vmem:[%s3 + $0x38] sm:$0xff]
      %v1819 = vld [vmem:[%s3 + $0x40] sm:$0xff]
      %v1820 = vld [vmem:[%s3 + $0x48] sm:$0xff]
      %v1821 = vld [vmem:[%s3 + $0x50] sm:$0xff]
      %v1822 = vld [vmem:[%s3 + $0x58] sm:$0xff]
      %v1823 = vld [vmem:[%s3 + $0x60] sm:$0xff]
      %v1824 = vld [vmem:[%s3 + $0x68] sm:$0xff]
      %v1825 = vld [vmem:[%s3 + $0x70] sm:$0xff]
      %v1826 = vld [vmem:[%s3 + $0x78] sm:$0xff]
      %v1827 = vld [vmem:[%s3 + $0x80] sm:$0xff]
      %v1828 = vld [vmem:[%s3 + $0x88] sm:$0xff]
      %v1829 = vld [vmem:[%s3 + $0x90] sm:$0xff]
      %v1830 = vld [vmem:[%s3 + $0x98] sm:$0xff]
      %v1831 = vld [vmem:[%s3 + $0xa0] sm:$0xff]
      %v1832 = vld [vmem:[%s3 + $0xa8] sm:$0xff]
      %v1833 = vld [vmem:[%s3 + $0xb0] sm:$0xff]
      %v1834 = vld [vmem:[%s3 + $0xb8] sm:$0xff]
      %v1835 = vld [vmem:[%s3 + $0xc0] sm:$0xff]
      %v1836 = vld [vmem:[%s3 + $0xc8] sm:$0xff]
      %v1837 = vld [vmem:[%s3 + $0xd0] sm:$0xff]
      %v1838 = vld [vmem:[%s3 + $0xd8] sm:$0xff]
      %v1839 = vld [vmem:[%s3 + $0xe0] sm:$0xff]
      %v1840 = vld [vmem:[%s3 + $0xe8] sm:$0xff]
      %v1841 = vld [vmem:[%s3 + $0xf0] sm:$0xff]
      %v1842 = vld [vmem:[%s3 + $0xf8] sm:$0xff]
      %v1843 = vld [vmem:[%s3 + $0x100] sm:$0xff]
      %v1844 = vld [vmem:[%s3 + $0x108] sm:$0xff]
      %v1845 = vld [vmem:[%s3 + $0x110] sm:$0xff]
      %v1846 = vld [vmem:[%s3 + $0x118] sm:$0xff]
      %v1847 = vld [vmem:[%s3 + $0x120] sm:$0xff]
      %v1848 = vld [vmem:[%s3 + $0x128] sm:$0xff]
      %v1849 = vld [vmem:[%s3 + $0x130] sm:$0xff]
      %v1850 = vld [vmem:[%s3 + $0x138] sm:$0xff]
      %v1851 = vld [vmem:[%s3 + $0x140] sm:$0xff]
      %v1852 = vld [vmem:[%s3 + $0x148] sm:$0xff]
      %v1853 = vld [vmem:[%s3 + $0x150] sm:$0xff]
      %v1854 = vld [vmem:[%s3 + $0x158] sm:$0xff]
      %v1855 = vld [vmem:[%s3 + $0x160] sm:$0xff]
      %v1856 = vld [vmem:[%s3 + $0x168] sm:$0xff]
      %v1857 = vld [vmem:[%s3 + $0x170] sm:$0xff]
      %v1858 = vld [vmem:[%s3 + $0x178] sm:$0xff]
      %v1859 = vld [vmem:[%s3 + $0x180] sm:$0xff]
      %v1860 = vld [vmem:[%s3 + $0x188] sm:$0xff]
      %v1861 = vld [vmem:[%s3 + $0x190] sm:$0xff]
      %v1862 = vld [vmem:[%s3 + $0x198] sm:$0xff]
      %v1863 = vld [vmem:[%s3 + $0x1a0] sm:$0xff]
      %v1864 = vld [vmem:[%s3 + $0x1a8] sm:$0xff]
      %v1865 = vld [vmem:[%s3 + $0x1b0] sm:$0xff]
      %v1866 = vld [vmem:[%s3 + $0x1b8] sm:$0xff]
      %v1867 = vld [vmem:[%s3 + $0x1c0] sm:$0xff]
      %v1868 = vld [vmem:[%s3 + $0x1c8] sm:$0xff]
      %v1869 = vld [vmem:[%s3 + $0x1d0] sm:$0xff]
      %v1870 = vld [vmem:[%s3 + $0x1d8] sm:$0xff]
      %v1871 = vld [vmem:[%s3 + $0x1e0] sm:$0xff]
      %v1872 = vld [vmem:[%s3 + $0x1e8] sm:$0xff]
      %v1873 = vld [vmem:[%s3 + $0x1f0] sm:$0xff]
      %v1874 = vld [vmem:[%s3 + $0x1f8] sm:$0xff]
      %v1875 = vpack.c.bf16 %v1685, %v1683
      %v1876 = vpack.c.bf16 %v1686, %v1684
      %v1877 = vpack.c.bf16 %v1689, %v1687
      %v1878 = vpack.c.bf16 %v1690, %v1688
      %v1879 = vpack.c.bf16 %v1693, %v1691
      %v1880 = vpack.c.bf16 %v1694, %v1692
      %v1881 = vpack.c.bf16 %v1697, %v1695
      %v1882 = vpack.c.bf16 %v1698, %v1696
      %v1883 = vpack.c.bf16 %v1701, %v1699
      %v1884 = vpack.c.bf16 %v1702, %v1700
      %v1885 = vpack.c.bf16 %v1705, %v1703
      %v1886 = vpack.c.bf16 %v1706, %v1704
      %v1887 = vpack.c.bf16 %v1709, %v1707
      %v1888 = vpack.c.bf16 %v1710, %v1708
      %v1889 = vpack.c.bf16 %v1713, %v1711
      %v1890 = vpack.c.bf16 %v1714, %v1712
      %v1891 = vpack.c.bf16 %v1717, %v1715
      %v1892 = vpack.c.bf16 %v1718, %v1716
      %v1893 = vpack.c.bf16 %v1721, %v1719
      %v1894 = vpack.c.bf16 %v1722, %v1720
      %v1895 = vpack.c.bf16 %v1725, %v1723
      %v1896 = vpack.c.bf16 %v1726, %v1724
      %v1897 = vpack.c.bf16 %v1729, %v1727
      %v1898 = vpack.c.bf16 %v1730, %v1728
      %v1899 = vpack.c.bf16 %v1733, %v1731
      %v1900 = vpack.c.bf16 %v1734, %v1732
      %v1901 = vpack.c.bf16 %v1737, %v1735
      %v1902 = vpack.c.bf16 %v1738, %v1736
      %v1903 = vpack.c.bf16 %v1741, %v1739
      %v1904 = vpack.c.bf16 %v1742, %v1740
      %v1905 = vpack.c.bf16 %v1745, %v1743
      %v1906 = vpack.c.bf16 %v1746, %v1744
      %v1907 = vpack.c.bf16 %v1749, %v1747
      %v1908 = vpack.c.bf16 %v1750, %v1748
      %v1909 = vpack.c.bf16 %v1753, %v1751
      %v1910 = vpack.c.bf16 %v1754, %v1752
      %v1911 = vpack.c.bf16 %v1757, %v1755
      %v1912 = vpack.c.bf16 %v1758, %v1756
      %v1913 = vpack.c.bf16 %v1761, %v1759
      %v1914 = vpack.c.bf16 %v1762, %v1760
      %v1915 = vpack.c.bf16 %v1765, %v1763
      %v1916 = vpack.c.bf16 %v1766, %v1764
      %v1917 = vpack.c.bf16 %v1769, %v1767
      %v1918 = vpack.c.bf16 %v1770, %v1768
      %v1919 = vpack.c.bf16 %v1773, %v1771
      %v1920 = vpack.c.bf16 %v1774, %v1772
      %v1921 = vpack.c.bf16 %v1777, %v1775
      %v1922 = vpack.c.bf16 %v1778, %v1776
      %v1923 = vpack.c.bf16 %v1781, %v1779
      %v1924 = vpack.c.bf16 %v1782, %v1780
      %v1925 = vpack.c.bf16 %v1785, %v1783
      %v1926 = vpack.c.bf16 %v1786, %v1784
      %v1927 = vpack.c.bf16 %v1789, %v1787
      %v1928 = vpack.c.bf16 %v1790, %v1788
      %v1929 = vpack.c.bf16 %v1793, %v1791
      %v1930 = vpack.c.bf16 %v1794, %v1792
      %v1931 = vpack.c.bf16 %v1797, %v1795
      %v1932 = vpack.c.bf16 %v1798, %v1796
      %v1933 = vpack.c.bf16 %v1801, %v1799
      %v1934 = vpack.c.bf16 %v1802, %v1800
      %v1935 = vpack.c.bf16 %v1805, %v1803
      %v1936 = vpack.c.bf16 %v1806, %v1804
      %v1937 = vpack.c.bf16 %v1809, %v1807
      %v1938 = vpack.c.bf16 %v1810, %v1808
      %v1939 = vld [vmem:[%s4] sm:$0xff]
      %v1940 = vld [vmem:[%s4 + $0x8] sm:$0xff]
      %v1941 = vld [vmem:[%s4 + $0x10] sm:$0xff]
      %v1942 = vld [vmem:[%s4 + $0x18] sm:$0xff]
      %v1943 = vld [vmem:[%s4 + $0x20] sm:$0xff]
      %v1944 = vld [vmem:[%s4 + $0x28] sm:$0xff]
      %v1945 = vld [vmem:[%s4 + $0x30] sm:$0xff]
      %v1946 = vld [vmem:[%s4 + $0x38] sm:$0xff]
      %v1947 = vld [vmem:[%s4 + $0x40] sm:$0xff]
      %v1948 = vld [vmem:[%s4 + $0x48] sm:$0xff]
      %v1949 = vld [vmem:[%s4 + $0x50] sm:$0xff]
      %v1950 = vld [vmem:[%s4 + $0x58] sm:$0xff]
      %v1951 = vld [vmem:[%s4 + $0x60] sm:$0xff]
      %v1952 = vld [vmem:[%s4 + $0x68] sm:$0xff]
      %v1953 = vld [vmem:[%s4 + $0x70] sm:$0xff]
      %v1954 = vld [vmem:[%s4 + $0x78] sm:$0xff]
      %v1955 = vld [vmem:[%s4 + $0x80] sm:$0xff]
      %v1956 = vld [vmem:[%s4 + $0x88] sm:$0xff]
      %v1957 = vld [vmem:[%s4 + $0x90] sm:$0xff]
      %v1958 = vld [vmem:[%s4 + $0x98] sm:$0xff]
      %v1959 = vld [vmem:[%s4 + $0xa0] sm:$0xff]
      %v1960 = vld [vmem:[%s4 + $0xa8] sm:$0xff]
      %v1961 = vld [vmem:[%s4 + $0xb0] sm:$0xff]
      %v1962 = vld [vmem:[%s4 + $0xb8] sm:$0xff]
      %v1963 = vld [vmem:[%s4 + $0xc0] sm:$0xff]
      %v1964 = vld [vmem:[%s4 + $0xc8] sm:$0xff]
      %v1965 = vld [vmem:[%s4 + $0xd0] sm:$0xff]
      %v1966 = vld [vmem:[%s4 + $0xd8] sm:$0xff]
      %v1967 = vld [vmem:[%s4 + $0xe0] sm:$0xff]
      %v1968 = vld [vmem:[%s4 + $0xe8] sm:$0xff]
      %v1969 = vld [vmem:[%s4 + $0xf0] sm:$0xff]
      %v1970 = vld [vmem:[%s4 + $0xf8] sm:$0xff]
      %1972 = vset.pattern.permute.xlu0 0
      %1973 = vperm.xlu0 %1972, %v1939
      %v1974 = vpop.permute.xlu0 %1973
      %1977 = vset.pattern.permute.xlu0 0
      %1978 = vperm.xlu0 %1977, %v1940
      %v1979 = vpop.permute.xlu0 %1978
      %1982 = vset.pattern.permute.xlu0 0
      %1983 = vperm.xlu0 %1982, %v1941
      %v1984 = vpop.permute.xlu0 %1983
      %1987 = vset.pattern.permute.xlu0 0
      %1988 = vperm.xlu0 %1987, %v1942
      %v1989 = vpop.permute.xlu0 %1988
      %1992 = vset.pattern.permute.xlu0 0
      %1993 = vperm.xlu0 %1992, %v1943
      %v1994 = vpop.permute.xlu0 %1993
      %1997 = vset.pattern.permute.xlu0 0
      %1998 = vperm.xlu0 %1997, %v1944
      %v1999 = vpop.permute.xlu0 %1998
      %2002 = vset.pattern.permute.xlu0 0
      %2003 = vperm.xlu0 %2002, %v1945
      %v2004 = vpop.permute.xlu0 %2003
      %2007 = vset.pattern.permute.xlu0 0
      %2008 = vperm.xlu0 %2007, %v1946
      %v2009 = vpop.permute.xlu0 %2008
      %2012 = vset.pattern.permute.xlu0 0
      %2013 = vperm.xlu0 %2012, %v1947
      %v2014 = vpop.permute.xlu0 %2013
      %2017 = vset.pattern.permute.xlu0 0
      %2018 = vperm.xlu0 %2017, %v1948
      %v2019 = vpop.permute.xlu0 %2018
      %2022 = vset.pattern.permute.xlu0 0
      %2023 = vperm.xlu0 %2022, %v1949
      %v2024 = vpop.permute.xlu0 %2023
      %2027 = vset.pattern.permute.xlu0 0
      %2028 = vperm.xlu0 %2027, %v1950
      %v2029 = vpop.permute.xlu0 %2028
      %2032 = vset.pattern.permute.xlu0 0
      %2033 = vperm.xlu0 %2032, %v1951
      %v2034 = vpop.permute.xlu0 %2033
      %2037 = vset.pattern.permute.xlu0 0
      %2038 = vperm.xlu0 %2037, %v1952
      %v2039 = vpop.permute.xlu0 %2038
      %2042 = vset.pattern.permute.xlu0 0
      %2043 = vperm.xlu0 %2042, %v1953
      %v2044 = vpop.permute.xlu0 %2043
      %2047 = vset.pattern.permute.xlu0 0
      %2048 = vperm.xlu0 %2047, %v1954
      %v2049 = vpop.permute.xlu0 %2048
      %2052 = vset.pattern.permute.xlu0 0
      %2053 = vperm.xlu0 %2052, %v1955
      %v2054 = vpop.permute.xlu0 %2053
      %2057 = vset.pattern.permute.xlu0 0
      %2058 = vperm.xlu0 %2057, %v1956
      %v2059 = vpop.permute.xlu0 %2058
      %2062 = vset.pattern.permute.xlu0 0
      %2063 = vperm.xlu0 %2062, %v1957
      %v2064 = vpop.permute.xlu0 %2063
      %2067 = vset.pattern.permute.xlu0 0
      %2068 = vperm.xlu0 %2067, %v1958
      %v2069 = vpop.permute.xlu0 %2068
      %2072 = vset.pattern.permute.xlu0 0
      %2073 = vperm.xlu0 %2072, %v1959
      %v2074 = vpop.permute.xlu0 %2073
      %2077 = vset.pattern.permute.xlu0 0
      %2078 = vperm.xlu0 %2077, %v1960
      %v2079 = vpop.permute.xlu0 %2078
      %2082 = vset.pattern.permute.xlu0 0
      %2083 = vperm.xlu0 %2082, %v1961
      %v2084 = vpop.permute.xlu0 %2083
      %2087 = vset.pattern.permute.xlu0 0
      %2088 = vperm.xlu0 %2087, %v1962
      %v2089 = vpop.permute.xlu0 %2088
      %2092 = vset.pattern.permute.xlu0 0
      %2093 = vperm.xlu0 %2092, %v1963
      %v2094 = vpop.permute.xlu0 %2093
      %2097 = vset.pattern.permute.xlu0 0
      %2098 = vperm.xlu0 %2097, %v1964
      %v2099 = vpop.permute.xlu0 %2098
      %2102 = vset.pattern.permute.xlu0 0
      %2103 = vperm.xlu0 %2102, %v1965
      %v2104 = vpop.permute.xlu0 %2103
      %2107 = vset.pattern.permute.xlu0 0
      %2108 = vperm.xlu0 %2107, %v1966
      %v2109 = vpop.permute.xlu0 %2108
      %2112 = vset.pattern.permute.xlu0 0
      %2113 = vperm.xlu0 %2112, %v1967
      %v2114 = vpop.permute.xlu0 %2113
      %2117 = vset.pattern.permute.xlu0 0
      %2118 = vperm.xlu0 %2117, %v1968
      %v2119 = vpop.permute.xlu0 %2118
      %2122 = vset.pattern.permute.xlu0 0
      %2123 = vperm.xlu0 %2122, %v1969
      %v2124 = vpop.permute.xlu0 %2123
      %2127 = vset.pattern.permute.xlu0 0
      %2128 = vperm.xlu0 %2127, %v1970
      %v2129 = vpop.permute.xlu0 %2128
      %v2195 = vunpack.c.l.b16 %v1811
      %v2196 = vunpack.c.h.b16 %v1811
      %v2197 = vunpack.c.l.b16 %v1812
      %v2198 = vunpack.c.h.b16 %v1812
      %v2199 = vunpack.c.l.b16 %v1813
      %v2200 = vunpack.c.h.b16 %v1813
      %v2201 = vunpack.c.l.b16 %v1814
      %v2202 = vunpack.c.h.b16 %v1814
      %v2203 = vunpack.c.l.b16 %v1815
      %v2204 = vunpack.c.h.b16 %v1815
      %v2205 = vunpack.c.l.b16 %v1816
      %v2206 = vunpack.c.h.b16 %v1816
      %v2207 = vunpack.c.l.b16 %v1817
      %v2208 = vunpack.c.h.b16 %v1817
      %v2209 = vunpack.c.l.b16 %v1818
      %v2210 = vunpack.c.h.b16 %v1818
      %v2211 = vunpack.c.l.b16 %v1819
      %v2212 = vunpack.c.h.b16 %v1819
      %v2213 = vunpack.c.l.b16 %v1820
      %v2214 = vunpack.c.h.b16 %v1820
      %v2215 = vunpack.c.l.b16 %v1821
      %v2216 = vunpack.c.h.b16 %v1821
      %v2217 = vunpack.c.l.b16 %v1822
      %v2218 = vunpack.c.h.b16 %v1822
      %v2219 = vunpack.c.l.b16 %v1823
      %v2220 = vunpack.c.h.b16 %v1823
      %v2221 = vunpack.c.l.b16 %v1824
      %v2222 = vunpack.c.h.b16 %v1824
      %v2223 = vunpack.c.l.b16 %v1825
      %v2224 = vunpack.c.h.b16 %v1825
      %v2225 = vunpack.c.l.b16 %v1826
      %v2226 = vunpack.c.h.b16 %v1826
      %v2227 = vunpack.c.l.b16 %v1827
      %v2228 = vunpack.c.h.b16 %v1827
      %v2229 = vunpack.c.l.b16 %v1828
      %v2230 = vunpack.c.h.b16 %v1828
      %v2231 = vunpack.c.l.b16 %v1829
      %v2232 = vunpack.c.h.b16 %v1829
      %v2233 = vunpack.c.l.b16 %v1830
      %v2234 = vunpack.c.h.b16 %v1830
      %v2235 = vunpack.c.l.b16 %v1831
      %v2236 = vunpack.c.h.b16 %v1831
      %v2237 = vunpack.c.l.b16 %v1832
      %v2238 = vunpack.c.h.b16 %v1832
      %v2239 = vunpack.c.l.b16 %v1833
      %v2240 = vunpack.c.h.b16 %v1833
      %v2241 = vunpack.c.l.b16 %v1834
      %v2242 = vunpack.c.h.b16 %v1834
      %v2243 = vunpack.c.l.b16 %v1835
      %v2244 = vunpack.c.h.b16 %v1835
      %v2245 = vunpack.c.l.b16 %v1836
      %v2246 = vunpack.c.h.b16 %v1836
      %v2247 = vunpack.c.l.b16 %v1837
      %v2248 = vunpack.c.h.b16 %v1837
      %v2249 = vunpack.c.l.b16 %v1838
      %v2250 = vunpack.c.h.b16 %v1838
      %v2251 = vunpack.c.l.b16 %v1839
      %v2252 = vunpack.c.h.b16 %v1839
      %v2253 = vunpack.c.l.b16 %v1840
      %v2254 = vunpack.c.h.b16 %v1840
      %v2255 = vunpack.c.l.b16 %v1841
      %v2256 = vunpack.c.h.b16 %v1841
      %v2257 = vunpack.c.l.b16 %v1842
      %v2258 = vunpack.c.h.b16 %v1842
      %v2259 = vunpack.c.l.b16 %v1843
      %v2260 = vunpack.c.h.b16 %v1843
      %v2261 = vunpack.c.l.b16 %v1844
      %v2262 = vunpack.c.h.b16 %v1844
      %v2263 = vunpack.c.l.b16 %v1845
      %v2264 = vunpack.c.h.b16 %v1845
      %v2265 = vunpack.c.l.b16 %v1846
      %v2266 = vunpack.c.h.b16 %v1846
      %v2267 = vunpack.c.l.b16 %v1847
      %v2268 = vunpack.c.h.b16 %v1847
      %v2269 = vunpack.c.l.b16 %v1848
      %v2270 = vunpack.c.h.b16 %v1848
      %v2271 = vunpack.c.l.b16 %v1849
      %v2272 = vunpack.c.h.b16 %v1849
      %v2273 = vunpack.c.l.b16 %v1850
      %v2274 = vunpack.c.h.b16 %v1850
      %v2275 = vunpack.c.l.b16 %v1851
      %v2276 = vunpack.c.h.b16 %v1851
      %v2277 = vunpack.c.l.b16 %v1852
      %v2278 = vunpack.c.h.b16 %v1852
      %v2279 = vunpack.c.l.b16 %v1853
      %v2280 = vunpack.c.h.b16 %v1853
      %v2281 = vunpack.c.l.b16 %v1854
      %v2282 = vunpack.c.h.b16 %v1854
      %v2283 = vunpack.c.l.b16 %v1855
      %v2284 = vunpack.c.h.b16 %v1855
      %v2285 = vunpack.c.l.b16 %v1856
      %v2286 = vunpack.c.h.b16 %v1856
      %v2287 = vunpack.c.l.b16 %v1857
      %v2288 = vunpack.c.h.b16 %v1857
      %v2289 = vunpack.c.l.b16 %v1858
      %v2290 = vunpack.c.h.b16 %v1858
      %v2291 = vunpack.c.l.b16 %v1859
      %v2292 = vunpack.c.h.b16 %v1859
      %v2293 = vunpack.c.l.b16 %v1860
      %v2294 = vunpack.c.h.b16 %v1860
      %v2295 = vunpack.c.l.b16 %v1861
      %v2296 = vunpack.c.h.b16 %v1861
      %v2297 = vunpack.c.l.b16 %v1862
      %v2298 = vunpack.c.h.b16 %v1862
      %v2299 = vunpack.c.l.b16 %v1863
      %v2300 = vunpack.c.h.b16 %v1863
      %v2301 = vunpack.c.l.b16 %v1864
      %v2302 = vunpack.c.h.b16 %v1864
      %v2303 = vunpack.c.l.b16 %v1865
      %v2304 = vunpack.c.h.b16 %v1865
      %v2305 = vunpack.c.l.b16 %v1866
      %v2306 = vunpack.c.h.b16 %v1866
      %v2307 = vunpack.c.l.b16 %v1867
      %v2308 = vunpack.c.h.b16 %v1867
      %v2309 = vunpack.c.l.b16 %v1868
      %v2310 = vunpack.c.h.b16 %v1868
      %v2311 = vunpack.c.l.b16 %v1869
      %v2312 = vunpack.c.h.b16 %v1869
      %v2313 = vunpack.c.l.b16 %v1870
      %v2314 = vunpack.c.h.b16 %v1870
      %v2315 = vunpack.c.l.b16 %v1871
      %v2316 = vunpack.c.h.b16 %v1871
      %v2317 = vunpack.c.l.b16 %v1872
      %v2318 = vunpack.c.h.b16 %v1872
      %v2319 = vunpack.c.l.b16 %v1873
      %v2320 = vunpack.c.h.b16 %v1873
      %v2321 = vunpack.c.l.b16 %v1874
      %v2322 = vunpack.c.h.b16 %v1874
      %v2323 = vpack.c.b16 %v2199, %v2195
      %v2324 = vpack.c.b16 %v2200, %v2196
      %v2325 = vpack.c.b16 %v2201, %v2197
      %v2326 = vpack.c.b16 %v2202, %v2198
      %v2327 = vpack.c.b16 %v2207, %v2203
      %v2328 = vpack.c.b16 %v2208, %v2204
      %v2329 = vpack.c.b16 %v2209, %v2205
      %v2330 = vpack.c.b16 %v2210, %v2206
      %v2331 = vpack.c.b16 %v2215, %v2211
      %v2332 = vpack.c.b16 %v2216, %v2212
      %v2333 = vpack.c.b16 %v2217, %v2213
      %v2334 = vpack.c.b16 %v2218, %v2214
      %v2335 = vpack.c.b16 %v2223, %v2219
      %v2336 = vpack.c.b16 %v2224, %v2220
      %v2337 = vpack.c.b16 %v2225, %v2221
      %v2338 = vpack.c.b16 %v2226, %v2222
      %v2339 = vpack.c.b16 %v2231, %v2227
      %v2340 = vpack.c.b16 %v2232, %v2228
      %v2341 = vpack.c.b16 %v2233, %v2229
      %v2342 = vpack.c.b16 %v2234, %v2230
      %v2343 = vpack.c.b16 %v2239, %v2235
      %v2344 = vpack.c.b16 %v2240, %v2236
      %v2345 = vpack.c.b16 %v2241, %v2237
      %v2346 = vpack.c.b16 %v2242, %v2238
      %v2347 = vpack.c.b16 %v2247, %v2243
      %v2348 = vpack.c.b16 %v2248, %v2244
      %v2349 = vpack.c.b16 %v2249, %v2245
      %v2350 = vpack.c.b16 %v2250, %v2246
      %v2351 = vpack.c.b16 %v2255, %v2251
      %v2352 = vpack.c.b16 %v2256, %v2252
      %v2353 = vpack.c.b16 %v2257, %v2253
      %v2354 = vpack.c.b16 %v2258, %v2254
      %v2355 = vpack.c.b16 %v2263, %v2259
      %v2356 = vpack.c.b16 %v2264, %v2260
      %v2357 = vpack.c.b16 %v2265, %v2261
      %v2358 = vpack.c.b16 %v2266, %v2262
      %v2359 = vpack.c.b16 %v2271, %v2267
      %v2360 = vpack.c.b16 %v2272, %v2268
      %v2361 = vpack.c.b16 %v2273, %v2269
      %v2362 = vpack.c.b16 %v2274, %v2270
      %v2363 = vpack.c.b16 %v2279, %v2275
      %v2364 = vpack.c.b16 %v2280, %v2276
      %v2365 = vpack.c.b16 %v2281, %v2277
      %v2366 = vpack.c.b16 %v2282, %v2278
      %v2367 = vpack.c.b16 %v2287, %v2283
      %v2368 = vpack.c.b16 %v2288, %v2284
      %v2369 = vpack.c.b16 %v2289, %v2285
      %v2370 = vpack.c.b16 %v2290, %v2286
      %v2371 = vpack.c.b16 %v2295, %v2291
      %v2372 = vpack.c.b16 %v2296, %v2292
      %v2373 = vpack.c.b16 %v2297, %v2293
      %v2374 = vpack.c.b16 %v2298, %v2294
      %v2375 = vpack.c.b16 %v2303, %v2299
      %v2376 = vpack.c.b16 %v2304, %v2300
      %v2377 = vpack.c.b16 %v2305, %v2301
      %v2378 = vpack.c.b16 %v2306, %v2302
      %v2379 = vpack.c.b16 %v2311, %v2307
      %v2380 = vpack.c.b16 %v2312, %v2308
      %v2381 = vpack.c.b16 %v2313, %v2309
      %v2382 = vpack.c.b16 %v2314, %v2310
      %v2383 = vpack.c.b16 %v2319, %v2315
      %v2384 = vpack.c.b16 %v2320, %v2316
      %v2385 = vpack.c.b16 %v2321, %v2317
      %v2386 = vpack.c.b16 %v2322, %v2318
      %2451 = vmatprep.subr.bf16.mxu0 %v1890
      %2452 = vmatpush1.bf16.msra.mxu0 %v1889
      %2453 = vmatprep.subr.bf16.mxu0 %v1888
      %2454 = vmatpush1.bf16.msra.mxu0 %v1887
      %2455 = vmatprep.subr.bf16.mxu0 %v1886
      %2456 = vmatpush1.bf16.msra.mxu0 %v1885
      %2457 = vmatprep.subr.bf16.mxu0 %v1884
      %2458 = vmatpush1.bf16.msra.mxu0 %v1883
      %2459 = vmatprep.subr.bf16.mxu0 %v1882
      %2460 = vmatpush1.bf16.msra.mxu0 %v1881
      %2461 = vmatprep.subr.bf16.mxu0 %v1880
      %2462 = vmatpush1.bf16.msra.mxu0 %v1879
      %2463 = vmatprep.subr.bf16.mxu0 %v1878
      %2464 = vmatpush1.bf16.msra.mxu0 %v1877
      %2465 = vmatprep.subr.bf16.mxu0 %v1876
      %2466 = vmatpush1.bf16.msra.mxu0 %v1875
      %2467 = vmatprep.subr.bf16.mxu0 %v1906
      %2468 = vmatpush2.bf16.msra.mxu0 %v1905
      %2469 = vmatprep.subr.bf16.mxu0 %v1904
      %2470 = vmatpush2.bf16.msra.mxu0 %v1903
      %2471 = vmatprep.subr.bf16.mxu0 %v1902
      %2472 = vmatpush2.bf16.msra.mxu0 %v1901
      %2473 = vmatprep.subr.bf16.mxu0 %v1900
      %2474 = vmatpush2.bf16.msra.mxu0 %v1899
      %2475 = vmatprep.subr.bf16.mxu0 %v1898
      %2476 = vmatpush2.bf16.msra.mxu0 %v1897
      %2477 = vmatprep.subr.bf16.mxu0 %v1896
      %2478 = vmatpush2.bf16.msra.mxu0 %v1895
      %2479 = vmatprep.subr.bf16.mxu0 %v1894
      %2480 = vmatpush2.bf16.msra.mxu0 %v1893
      %2481 = vmatprep.subr.bf16.mxu0 %v1892
      %2482 = vmatpush2.bf16.msra.mxu0 %v1891
      %2483 = vmatprep.mubr.bf16.mxu0 %v2324
      %2484 = vmatmul.mubr.bf16.gmra.mxu0 %v2323
      %v2485 = vpop.f32.mrf.mxu0
      %v2486 = vadd.f32 %v1974, %v2485
      %v2487 = vpop.f32.mrf.mxu0
      %v2488 = vadd.f32 %v1974, %v2487
      %v2489 = vpop.f32.mrf.mxu0
      %v2490 = vadd.f32 %v1979, %v2489
      %v2491 = vpop.f32.mrf.mxu0
      %v2492 = vadd.f32 %v1979, %v2491
      %2493 = vmatprep.mubr.bf16.mxu0 %v2328
      %2494 = vmatmul.mubr.bf16.gmra.mxu0 %v2327
      %v2495 = vpop.f32.mrf.mxu0
      %v2496 = vadd.f32 %v1984, %v2495
      %v2497 = vpop.f32.mrf.mxu0
      %v2498 = vadd.f32 %v1984, %v2497
      %v2499 = vpop.f32.mrf.mxu0
      %v2500 = vadd.f32 %v1989, %v2499
      %v2501 = vpop.f32.mrf.mxu0
      %v2502 = vadd.f32 %v1989, %v2501
      %2503 = vmatprep.mubr.bf16.mxu0 %v2332
      %2504 = vmatmul.mubr.bf16.gmra.mxu0 %v2331
      %v2505 = vpop.f32.mrf.mxu0
      %v2506 = vadd.f32 %v1994, %v2505
      %v2507 = vpop.f32.mrf.mxu0
      %v2508 = vadd.f32 %v1994, %v2507
      %v2509 = vpop.f32.mrf.mxu0
      %v2510 = vadd.f32 %v1999, %v2509
      %v2511 = vpop.f32.mrf.mxu0
      %v2512 = vadd.f32 %v1999, %v2511
      %2513 = vmatprep.mubr.bf16.mxu0 %v2336
      %2514 = vmatmul.mubr.bf16.gmra.mxu0 %v2335
      %v2515 = vpop.f32.mrf.mxu0
      %v2516 = vadd.f32 %v2004, %v2515
      %v2517 = vpop.f32.mrf.mxu0
      %v2518 = vadd.f32 %v2004, %v2517
      %v2519 = vpop.f32.mrf.mxu0
      %v2520 = vadd.f32 %v2009, %v2519
      %v2521 = vpop.f32.mrf.mxu0
      %v2522 = vadd.f32 %v2009, %v2521
      %2523 = vmatprep.mubr.bf16.mxu0 %v2340
      %2524 = vmatmul.mubr.bf16.gmra.mxu0 %v2339
      %v2525 = vpop.f32.mrf.mxu0
      %v2526 = vadd.f32 %v2014, %v2525
      %v2527 = vpop.f32.mrf.mxu0
      %v2528 = vadd.f32 %v2014, %v2527
      %v2529 = vpop.f32.mrf.mxu0
      %v2530 = vadd.f32 %v2019, %v2529
      %v2531 = vpop.f32.mrf.mxu0
      %v2532 = vadd.f32 %v2019, %v2531
      %2533 = vmatprep.mubr.bf16.mxu0 %v2344
      %2534 = vmatmul.mubr.bf16.gmra.mxu0 %v2343
      %v2535 = vpop.f32.mrf.mxu0
      %v2536 = vadd.f32 %v2024, %v2535
      %v2537 = vpop.f32.mrf.mxu0
      %v2538 = vadd.f32 %v2024, %v2537
      %v2539 = vpop.f32.mrf.mxu0
      %v2540 = vadd.f32 %v2029, %v2539
      %v2541 = vpop.f32.mrf.mxu0
      %v2542 = vadd.f32 %v2029, %v2541
      %2543 = vmatprep.mubr.bf16.mxu0 %v2348
      %2544 = vmatmul.mubr.bf16.gmra.mxu0 %v2347
      %v2545 = vpop.f32.mrf.mxu0
      %v2546 = vadd.f32 %v2034, %v2545
      %v2547 = vpop.f32.mrf.mxu0
      %v2548 = vadd.f32 %v2034, %v2547
      %v2549 = vpop.f32.mrf.mxu0
      %v2550 = vadd.f32 %v2039, %v2549
      %v2551 = vpop.f32.mrf.mxu0
      %v2552 = vadd.f32 %v2039, %v2551
      %2553 = vmatprep.mubr.bf16.mxu0 %v2352
      %2554 = vmatmul.mubr.bf16.gmra.mxu0 %v2351
      %v2555 = vpop.f32.mrf.mxu0
      %v2556 = vadd.f32 %v2044, %v2555
      %v2557 = vpop.f32.mrf.mxu0
      %v2558 = vadd.f32 %v2044, %v2557
      %v2559 = vpop.f32.mrf.mxu0
      %v2560 = vadd.f32 %v2049, %v2559
      %v2561 = vpop.f32.mrf.mxu0
      %v2562 = vadd.f32 %v2049, %v2561
      %2563 = vmatprep.mubr.bf16.mxu0 %v2356
      %2564 = vmatmul.mubr.bf16.gmra.mxu0 %v2355
      %v2565 = vpop.f32.mrf.mxu0
      %v2566 = vadd.f32 %v2054, %v2565
      %v2567 = vpop.f32.mrf.mxu0
      %v2568 = vadd.f32 %v2054, %v2567
      %v2569 = vpop.f32.mrf.mxu0
      %v2570 = vadd.f32 %v2059, %v2569
      %v2571 = vpop.f32.mrf.mxu0
      %v2572 = vadd.f32 %v2059, %v2571
      %2573 = vmatprep.mubr.bf16.mxu0 %v2360
      %2574 = vmatmul.mubr.bf16.gmra.mxu0 %v2359
      %v2575 = vpop.f32.mrf.mxu0
      %v2576 = vadd.f32 %v2064, %v2575
      %v2577 = vpop.f32.mrf.mxu0
      %v2578 = vadd.f32 %v2064, %v2577
      %v2579 = vpop.f32.mrf.mxu0
      %v2580 = vadd.f32 %v2069, %v2579
      %v2581 = vpop.f32.mrf.mxu0
      %v2582 = vadd.f32 %v2069, %v2581
      %2583 = vmatprep.mubr.bf16.mxu0 %v2364
      %2584 = vmatmul.mubr.bf16.gmra.mxu0 %v2363
      %v2585 = vpop.f32.mrf.mxu0
      %v2586 = vadd.f32 %v2074, %v2585
      %v2587 = vpop.f32.mrf.mxu0
      %v2588 = vadd.f32 %v2074, %v2587
      %v2589 = vpop.f32.mrf.mxu0
      %v2590 = vadd.f32 %v2079, %v2589
      %v2591 = vpop.f32.mrf.mxu0
      %v2592 = vadd.f32 %v2079, %v2591
      %2593 = vmatprep.mubr.bf16.mxu0 %v2368
      %2594 = vmatmul.mubr.bf16.gmra.mxu0 %v2367
      %v2595 = vpop.f32.mrf.mxu0
      %v2596 = vadd.f32 %v2084, %v2595
      %v2597 = vpop.f32.mrf.mxu0
      %v2598 = vadd.f32 %v2084, %v2597
      %v2599 = vpop.f32.mrf.mxu0
      %v2600 = vadd.f32 %v2089, %v2599
      %v2601 = vpop.f32.mrf.mxu0
      %v2602 = vadd.f32 %v2089, %v2601
      %2603 = vmatprep.mubr.bf16.mxu0 %v2372
      %2604 = vmatmul.mubr.bf16.gmra.mxu0 %v2371
      %v2605 = vpop.f32.mrf.mxu0
      %v2606 = vadd.f32 %v2094, %v2605
      %v2607 = vpop.f32.mrf.mxu0
      %v2608 = vadd.f32 %v2094, %v2607
      %v2609 = vpop.f32.mrf.mxu0
      %v2610 = vadd.f32 %v2099, %v2609
      %v2611 = vpop.f32.mrf.mxu0
      %v2612 = vadd.f32 %v2099, %v2611
      %2613 = vmatprep.mubr.bf16.mxu0 %v2376
      %2614 = vmatmul.mubr.bf16.gmra.mxu0 %v2375
      %v2615 = vpop.f32.mrf.mxu0
      %v2616 = vadd.f32 %v2104, %v2615
      %v2617 = vpop.f32.mrf.mxu0
      %v2618 = vadd.f32 %v2104, %v2617
      %v2619 = vpop.f32.mrf.mxu0
      %v2620 = vadd.f32 %v2109, %v2619
      %v2621 = vpop.f32.mrf.mxu0
      %v2622 = vadd.f32 %v2109, %v2621
      %2623 = vmatprep.mubr.bf16.mxu0 %v2380
      %2624 = vmatmul.mubr.bf16.gmra.mxu0 %v2379
      %v2625 = vpop.f32.mrf.mxu0
      %v2626 = vadd.f32 %v2114, %v2625
      %v2627 = vpop.f32.mrf.mxu0
      %v2628 = vadd.f32 %v2114, %v2627
      %v2629 = vpop.f32.mrf.mxu0
      %v2630 = vadd.f32 %v2119, %v2629
      %v2631 = vpop.f32.mrf.mxu0
      %v2632 = vadd.f32 %v2119, %v2631
      %2633 = vmatprep.mubr.bf16.mxu0 %v2384
      %2634 = vmatmul.mubr.bf16.gmra.mxu0 %v2383
      %v2635 = vpop.f32.mrf.mxu0
      %v2636 = vadd.f32 %v2124, %v2635
      %v2637 = vpop.f32.mrf.mxu0
      %v2638 = vadd.f32 %v2124, %v2637
      %v2639 = vpop.f32.mrf.mxu0
      %v2640 = vadd.f32 %v2129, %v2639
      %v2641 = vpop.f32.mrf.mxu0
      %v2642 = vadd.f32 %v2129, %v2641
      %2643 = vdwg.mxu0
      %2644 = vmatprep.subr.bf16.mxu0 %v1922
      %2645 = vmatpush1.bf16.msra.mxu0 %v1921
      %2646 = vmatprep.subr.bf16.mxu0 %v1920
      %2647 = vmatpush1.bf16.msra.mxu0 %v1919
      %2648 = vmatprep.subr.bf16.mxu0 %v1918
      %2649 = vmatpush1.bf16.msra.mxu0 %v1917
      %2650 = vmatprep.subr.bf16.mxu0 %v1916
      %2651 = vmatpush1.bf16.msra.mxu0 %v1915
      %2652 = vmatprep.subr.bf16.mxu0 %v1914
      %2653 = vmatpush1.bf16.msra.mxu0 %v1913
      %2654 = vmatprep.subr.bf16.mxu0 %v1912
      %2655 = vmatpush1.bf16.msra.mxu0 %v1911
      %2656 = vmatprep.subr.bf16.mxu0 %v1910
      %2657 = vmatpush1.bf16.msra.mxu0 %v1909
      %2658 = vmatprep.subr.bf16.mxu0 %v1908
      %2659 = vmatpush1.bf16.msra.mxu0 %v1907
      %2660 = vmatprep.subr.bf16.mxu0 %v1938
      %2661 = vmatpush2.bf16.msra.mxu0 %v1937
      %2662 = vmatprep.subr.bf16.mxu0 %v1936
      %2663 = vmatpush2.bf16.msra.mxu0 %v1935
      %2664 = vmatprep.subr.bf16.mxu0 %v1934
      %2665 = vmatpush2.bf16.msra.mxu0 %v1933
      %2666 = vmatprep.subr.bf16.mxu0 %v1932
      %2667 = vmatpush2.bf16.msra.mxu0 %v1931
      %2668 = vmatprep.subr.bf16.mxu0 %v1930
      %2669 = vmatpush2.bf16.msra.mxu0 %v1929
      %2670 = vmatprep.subr.bf16.mxu0 %v1928
      %2671 = vmatpush2.bf16.msra.mxu0 %v1927
      %2672 = vmatprep.subr.bf16.mxu0 %v1926
      %2673 = vmatpush2.bf16.msra.mxu0 %v1925
      %2674 = vmatprep.subr.bf16.mxu0 %v1924
      %2675 = vmatpush2.bf16.msra.mxu0 %v1923
      %2676 = vmatprep.mubr.bf16.mxu0 %v2326
      %2677 = vmatmul.mubr.bf16.gmra.mxu0 %v2325
      %v2678 = vpop.f32.mrf.mxu0
      %v2679 = vadd.f32 %v2486, %v2678
      %v2680 = vpop.f32.mrf.mxu0
      %v2681 = vadd.f32 %v2488, %v2680
      %v2682 = vpop.f32.mrf.mxu0
      %v2683 = vadd.f32 %v2490, %v2682
      %v2684 = vpop.f32.mrf.mxu0
      %v2685 = vadd.f32 %v2492, %v2684
      %2686 = vmatprep.mubr.bf16.mxu0 %v2330
      %2687 = vmatmul.mubr.bf16.gmra.mxu0 %v2329
      %v2688 = vpop.f32.mrf.mxu0
      %v2689 = vadd.f32 %v2496, %v2688
      %v2690 = vpop.f32.mrf.mxu0
      %v2691 = vadd.f32 %v2498, %v2690
      %v2692 = vpop.f32.mrf.mxu0
      %v2693 = vadd.f32 %v2500, %v2692
      %v2694 = vpop.f32.mrf.mxu0
      %v2695 = vadd.f32 %v2502, %v2694
      %2696 = vmatprep.mubr.bf16.mxu0 %v2334
      %2697 = vmatmul.mubr.bf16.gmra.mxu0 %v2333
      %v2698 = vpop.f32.mrf.mxu0
      %v2699 = vadd.f32 %v2506, %v2698
      %v2700 = vpop.f32.mrf.mxu0
      %v2701 = vadd.f32 %v2508, %v2700
      %v2702 = vpop.f32.mrf.mxu0
      %v2703 = vadd.f32 %v2510, %v2702
      %v2704 = vpop.f32.mrf.mxu0
      %v2705 = vadd.f32 %v2512, %v2704
      %2706 = vmatprep.mubr.bf16.mxu0 %v2338
      %2707 = vmatmul.mubr.bf16.gmra.mxu0 %v2337
      %v2708 = vpop.f32.mrf.mxu0
      %v2709 = vadd.f32 %v2516, %v2708
      %v2710 = vpop.f32.mrf.mxu0
      %v2711 = vadd.f32 %v2518, %v2710
      %v2712 = vpop.f32.mrf.mxu0
      %v2713 = vadd.f32 %v2520, %v2712
      %v2714 = vpop.f32.mrf.mxu0
      %v2715 = vadd.f32 %v2522, %v2714
      %2716 = vmatprep.mubr.bf16.mxu0 %v2342
      %2717 = vmatmul.mubr.bf16.gmra.mxu0 %v2341
      %v2718 = vpop.f32.mrf.mxu0
      %v2719 = vadd.f32 %v2526, %v2718
      %v2720 = vpop.f32.mrf.mxu0
      %v2721 = vadd.f32 %v2528, %v2720
      %v2722 = vpop.f32.mrf.mxu0
      %v2723 = vadd.f32 %v2530, %v2722
      %v2724 = vpop.f32.mrf.mxu0
      %v2725 = vadd.f32 %v2532, %v2724
      %2726 = vmatprep.mubr.bf16.mxu0 %v2346
      %2727 = vmatmul.mubr.bf16.gmra.mxu0 %v2345
      %v2728 = vpop.f32.mrf.mxu0
      %v2729 = vadd.f32 %v2536, %v2728
      %v2730 = vpop.f32.mrf.mxu0
      %v2731 = vadd.f32 %v2538, %v2730
      %v2732 = vpop.f32.mrf.mxu0
      %v2733 = vadd.f32 %v2540, %v2732
      %v2734 = vpop.f32.mrf.mxu0
      %v2735 = vadd.f32 %v2542, %v2734
      %2736 = vmatprep.mubr.bf16.mxu0 %v2350
      %2737 = vmatmul.mubr.bf16.gmra.mxu0 %v2349
      %v2738 = vpop.f32.mrf.mxu0
      %v2739 = vadd.f32 %v2546, %v2738
      %v2740 = vpop.f32.mrf.mxu0
      %v2741 = vadd.f32 %v2548, %v2740
      %v2742 = vpop.f32.mrf.mxu0
      %v2743 = vadd.f32 %v2550, %v2742
      %v2744 = vpop.f32.mrf.mxu0
      %v2745 = vadd.f32 %v2552, %v2744
      %2746 = vmatprep.mubr.bf16.mxu0 %v2354
      %2747 = vmatmul.mubr.bf16.gmra.mxu0 %v2353
      %v2748 = vpop.f32.mrf.mxu0
      %v2749 = vadd.f32 %v2556, %v2748
      %v2750 = vpop.f32.mrf.mxu0
      %v2751 = vadd.f32 %v2558, %v2750
      %v2752 = vpop.f32.mrf.mxu0
      %v2753 = vadd.f32 %v2560, %v2752
      %v2754 = vpop.f32.mrf.mxu0
      %v2755 = vadd.f32 %v2562, %v2754
      %2756 = vmatprep.mubr.bf16.mxu0 %v2358
      %2757 = vmatmul.mubr.bf16.gmra.mxu0 %v2357
      %v2758 = vpop.f32.mrf.mxu0
      %v2759 = vadd.f32 %v2566, %v2758
      %v2760 = vpop.f32.mrf.mxu0
      %v2761 = vadd.f32 %v2568, %v2760
      %v2762 = vpop.f32.mrf.mxu0
      %v2763 = vadd.f32 %v2570, %v2762
      %v2764 = vpop.f32.mrf.mxu0
      %v2765 = vadd.f32 %v2572, %v2764
      %2766 = vmatprep.mubr.bf16.mxu0 %v2362
      %2767 = vmatmul.mubr.bf16.gmra.mxu0 %v2361
      %v2768 = vpop.f32.mrf.mxu0
      %v2769 = vadd.f32 %v2576, %v2768
      %v2770 = vpop.f32.mrf.mxu0
      %v2771 = vadd.f32 %v2578, %v2770
      %v2772 = vpop.f32.mrf.mxu0
      %v2773 = vadd.f32 %v2580, %v2772
      %v2774 = vpop.f32.mrf.mxu0
      %v2775 = vadd.f32 %v2582, %v2774
      %2776 = vmatprep.mubr.bf16.mxu0 %v2366
      %2777 = vmatmul.mubr.bf16.gmra.mxu0 %v2365
      %v2778 = vpop.f32.mrf.mxu0
      %v2779 = vadd.f32 %v2586, %v2778
      %v2780 = vpop.f32.mrf.mxu0
      %v2781 = vadd.f32 %v2588, %v2780
      %v2782 = vpop.f32.mrf.mxu0
      %v2783 = vadd.f32 %v2590, %v2782
      %v2784 = vpop.f32.mrf.mxu0
      %v2785 = vadd.f32 %v2592, %v2784
      %2786 = vmatprep.mubr.bf16.mxu0 %v2370
      %2787 = vmatmul.mubr.bf16.gmra.mxu0 %v2369
      %v2788 = vpop.f32.mrf.mxu0
      %v2789 = vadd.f32 %v2596, %v2788
      %v2790 = vpop.f32.mrf.mxu0
      %v2791 = vadd.f32 %v2598, %v2790
      %v2792 = vpop.f32.mrf.mxu0
      %v2793 = vadd.f32 %v2600, %v2792
      %v2794 = vpop.f32.mrf.mxu0
      %v2795 = vadd.f32 %v2602, %v2794
      %2796 = vmatprep.mubr.bf16.mxu0 %v2374
      %2797 = vmatmul.mubr.bf16.gmra.mxu0 %v2373
      %v2798 = vpop.f32.mrf.mxu0
      %v2799 = vadd.f32 %v2606, %v2798
      %v2800 = vpop.f32.mrf.mxu0
      %v2801 = vadd.f32 %v2608, %v2800
      %v2802 = vpop.f32.mrf.mxu0
      %v2803 = vadd.f32 %v2610, %v2802
      %v2804 = vpop.f32.mrf.mxu0
      %v2805 = vadd.f32 %v2612, %v2804
      %2806 = vmatprep.mubr.bf16.mxu0 %v2378
      %2807 = vmatmul.mubr.bf16.gmra.mxu0 %v2377
      %v2808 = vpop.f32.mrf.mxu0
      %v2809 = vadd.f32 %v2616, %v2808
      %v2810 = vpop.f32.mrf.mxu0
      %v2811 = vadd.f32 %v2618, %v2810
      %v2812 = vpop.f32.mrf.mxu0
      %v2813 = vadd.f32 %v2620, %v2812
      %v2814 = vpop.f32.mrf.mxu0
      %v2815 = vadd.f32 %v2622, %v2814
      %2816 = vmatprep.mubr.bf16.mxu0 %v2382
      %2817 = vmatmul.mubr.bf16.gmra.mxu0 %v2381
      %v2818 = vpop.f32.mrf.mxu0
      %v2819 = vadd.f32 %v2626, %v2818
      %v2820 = vpop.f32.mrf.mxu0
      %v2821 = vadd.f32 %v2628, %v2820
      %v2822 = vpop.f32.mrf.mxu0
      %v2823 = vadd.f32 %v2630, %v2822
      %v2824 = vpop.f32.mrf.mxu0
      %v2825 = vadd.f32 %v2632, %v2824
      %2826 = vmatprep.mubr.bf16.mxu0 %v2386
      %2827 = vmatmul.mubr.bf16.gmra.mxu0 %v2385
      %v2828 = vpop.f32.mrf.mxu0
      %v2829 = vadd.f32 %v2636, %v2828
      %v2830 = vpop.f32.mrf.mxu0
      %v2831 = vadd.f32 %v2638, %v2830
      %v2832 = vpop.f32.mrf.mxu0
      %v2833 = vadd.f32 %v2640, %v2832
      %v2834 = vpop.f32.mrf.mxu0
      %v2835 = vadd.f32 %v2642, %v2834
      %2836 = vdwg.mxu0
      %v2837 = vmul.f32 %v2679, 0.01
      %v2838 = vmul.f32 %v2681, 0.01
      %v2839 = vmul.f32 %v2683, 0.01
      %v2840 = vmul.f32 %v2685, 0.01
      %v2841 = vmul.f32 %v2689, 0.01
      %v2842 = vmul.f32 %v2691, 0.01
      %v2843 = vmul.f32 %v2693, 0.01
      %v2844 = vmul.f32 %v2695, 0.01
      %v2845 = vmul.f32 %v2699, 0.01
      %v2846 = vmul.f32 %v2701, 0.01
      %v2847 = vmul.f32 %v2703, 0.01
      %v2848 = vmul.f32 %v2705, 0.01
      %v2849 = vmul.f32 %v2709, 0.01
      %v2850 = vmul.f32 %v2711, 0.01
      %v2851 = vmul.f32 %v2713, 0.01
      %v2852 = vmul.f32 %v2715, 0.01
      %v2853 = vmul.f32 %v2719, 0.01
      %v2854 = vmul.f32 %v2721, 0.01
      %v2855 = vmul.f32 %v2723, 0.01
      %v2856 = vmul.f32 %v2725, 0.01
      %v2857 = vmul.f32 %v2729, 0.01
      %v2858 = vmul.f32 %v2731, 0.01
      %v2859 = vmul.f32 %v2733, 0.01
      %v2860 = vmul.f32 %v2735, 0.01
      %v2861 = vmul.f32 %v2739, 0.01
      %v2862 = vmul.f32 %v2741, 0.01
      %v2863 = vmul.f32 %v2743, 0.01
      %v2864 = vmul.f32 %v2745, 0.01
      %v2865 = vmul.f32 %v2749, 0.01
      %v2866 = vmul.f32 %v2751, 0.01
      %v2867 = vmul.f32 %v2753, 0.01
      %v2868 = vmul.f32 %v2755, 0.01
      %v2869 = vmul.f32 %v2759, 0.01
      %v2870 = vmul.f32 %v2761, 0.01
      %v2871 = vmul.f32 %v2763, 0.01
      %v2872 = vmul.f32 %v2765, 0.01
      %v2873 = vmul.f32 %v2769, 0.01
      %v2874 = vmul.f32 %v2771, 0.01
      %v2875 = vmul.f32 %v2773, 0.01
      %v2876 = vmul.f32 %v2775, 0.01
      %v2877 = vmul.f32 %v2779, 0.01
      %v2878 = vmul.f32 %v2781, 0.01
      %v2879 = vmul.f32 %v2783, 0.01
      %v2880 = vmul.f32 %v2785, 0.01
      %v2881 = vmul.f32 %v2789, 0.01
      %v2882 = vmul.f32 %v2791, 0.01
      %v2883 = vmul.f32 %v2793, 0.01
      %v2884 = vmul.f32 %v2795, 0.01
      %v2885 = vmul.f32 %v2799, 0.01
      %v2886 = vmul.f32 %v2801, 0.01
      %v2887 = vmul.f32 %v2803, 0.01
      %v2888 = vmul.f32 %v2805, 0.01
      %v2889 = vmul.f32 %v2809, 0.01
      %v2890 = vmul.f32 %v2811, 0.01
      %v2891 = vmul.f32 %v2813, 0.01
      %v2892 = vmul.f32 %v2815, 0.01
      %v2893 = vmul.f32 %v2819, 0.01
      %v2894 = vmul.f32 %v2821, 0.01
      %v2895 = vmul.f32 %v2823, 0.01
      %v2896 = vmul.f32 %v2825, 0.01
      %v2897 = vmul.f32 %v2829, 0.01
      %v2898 = vmul.f32 %v2831, 0.01
      %v2899 = vmul.f32 %v2833, 0.01
      %v2900 = vmul.f32 %v2835, 0.01
      %v2901 = vmax.f32 %v2679, %v2837
      %v2902 = vmax.f32 %v2681, %v2838
      %v2903 = vmax.f32 %v2683, %v2839
      %v2904 = vmax.f32 %v2685, %v2840
      %v2905 = vmax.f32 %v2689, %v2841
      %v2906 = vmax.f32 %v2691, %v2842
      %v2907 = vmax.f32 %v2693, %v2843
      %v2908 = vmax.f32 %v2695, %v2844
      %v2909 = vmax.f32 %v2699, %v2845
      %v2910 = vmax.f32 %v2701, %v2846
      %v2911 = vmax.f32 %v2703, %v2847
      %v2912 = vmax.f32 %v2705, %v2848
      %v2913 = vmax.f32 %v2709, %v2849
      %v2914 = vmax.f32 %v2711, %v2850
      %v2915 = vmax.f32 %v2713, %v2851
      %v2916 = vmax.f32 %v2715, %v2852
      %v2917 = vmax.f32 %v2719, %v2853
      %v2918 = vmax.f32 %v2721, %v2854
      %v2919 = vmax.f32 %v2723, %v2855
      %v2920 = vmax.f32 %v2725, %v2856
      %v2921 = vmax.f32 %v2729, %v2857
      %v2922 = vmax.f32 %v2731, %v2858
      %v2923 = vmax.f32 %v2733, %v2859
      %v2924 = vmax.f32 %v2735, %v2860
      %v2925 = vmax.f32 %v2739, %v2861
      %v2926 = vmax.f32 %v2741, %v2862
      %v2927 = vmax.f32 %v2743, %v2863
      %v2928 = vmax.f32 %v2745, %v2864
      %v2929 = vmax.f32 %v2749, %v2865
      %v2930 = vmax.f32 %v2751, %v2866
      %v2931 = vmax.f32 %v2753, %v2867
      %v2932 = vmax.f32 %v2755, %v2868
      %v2933 = vmax.f32 %v2759, %v2869
      %v2934 = vmax.f32 %v2761, %v2870
      %v2935 = vmax.f32 %v2763, %v2871
      %v2936 = vmax.f32 %v2765, %v2872
      %v2937 = vmax.f32 %v2769, %v2873
      %v2938 = vmax.f32 %v2771, %v2874
      %v2939 = vmax.f32 %v2773, %v2875
      %v2940 = vmax.f32 %v2775, %v2876
      %v2941 = vmax.f32 %v2779, %v2877
      %v2942 = vmax.f32 %v2781, %v2878
      %v2943 = vmax.f32 %v2783, %v2879
      %v2944 = vmax.f32 %v2785, %v2880
      %v2945 = vmax.f32 %v2789, %v2881
      %v2946 = vmax.f32 %v2791, %v2882
      %v2947 = vmax.f32 %v2793, %v2883
      %v2948 = vmax.f32 %v2795, %v2884
      %v2949 = vmax.f32 %v2799, %v2885
      %v2950 = vmax.f32 %v2801, %v2886
      %v2951 = vmax.f32 %v2803, %v2887
      %v2952 = vmax.f32 %v2805, %v2888
      %v2953 = vmax.f32 %v2809, %v2889
      %v2954 = vmax.f32 %v2811, %v2890
      %v2955 = vmax.f32 %v2813, %v2891
      %v2956 = vmax.f32 %v2815, %v2892
      %v2957 = vmax.f32 %v2819, %v2893
      %v2958 = vmax.f32 %v2821, %v2894
      %v2959 = vmax.f32 %v2823, %v2895
      %v2960 = vmax.f32 %v2825, %v2896
      %v2961 = vmax.f32 %v2829, %v2897
      %v2962 = vmax.f32 %v2831, %v2898
      %v2963 = vmax.f32 %v2833, %v2899
      %v2964 = vmax.f32 %v2835, %v2900
      %v2965 = vld [vmem:[%s5] sm:$0xff]
      %v2966 = vld [vmem:[%s5 + $0x8] sm:$0xff]
      %v2967 = vld [vmem:[%s5 + $0x10] sm:$0xff]
      %v2968 = vld [vmem:[%s5 + $0x18] sm:$0xff]
      %v2969 = vld [vmem:[%s5 + $0x20] sm:$0xff]
      %v2970 = vld [vmem:[%s5 + $0x28] sm:$0xff]
      %v2971 = vld [vmem:[%s5 + $0x30] sm:$0xff]
      %v2972 = vld [vmem:[%s5 + $0x38] sm:$0xff]
      %v2973 = vld [vmem:[%s5 + $0x40] sm:$0xff]
      %v2974 = vld [vmem:[%s5 + $0x48] sm:$0xff]
      %v2975 = vld [vmem:[%s5 + $0x50] sm:$0xff]
      %v2976 = vld [vmem:[%s5 + $0x58] sm:$0xff]
      %v2977 = vld [vmem:[%s5 + $0x60] sm:$0xff]
      %v2978 = vld [vmem:[%s5 + $0x68] sm:$0xff]
      %v2979 = vld [vmem:[%s5 + $0x70] sm:$0xff]
      %v2980 = vld [vmem:[%s5 + $0x78] sm:$0xff]
      %v2981 = vpack.c.bf16 %v2903, %v2901
      %v2982 = vpack.c.bf16 %v2904, %v2902
      %v2983 = vpack.c.bf16 %v2907, %v2905
      %v2984 = vpack.c.bf16 %v2908, %v2906
      %v2985 = vpack.c.bf16 %v2911, %v2909
      %v2986 = vpack.c.bf16 %v2912, %v2910
      %v2987 = vpack.c.bf16 %v2915, %v2913
      %v2988 = vpack.c.bf16 %v2916, %v2914
      %v2989 = vpack.c.bf16 %v2919, %v2917
      %v2990 = vpack.c.bf16 %v2920, %v2918
      %v2991 = vpack.c.bf16 %v2923, %v2921
      %v2992 = vpack.c.bf16 %v2924, %v2922
      %v2993 = vpack.c.bf16 %v2927, %v2925
      %v2994 = vpack.c.bf16 %v2928, %v2926
      %v2995 = vpack.c.bf16 %v2931, %v2929
      %v2996 = vpack.c.bf16 %v2932, %v2930
      %v2997 = vpack.c.bf16 %v2935, %v2933
      %v2998 = vpack.c.bf16 %v2936, %v2934
      %v2999 = vpack.c.bf16 %v2939, %v2937
      %v3000 = vpack.c.bf16 %v2940, %v2938
      %v3001 = vpack.c.bf16 %v2943, %v2941
      %v3002 = vpack.c.bf16 %v2944, %v2942
      %v3003 = vpack.c.bf16 %v2947, %v2945
      %v3004 = vpack.c.bf16 %v2948, %v2946
      %v3005 = vpack.c.bf16 %v2951, %v2949
      %v3006 = vpack.c.bf16 %v2952, %v2950
      %v3007 = vpack.c.bf16 %v2955, %v2953
      %v3008 = vpack.c.bf16 %v2956, %v2954
      %v3009 = vpack.c.bf16 %v2959, %v2957
      %v3010 = vpack.c.bf16 %v2960, %v2958
      %v3011 = vpack.c.bf16 %v2963, %v2961
      %v3012 = vpack.c.bf16 %v2964, %v2962
      %v3013 = vld [vmem:[%s6] sm:$0xff]
      %v3014 = vld [vmem:[%s6 + $0x8] sm:$0xff]
      %v3015 = vld [vmem:[%s6 + $0x10] sm:$0xff]
      %v3016 = vld [vmem:[%s6 + $0x18] sm:$0xff]
      %v3017 = vld [vmem:[%s6 + $0x20] sm:$0xff]
      %v3018 = vld [vmem:[%s6 + $0x28] sm:$0xff]
      %v3019 = vld [vmem:[%s6 + $0x30] sm:$0xff]
      %v3020 = vld [vmem:[%s6 + $0x38] sm:$0xff]
      %v3021 = vld [vmem:[%s6 + $0x40] sm:$0xff]
      %v3022 = vld [vmem:[%s6 + $0x48] sm:$0xff]
      %v3023 = vld [vmem:[%s6 + $0x50] sm:$0xff]
      %v3024 = vld [vmem:[%s6 + $0x58] sm:$0xff]
      %v3025 = vld [vmem:[%s6 + $0x60] sm:$0xff]
      %v3026 = vld [vmem:[%s6 + $0x68] sm:$0xff]
      %v3027 = vld [vmem:[%s6 + $0x70] sm:$0xff]
      %v3028 = vld [vmem:[%s6 + $0x78] sm:$0xff]
      %3030 = vset.pattern.permute.xlu0 0
      %3031 = vperm.xlu0 %3030, %v3013
      %v3032 = vpop.permute.xlu0 %3031
      %3035 = vset.pattern.permute.xlu0 0
      %3036 = vperm.xlu0 %3035, %v3014
      %v3037 = vpop.permute.xlu0 %3036
      %3040 = vset.pattern.permute.xlu0 0
      %3041 = vperm.xlu0 %3040, %v3015
      %v3042 = vpop.permute.xlu0 %3041
      %3045 = vset.pattern.permute.xlu0 0
      %3046 = vperm.xlu0 %3045, %v3016
      %v3047 = vpop.permute.xlu0 %3046
      %3050 = vset.pattern.permute.xlu0 0
      %3051 = vperm.xlu0 %3050, %v3017
      %v3052 = vpop.permute.xlu0 %3051
      %3055 = vset.pattern.permute.xlu0 0
      %3056 = vperm.xlu0 %3055, %v3018
      %v3057 = vpop.permute.xlu0 %3056
      %3060 = vset.pattern.permute.xlu0 0
      %3061 = vperm.xlu0 %3060, %v3019
      %v3062 = vpop.permute.xlu0 %3061
      %3065 = vset.pattern.permute.xlu0 0
      %3066 = vperm.xlu0 %3065, %v3020
      %v3067 = vpop.permute.xlu0 %3066
      %3070 = vset.pattern.permute.xlu0 0
      %3071 = vperm.xlu0 %3070, %v3021
      %v3072 = vpop.permute.xlu0 %3071
      %3075 = vset.pattern.permute.xlu0 0
      %3076 = vperm.xlu0 %3075, %v3022
      %v3077 = vpop.permute.xlu0 %3076
      %3080 = vset.pattern.permute.xlu0 0
      %3081 = vperm.xlu0 %3080, %v3023
      %v3082 = vpop.permute.xlu0 %3081
      %3085 = vset.pattern.permute.xlu0 0
      %3086 = vperm.xlu0 %3085, %v3024
      %v3087 = vpop.permute.xlu0 %3086
      %3090 = vset.pattern.permute.xlu0 0
      %3091 = vperm.xlu0 %3090, %v3025
      %v3092 = vpop.permute.xlu0 %3091
      %3095 = vset.pattern.permute.xlu0 0
      %3096 = vperm.xlu0 %3095, %v3026
      %v3097 = vpop.permute.xlu0 %3096
      %3100 = vset.pattern.permute.xlu0 0
      %3101 = vperm.xlu0 %3100, %v3027
      %v3102 = vpop.permute.xlu0 %3101
      %3105 = vset.pattern.permute.xlu0 0
      %3106 = vperm.xlu0 %3105, %v3028
      %v3107 = vpop.permute.xlu0 %3106
      %v3125 = vunpack.c.l.b16 %v2965
      %v3126 = vunpack.c.h.b16 %v2965
      %v3127 = vunpack.c.l.b16 %v2966
      %v3128 = vunpack.c.h.b16 %v2966
      %v3129 = vunpack.c.l.b16 %v2967
      %v3130 = vunpack.c.h.b16 %v2967
      %v3131 = vunpack.c.l.b16 %v2968
      %v3132 = vunpack.c.h.b16 %v2968
      %v3133 = vunpack.c.l.b16 %v2969
      %v3134 = vunpack.c.h.b16 %v2969
      %v3135 = vunpack.c.l.b16 %v2970
      %v3136 = vunpack.c.h.b16 %v2970
      %v3137 = vunpack.c.l.b16 %v2971
      %v3138 = vunpack.c.h.b16 %v2971
      %v3139 = vunpack.c.l.b16 %v2972
      %v3140 = vunpack.c.h.b16 %v2972
      %v3141 = vunpack.c.l.b16 %v2973
      %v3142 = vunpack.c.h.b16 %v2973
      %v3143 = vunpack.c.l.b16 %v2974
      %v3144 = vunpack.c.h.b16 %v2974
      %v3145 = vunpack.c.l.b16 %v2975
      %v3146 = vunpack.c.h.b16 %v2975
      %v3147 = vunpack.c.l.b16 %v2976
      %v3148 = vunpack.c.h.b16 %v2976
      %v3149 = vunpack.c.l.b16 %v2977
      %v3150 = vunpack.c.h.b16 %v2977
      %v3151 = vunpack.c.l.b16 %v2978
      %v3152 = vunpack.c.h.b16 %v2978
      %v3153 = vunpack.c.l.b16 %v2979
      %v3154 = vunpack.c.h.b16 %v2979
      %v3155 = vunpack.c.l.b16 %v2980
      %v3156 = vunpack.c.h.b16 %v2980
      %v3157 = vpack.c.b16 %v3127, %v3125
      %v3158 = vpack.c.b16 %v3128, %v3126
      %v3159 = vpack.c.b16 %v3131, %v3129
      %v3160 = vpack.c.b16 %v3132, %v3130
      %v3161 = vpack.c.b16 %v3135, %v3133
      %v3162 = vpack.c.b16 %v3136, %v3134
      %v3163 = vpack.c.b16 %v3139, %v3137
      %v3164 = vpack.c.b16 %v3140, %v3138
      %v3165 = vpack.c.b16 %v3143, %v3141
      %v3166 = vpack.c.b16 %v3144, %v3142
      %v3167 = vpack.c.b16 %v3147, %v3145
      %v3168 = vpack.c.b16 %v3148, %v3146
      %v3169 = vpack.c.b16 %v3151, %v3149
      %v3170 = vpack.c.b16 %v3152, %v3150
      %v3171 = vpack.c.b16 %v3155, %v3153
      %v3172 = vpack.c.b16 %v3156, %v3154
      %3189 = vmatprep.subr.bf16.mxu0 %v2996
      %3190 = vmatpush1.bf16.msra.mxu0 %v2995
      %3191 = vmatprep.subr.bf16.mxu0 %v2994
      %3192 = vmatpush1.bf16.msra.mxu0 %v2993
      %3193 = vmatprep.subr.bf16.mxu0 %v2992
      %3194 = vmatpush1.bf16.msra.mxu0 %v2991
      %3195 = vmatprep.subr.bf16.mxu0 %v2990
      %3196 = vmatpush1.bf16.msra.mxu0 %v2989
      %3197 = vmatprep.subr.bf16.mxu0 %v2988
      %3198 = vmatpush1.bf16.msra.mxu0 %v2987
      %3199 = vmatprep.subr.bf16.mxu0 %v2986
      %3200 = vmatpush1.bf16.msra.mxu0 %v2985
      %3201 = vmatprep.subr.bf16.mxu0 %v2984
      %3202 = vmatpush1.bf16.msra.mxu0 %v2983
      %3203 = vmatprep.subr.bf16.mxu0 %v2982
      %3204 = vmatpush1.bf16.msra.mxu0 %v2981
      %3205 = vmatprep.subr.bf16.mxu0 %v3012
      %3206 = vmatpush2.bf16.msra.mxu0 %v3011
      %3207 = vmatprep.subr.bf16.mxu0 %v3010
      %3208 = vmatpush2.bf16.msra.mxu0 %v3009
      %3209 = vmatprep.subr.bf16.mxu0 %v3008
      %3210 = vmatpush2.bf16.msra.mxu0 %v3007
      %3211 = vmatprep.subr.bf16.mxu0 %v3006
      %3212 = vmatpush2.bf16.msra.mxu0 %v3005
      %3213 = vmatprep.subr.bf16.mxu0 %v3004
      %3214 = vmatpush2.bf16.msra.mxu0 %v3003
      %3215 = vmatprep.subr.bf16.mxu0 %v3002
      %3216 = vmatpush2.bf16.msra.mxu0 %v3001
      %3217 = vmatprep.subr.bf16.mxu0 %v3000
      %3218 = vmatpush2.bf16.msra.mxu0 %v2999
      %3219 = vmatprep.subr.bf16.mxu0 %v2998
      %3220 = vmatpush2.bf16.msra.mxu0 %v2997
      %3221 = vmatprep.mubr.bf16.mxu0 %v3158
      %3222 = vmatmul.mubr.bf16.gmra.mxu0 %v3157
      %v3223 = vpop.f32.mrf.mxu0
      %v3224 = vadd.f32 %v3032, %v3223
      %v3225 = vpop.f32.mrf.mxu0
      %v3226 = vadd.f32 %v3032, %v3225
      %v3227 = vpop.f32.mrf.mxu0
      %v3228 = vadd.f32 %v3037, %v3227
      %v3229 = vpop.f32.mrf.mxu0
      %v3230 = vadd.f32 %v3037, %v3229
      %3231 = vmatprep.mubr.bf16.mxu0 %v3160
      %3232 = vmatmul.mubr.bf16.gmra.mxu0 %v3159
      %v3233 = vpop.f32.mrf.mxu0
      %v3234 = vadd.f32 %v3042, %v3233
      %v3235 = vpop.f32.mrf.mxu0
      %v3236 = vadd.f32 %v3042, %v3235
      %v3237 = vpop.f32.mrf.mxu0
      %v3238 = vadd.f32 %v3047, %v3237
      %v3239 = vpop.f32.mrf.mxu0
      %v3240 = vadd.f32 %v3047, %v3239
      %3241 = vmatprep.mubr.bf16.mxu0 %v3162
      %3242 = vmatmul.mubr.bf16.gmra.mxu0 %v3161
      %v3243 = vpop.f32.mrf.mxu0
      %v3244 = vadd.f32 %v3052, %v3243
      %v3245 = vpop.f32.mrf.mxu0
      %v3246 = vadd.f32 %v3052, %v3245
      %v3247 = vpop.f32.mrf.mxu0
      %v3248 = vadd.f32 %v3057, %v3247
      %v3249 = vpop.f32.mrf.mxu0
      %v3250 = vadd.f32 %v3057, %v3249
      %3251 = vmatprep.mubr.bf16.mxu0 %v3164
      %3252 = vmatmul.mubr.bf16.gmra.mxu0 %v3163
      %v3253 = vpop.f32.mrf.mxu0
      %v3254 = vadd.f32 %v3062, %v3253
      %v3255 = vpop.f32.mrf.mxu0
      %v3256 = vadd.f32 %v3062, %v3255
      %v3257 = vpop.f32.mrf.mxu0
      %v3258 = vadd.f32 %v3067, %v3257
      %v3259 = vpop.f32.mrf.mxu0
      %v3260 = vadd.f32 %v3067, %v3259
      %3261 = vmatprep.mubr.bf16.mxu0 %v3166
      %3262 = vmatmul.mubr.bf16.gmra.mxu0 %v3165
      %v3263 = vpop.f32.mrf.mxu0
      %v3264 = vadd.f32 %v3072, %v3263
      %v3265 = vpop.f32.mrf.mxu0
      %v3266 = vadd.f32 %v3072, %v3265
      %v3267 = vpop.f32.mrf.mxu0
      %v3268 = vadd.f32 %v3077, %v3267
      %v3269 = vpop.f32.mrf.mxu0
      %v3270 = vadd.f32 %v3077, %v3269
      %3271 = vmatprep.mubr.bf16.mxu0 %v3168
      %3272 = vmatmul.mubr.bf16.gmra.mxu0 %v3167
      %v3273 = vpop.f32.mrf.mxu0
      %v3274 = vadd.f32 %v3082, %v3273
      %v3275 = vpop.f32.mrf.mxu0
      %v3276 = vadd.f32 %v3082, %v3275
      %v3277 = vpop.f32.mrf.mxu0
      %v3278 = vadd.f32 %v3087, %v3277
      %v3279 = vpop.f32.mrf.mxu0
      %v3280 = vadd.f32 %v3087, %v3279
      %3281 = vmatprep.mubr.bf16.mxu0 %v3170
      %3282 = vmatmul.mubr.bf16.gmra.mxu0 %v3169
      %v3283 = vpop.f32.mrf.mxu0
      %v3284 = vadd.f32 %v3092, %v3283
      %v3285 = vpop.f32.mrf.mxu0
      %v3286 = vadd.f32 %v3092, %v3285
      %v3287 = vpop.f32.mrf.mxu0
      %v3288 = vadd.f32 %v3097, %v3287
      %v3289 = vpop.f32.mrf.mxu0
      %v3290 = vadd.f32 %v3097, %v3289
      %3291 = vmatprep.mubr.bf16.mxu0 %v3172
      %3292 = vmatmul.mubr.bf16.gmra.mxu0 %v3171
      %v3293 = vpop.f32.mrf.mxu0
      %v3294 = vadd.f32 %v3102, %v3293
      %v3295 = vpop.f32.mrf.mxu0
      %v3296 = vadd.f32 %v3102, %v3295
      %v3297 = vpop.f32.mrf.mxu0
      %v3298 = vadd.f32 %v3107, %v3297
      %v3299 = vpop.f32.mrf.mxu0
      %v3300 = vadd.f32 %v3107, %v3299
      %3301 = vdwg.mxu0
      %v3302 = vmul.f32 %v3224, 0.01
      %v3303 = vmul.f32 %v3226, 0.01
      %v3304 = vmul.f32 %v3228, 0.01
      %v3305 = vmul.f32 %v3230, 0.01
      %v3306 = vmul.f32 %v3234, 0.01
      %v3307 = vmul.f32 %v3236, 0.01
      %v3308 = vmul.f32 %v3238, 0.01
      %v3309 = vmul.f32 %v3240, 0.01
      %v3310 = vmul.f32 %v3244, 0.01
      %v3311 = vmul.f32 %v3246, 0.01
      %v3312 = vmul.f32 %v3248, 0.01
      %v3313 = vmul.f32 %v3250, 0.01
      %v3314 = vmul.f32 %v3254, 0.01
      %v3315 = vmul.f32 %v3256, 0.01
      %v3316 = vmul.f32 %v3258, 0.01
      %v3317 = vmul.f32 %v3260, 0.01
      %v3318 = vmul.f32 %v3264, 0.01
      %v3319 = vmul.f32 %v3266, 0.01
      %v3320 = vmul.f32 %v3268, 0.01
      %v3321 = vmul.f32 %v3270, 0.01
      %v3322 = vmul.f32 %v3274, 0.01
      %v3323 = vmul.f32 %v3276, 0.01
      %v3324 = vmul.f32 %v3278, 0.01
      %v3325 = vmul.f32 %v3280, 0.01
      %v3326 = vmul.f32 %v3284, 0.01
      %v3327 = vmul.f32 %v3286, 0.01
      %v3328 = vmul.f32 %v3288, 0.01
      %v3329 = vmul.f32 %v3290, 0.01
      %v3330 = vmul.f32 %v3294, 0.01
      %v3331 = vmul.f32 %v3296, 0.01
      %v3332 = vmul.f32 %v3298, 0.01
      %v3333 = vmul.f32 %v3300, 0.01
      %v3334 = vmax.f32 %v3224, %v3302
      %v3335 = vmax.f32 %v3226, %v3303
      %v3336 = vmax.f32 %v3228, %v3304
      %v3337 = vmax.f32 %v3230, %v3305
      %v3338 = vmax.f32 %v3234, %v3306
      %v3339 = vmax.f32 %v3236, %v3307
      %v3340 = vmax.f32 %v3238, %v3308
      %v3341 = vmax.f32 %v3240, %v3309
      %v3342 = vmax.f32 %v3244, %v3310
      %v3343 = vmax.f32 %v3246, %v3311
      %v3344 = vmax.f32 %v3248, %v3312
      %v3345 = vmax.f32 %v3250, %v3313
      %v3346 = vmax.f32 %v3254, %v3314
      %v3347 = vmax.f32 %v3256, %v3315
      %v3348 = vmax.f32 %v3258, %v3316
      %v3349 = vmax.f32 %v3260, %v3317
      %v3350 = vmax.f32 %v3264, %v3318
      %v3351 = vmax.f32 %v3266, %v3319
      %v3352 = vmax.f32 %v3268, %v3320
      %v3353 = vmax.f32 %v3270, %v3321
      %v3354 = vmax.f32 %v3274, %v3322
      %v3355 = vmax.f32 %v3276, %v3323
      %v3356 = vmax.f32 %v3278, %v3324
      %v3357 = vmax.f32 %v3280, %v3325
      %v3358 = vmax.f32 %v3284, %v3326
      %v3359 = vmax.f32 %v3286, %v3327
      %v3360 = vmax.f32 %v3288, %v3328
      %v3361 = vmax.f32 %v3290, %v3329
      %v3362 = vmax.f32 %v3294, %v3330
      %v3363 = vmax.f32 %v3296, %v3331
      %v3364 = vmax.f32 %v3298, %v3332
      %v3365 = vmax.f32 %v3300, %v3333
      %v3366 = vld [vmem:[%s7] sm:$0xff]
      %v3367 = vld [vmem:[%s7 + $0x8] sm:$0xff]
      %v3368 = vld [vmem:[%s7 + $0x10] sm:$0xff]
      %v3369 = vld [vmem:[%s7 + $0x18] sm:$0xff]
      %v3370 = vld [vmem:[%s7 + $0x20] sm:$0xff]
      %v3371 = vld [vmem:[%s7 + $0x28] sm:$0xff]
      %v3372 = vld [vmem:[%s7 + $0x30] sm:$0xff]
      %v3373 = vld [vmem:[%s7 + $0x38] sm:$0xff]
      %v3374 = vld [vmem:[%s7 + $0x40] sm:$0xff]
      %v3375 = vld [vmem:[%s7 + $0x48] sm:$0xff]
      %v3376 = vld [vmem:[%s7 + $0x50] sm:$0xff]
      %v3377 = vld [vmem:[%s7 + $0x58] sm:$0xff]
      %v3378 = vld [vmem:[%s7 + $0x60] sm:$0xff]
      %v3379 = vld [vmem:[%s7 + $0x68] sm:$0xff]
      %v3380 = vld [vmem:[%s7 + $0x70] sm:$0xff]
      %v3381 = vld [vmem:[%s7 + $0x78] sm:$0xff]
      %3383 = vset.pattern.permute.xlu0 0
      %3384 = vperm.xlu0 %3383, %v3366
      %v3385 = vpop.permute.xlu0 %3384
      %3388 = vset.pattern.permute.xlu0 0
      %3389 = vperm.xlu0 %3388, %v3367
      %v3390 = vpop.permute.xlu0 %3389
      %3393 = vset.pattern.permute.xlu0 0
      %3394 = vperm.xlu0 %3393, %v3368
      %v3395 = vpop.permute.xlu0 %3394
      %3398 = vset.pattern.permute.xlu0 0
      %3399 = vperm.xlu0 %3398, %v3369
      %v3400 = vpop.permute.xlu0 %3399
      %3403 = vset.pattern.permute.xlu0 0
      %3404 = vperm.xlu0 %3403, %v3370
      %v3405 = vpop.permute.xlu0 %3404
      %3408 = vset.pattern.permute.xlu0 0
      %3409 = vperm.xlu0 %3408, %v3371
      %v3410 = vpop.permute.xlu0 %3409
      %3413 = vset.pattern.permute.xlu0 0
      %3414 = vperm.xlu0 %3413, %v3372
      %v3415 = vpop.permute.xlu0 %3414
      %3418 = vset.pattern.permute.xlu0 0
      %3419 = vperm.xlu0 %3418, %v3373
      %v3420 = vpop.permute.xlu0 %3419
      %3423 = vset.pattern.permute.xlu0 0
      %3424 = vperm.xlu0 %3423, %v3374
      %v3425 = vpop.permute.xlu0 %3424
      %3428 = vset.pattern.permute.xlu0 0
      %3429 = vperm.xlu0 %3428, %v3375
      %v3430 = vpop.permute.xlu0 %3429
      %3433 = vset.pattern.permute.xlu0 0
      %3434 = vperm.xlu0 %3433, %v3376
      %v3435 = vpop.permute.xlu0 %3434
      %3438 = vset.pattern.permute.xlu0 0
      %3439 = vperm.xlu0 %3438, %v3377
      %v3440 = vpop.permute.xlu0 %3439
      %3443 = vset.pattern.permute.xlu0 0
      %3444 = vperm.xlu0 %3443, %v3378
      %v3445 = vpop.permute.xlu0 %3444
      %3448 = vset.pattern.permute.xlu0 0
      %3449 = vperm.xlu0 %3448, %v3379
      %v3450 = vpop.permute.xlu0 %3449
      %3453 = vset.pattern.permute.xlu0 0
      %3454 = vperm.xlu0 %3453, %v3380
      %v3455 = vpop.permute.xlu0 %3454
      %3458 = vset.pattern.permute.xlu0 0
      %3459 = vperm.xlu0 %3458, %v3381
      %v3460 = vpop.permute.xlu0 %3459
      %v3462 = vmul.f32 %v3334, %v3385
      %v3463 = vmul.f32 %v3335, %v3385
      %v3464 = vmul.f32 %v3336, %v3390
      %v3465 = vmul.f32 %v3337, %v3390
      %v3466 = vmul.f32 %v3338, %v3395
      %v3467 = vmul.f32 %v3339, %v3395
      %v3468 = vmul.f32 %v3340, %v3400
      %v3469 = vmul.f32 %v3341, %v3400
      %v3470 = vmul.f32 %v3342, %v3405
      %v3471 = vmul.f32 %v3343, %v3405
      %v3472 = vmul.f32 %v3344, %v3410
      %v3473 = vmul.f32 %v3345, %v3410
      %v3474 = vmul.f32 %v3346, %v3415
      %v3475 = vmul.f32 %v3347, %v3415
      %v3476 = vmul.f32 %v3348, %v3420
      %v3477 = vmul.f32 %v3349, %v3420
      %v3478 = vmul.f32 %v3350, %v3425
      %v3479 = vmul.f32 %v3351, %v3425
      %v3480 = vmul.f32 %v3352, %v3430
      %v3481 = vmul.f32 %v3353, %v3430
      %v3482 = vmul.f32 %v3354, %v3435
      %v3483 = vmul.f32 %v3355, %v3435
      %v3484 = vmul.f32 %v3356, %v3440
      %v3485 = vmul.f32 %v3357, %v3440
      %v3486 = vmul.f32 %v3358, %v3445
      %v3487 = vmul.f32 %v3359, %v3445
      %v3488 = vmul.f32 %v3360, %v3450
      %v3489 = vmul.f32 %v3361, %v3450
      %v3490 = vmul.f32 %v3362, %v3455
      %v3491 = vmul.f32 %v3363, %v3455
      %v3492 = vmul.f32 %v3364, %v3460
      %v3493 = vmul.f32 %v3365, %v3460
      %v3494 = vadd.f32 %v3462, %v3464
      %v3495 = vadd.f32 %v3494, %v3466
      %v3496 = vadd.f32 %v3495, %v3468
      %v3497 = vadd.f32 %v3496, %v3470
      %v3498 = vadd.f32 %v3497, %v3472
      %v3499 = vadd.f32 %v3498, %v3474
      %v3500 = vadd.f32 %v3499, %v3476
      %v3501 = vadd.f32 %v3500, %v3478
      %v3502 = vadd.f32 %v3501, %v3480
      %v3503 = vadd.f32 %v3502, %v3482
      %v3504 = vadd.f32 %v3503, %v3484
      %v3505 = vadd.f32 %v3504, %v3486
      %v3506 = vadd.f32 %v3505, %v3488
      %v3507 = vadd.f32 %v3506, %v3490
      %v3508 = vadd.f32 %v3507, %v3492
      %v3509 = vrot.slane %v3508, 4
      %v3510 = vadd.f32 %v3508, %v3509
      %v3511 = vrot.slane %v3510, 2
      %v3512 = vadd.f32 %v3510, %v3511
      %v3513 = vrot.slane %v3512, 1
      %v3514 = vadd.f32 %v3512, %v3513
      %v3515 = vadd.f32 %v3463, %v3465
      %v3516 = vadd.f32 %v3515, %v3467
      %v3517 = vadd.f32 %v3516, %v3469
      %v3518 = vadd.f32 %v3517, %v3471
      %v3519 = vadd.f32 %v3518, %v3473
      %v3520 = vadd.f32 %v3519, %v3475
      %v3521 = vadd.f32 %v3520, %v3477
      %v3522 = vadd.f32 %v3521, %v3479
      %v3523 = vadd.f32 %v3522, %v3481
      %v3524 = vadd.f32 %v3523, %v3483
      %v3525 = vadd.f32 %v3524, %v3485
      %v3526 = vadd.f32 %v3525, %v3487
      %v3527 = vadd.f32 %v3526, %v3489
      %v3528 = vadd.f32 %v3527, %v3491
      %v3529 = vadd.f32 %v3528, %v3493
      %v3530 = vrot.slane %v3529, 4
      %v3531 = vadd.f32 %v3529, %v3530
      %v3532 = vrot.slane %v3531, 2
      %v3533 = vadd.f32 %v3531, %v3532
      %v3534 = vrot.slane %v3533, 1
      %v3535 = vadd.f32 %v3533, %v3534
      %v3536 = vld [vmem:[#allocation2] sm:$0x1]
      %3538 = vset.pattern.permute.xlu0 0
      %3539 = vperm.xlu0 %3538, %v3536
      %v3540 = vpop.permute.xlu0 %3539
      %v3542 = vlaneseq
      %v3543 = vshrl.u32 %v3542, 7
      %v3544 = vsub.s32 0, %v3543
      %v3545 = vrot.slane %v3540, %v3544
      %v3546 = vadd.f32 %v3514, %v3545
      %v3547 = vadd.f32 %v3535, %v3545
      %v3548 = vsub.f32 0.0, %v3546
      %v3549 = vsub.f32 0.0, %v3547
      %v3550 = vmul.f32 %v3548, 1.442695
      %v3551 = vpow.pop %v3550
      %v3552 = vmul.f32 %v3549, 1.442695
      %v3553 = vpow.pop %v3552
      %v3554 = vadd.f32 %v3551, 1.0
      %v3555 = vadd.f32 %v3553, 1.0
      %v3556 = vrcp.pop %v3554
      %v3557 = vmul.f32 1.0, %v3556
      %v3558 = vrcp.pop %v3555
      %v3559 = vmul.f32 1.0, %v3558
      %v3562 = vcombine.low %v3557, %v3559
      %v3564 = vunpack.c.l.s4 1966171168
      %v3565 = vunpack.c.0.s8 %v3564
      %v3566 = vlaneseq
      %v3567 = vshrl.u32 %v3566, 7
      %v3568 = vsub.s32 %v3565, %v3567
      %v3569 = vrot.slane %v3562, %v3568
      %v3571 = vunpack.c.l.s4 1966171168
      %v3572 = vunpack.c.0.s8 %v3571
      %v3573 = vlaneseq
      %v3574 = vshrl.u32 %v3573, 7
      %v3575 = vsub.s32 %v3572, %v3574
      %v3576 = vrot.slane %v3569, %v3575
      %v3578 = vlaneseq
      %vm3579 = vcmp.ge.s32.totalorder %v3578, 0
      %vm3580 = vcmp.lt.s32.totalorder %v3578, 256
      %vm3581 = vmand %vm3579, %vm3580
      %3582 = vst.msk [vmem:[%s334] sm:$0x3] %vm3581, %v3576
      %s3583 = smul.u32 2, %s22
      %p3584 = scmp.lt.s32.totalorder %s3583, 3
      %s3585 = scalar_select %p3584, %s3583, 3
      %s3586 = scalar_lea.vmem %s9, %s3585
      // Predicated region
      $region57: #{attacker_model_forward.1} parent=55 // pred_check
        %p3587 = pneg %p234
      $region58: #{attacker_model_forward.1} parent=55 // pred_check_branch
        %3589 = sbr.rel (%p3587) target = $region60
      $region59: #{attacker_model_forward.1} parent=55 // pred_region
        %s3590 = smul.u32 2, %s22
      $region60: #{attacker_model_forward.1} parent=55 // pred_fallthru
        _
    $region56: #{attacker_model_forward.1} parent=5 // pred_fallthru
      _
    %p3591 = scmp.le.s32.totalorder 2, %s17
    // Predicated region
    $region61: #{attacker_model_forward.1} parent=5 // pred_check
      %p3592 = pneg %p3591
    $region62: #{attacker_model_forward.1} parent=5 // pred_check_branch
      %3594 = sbr.rel (%p3592) target = $region64
    $region63: #{attacker_model_forward.1} parent=5 // pred_region
      %s3595 = ssub.s32 %s17, 2
      // Predicated region
      $region65: #{attacker_model_forward.1} parent=63 // pred_check
        %p3596 = pneg %p240
      $region66: #{attacker_model_forward.1} parent=63 // pred_check_branch
        %3598 = sbr.rel (%p3596) target = $region68
      $region67: #{attacker_model_forward.1} parent=63 // pred_region
        %s3599 = smul.u32 2, %s23
        %p3600 = scmp.lt.s32.totalorder %s3599, 3
        %s3601 = scalar_select %p3600, %s3599, 3
        %s3602 = scalar_lea.vmem %s9, %s3601
      $region68: #{attacker_model_forward.1} parent=63 // pred_fallthru
        _
    $region64: #{attacker_model_forward.1} parent=5 // pred_fallthru
      _
  $region6: #{attacker_model_forward.1} parent=0 // loop_footer
    %s21 = sadd.s32 1, %s17
  $region7: #{attacker_model_forward.1} parent=0 // loop_footer_branch
    %16 = sbr.rel target = $region3
  $region8: #{attacker_model_forward.1} parent=0 // loop_exit
    _

</llo_original>
